<compile_context>
chip_gen: v6e
topology: v6e:2x2x1
jax: 0.10.0
libtpu: 0.0.40
codegen_flags: <defaults>
</compile_context>

<pallas_src>
import functools

import jax
import jax.numpy as jnp
import numpy as np
from jax.experimental import pallas as pl
from jax.experimental.pallas import tpu as pltpu

L_IN = 120          # conv stack requires floor(floor(L/5)/3) == 8  ->  L = 120
K1, C1 = 121, 32    # conv1: in=1,  out=32, k=121, pad=60
K2, C2 = 5, 32      # conv2: in=32, out=32, k=5,   pad=2
T1 = L_IN           # 120
T2 = T1 // 5        # 24  (MaxPool1d k=5)
T3 = T2 // 3        # 8   (MaxPool1d k=3)
FEAT = C2 * T3      # 256 = 32*8
OUT = 256
PAD2 = K2 // 2      # conv2 halo rows per side (2)
SUB = 8             # batch elements per inner pipeline step (bounds vreg pressure)
HP_ROWS = 32        # per-element slab height for conv2 halo scratch (tile aligned)


def encoder_kernel(p_ref, w1_ref, b1_ref, w2_ref, b2_ref, w3_ref, out_ref,
                   s1_ref, hp_ref, s2_ref, h2_ref, *, bb):
    nsub = bb // SUB

    # conv2 halo rows must read as zero.  Scratch is not guaranteed to be
    # initialised and, with a "parallel" batch axis, program_id(0)==0 may never
    # run on a given core, so cheaply re-zero just the halo rows every step.
    hp_ref[:, 0:PAD2, :] = jnp.zeros((SUB, PAD2, C1), jnp.float32)
    hp_ref[:, PAD2 + T2:HP_ROWS, :] = jnp.zeros(
        (SUB, HP_ROWS - PAD2 - T2, C1), jnp.float32)

    def sub_block(s, carry):
        # ---- conv1 (k=121, pad=60): one im2col matmul (bf16 in, f32 acc) ----
        r1 = pl.multiple_of(s * (SUB * T1), SUB * T1)
        a1 = jnp.dot(p_ref[pl.ds(r1, SUB * T1), :], w1_ref[...],
                     preferred_element_type=jnp.float32)            # (SUB*120, 32)
        s1_ref[...] = jnp.maximum(a1 + b1_ref[...], 0.0)

        # ---- MaxPool1d(5): global stride-5 row max (120 % 5 == 0) -----------
        h1 = s1_ref[pl.ds(0, SUB * T2, 5), :]
        for j in range(1, 5):
            h1 = jnp.maximum(h1, s1_ref[pl.ds(j, SUB * T2, 5), :])  # (SUB*24, 32)

        # place into per-element 32-row slabs (rows PAD2..PAD2+23); halos stay 0
        hp_ref[:, PAD2:PAD2 + T2, :] = h1.reshape(SUB, T2, C1)

        # ---- conv2 (k=5, pad=2): 5 shifted (SUB*24,32)x(32,32) matmuls ------
        acc2 = jnp.zeros((SUB * T2, C2), jnp.float32)
        for dt in range(K2):
            lhs = hp_ref[:, dt:dt + T2, :].reshape(SUB * T2, C1)
            acc2 = acc2 + jnp.dot(lhs, w2_ref[dt],
                                  preferred_element_type=jnp.float32)
        s2_ref[...] = jnp.maximum(acc2 + b2_ref[...], 0.0)           # (SUB*24, 32)

        # ---- MaxPool1d(3): global stride-3 row max (24 % 3 == 0) ------------
        h2 = s2_ref[pl.ds(0, SUB * T3, 3), :]
        for j in range(1, 3):
            h2 = jnp.maximum(h2, s2_ref[pl.ds(j, SUB * T3, 3), :])   # (SUB*8, 32)

        r3 = pl.multiple_of(s * (SUB * T3), SUB * T3)
        h2_ref[pl.ds(r3, SUB * T3), :] = h2
        return carry

    jax.lax.fori_loop(0, nsub, sub_block, 0)

    # ---- Linear(256 -> 256, bias=False) with M = BB -------------------------
    # PyTorch flatten index is c*8 + t; that permutation is folded into w3_ref.
    acc = jnp.zeros((bb, OUT), jnp.float32)
    for t in range(T3):
        acc = acc + jnp.dot(h2_ref[pl.ds(t, bb, T3), :], w3_ref[t],
                            preferred_element_type=jnp.float32)
    out_ref[...] = acc


def _round_up(n, m):
    return ((n + m - 1) // m) * m


def encoder_forward(x, w1, b1, w2, b2, w3, *, block_b=64):
    """x: (..., 120). Params in PyTorch layouts: w1 (32,1,121), w2 (32,32,5), w3 (256,256)."""
    assert block_b % SUB == 0
    x = x.reshape(-1, L_IN).astype(jnp.float32)        # == x.view(-1, 1, L)
    B = x.shape[0]
    BB = block_b if B >= block_b else _round_up(B, SUB)
    B_pad = _round_up(B, BB)
    if B_pad != B:
        x = jnp.pad(x, ((0, B_pad - B), (0, 0)))

    # conv1 im2col patches: patches[b*120+t, k] = xpad[b, t+k]; tap dim -> 128.
    # Fed to the kernel in bf16; accumulation stays f32 inside the kernel.
    xpad = jnp.pad(x, ((0, 0), (K1 // 2, K1 // 2)))                  # (B_pad, 240)
    idx = jnp.arange(T1)[:, None] + jnp.arange(K1)[None, :]          # (120, 121)
    patches = jnp.pad(xpad[:, idx], ((0, 0), (0, 0), (0, 128 - K1)))
    patches = patches.reshape(B_pad * T1, 128).astype(jnp.bfloat16)

    # host-side weight re-layouts (glue)
    w1k = jnp.pad(w1[:, 0, :].T, ((0, 128 - K1), (0, 0))).astype(jnp.bfloat16)  # (128, 32)
    b1k = b1.reshape(1, C1).astype(jnp.float32)
    w2k = jnp.transpose(w2, (2, 1, 0)).astype(jnp.float32)           # (5, c_in, c_out)
    b2k = b2.reshape(1, C2).astype(jnp.float32)
    w3k = jnp.transpose(w3.reshape(OUT, C2, T3), (2, 1, 0)).astype(jnp.float32)  # (8,32,256)

    flops = 2 * B_pad * (T1 * 128 * C1 + K2 * T2 * C1 * C2 + T3 * C2 * OUT)
    bytes_accessed = (patches.size * 2 + w1k.size * 2 + B_pad * OUT * 4
                      + (b1k.size + w2k.size + b2k.size + w3k.size) * 4)

    kernel = functools.partial(encoder_kernel, bb=BB)
    out = pl.pallas_call(
        kernel,
        out_shape=jax.ShapeDtypeStruct((B_pad, OUT), jnp.float32),
        grid_spec=pltpu.PrefetchScalarGridSpec(
            num_scalar_prefetch=0,
            grid=(B_pad // BB,),
            in_specs=[
                pl.BlockSpec((BB * T1, 128), lambda i: (i, 0)),      # bf16 im2col patches
                pl.BlockSpec((128, C1), lambda i: (0, 0)),           # conv1 weight (bf16)
                pl.BlockSpec((1, C1), lambda i: (0, 0)),             # conv1 bias
                pl.BlockSpec((K2, C1, C2), lambda i: (0, 0, 0)),     # conv2 weight
                pl.BlockSpec((1, C2), lambda i: (0, 0)),             # conv2 bias
                pl.BlockSpec((T3, C2, OUT), lambda i: (0, 0, 0)),    # linear weight
            ],
            out_specs=pl.BlockSpec((BB, OUT), lambda i: (i, 0)),
            scratch_shapes=[
                pltpu.VMEM((SUB * T1, C1), jnp.float32),     # conv1 activations
                pltpu.VMEM((SUB, HP_ROWS, C1), jnp.float32), # halo-padded pool1 output
                pltpu.VMEM((SUB * T2, C2), jnp.float32),     # conv2 activations
                pltpu.VMEM((BB * T3, C2), jnp.float32),      # pooled features (whole block)
            ],
        ),
        compiler_params=pltpu.CompilerParams(dimension_semantics=("parallel",)),
        cost_estimate=pl.CostEstimate(flops=flops, transcendentals=0,
                                      bytes_accessed=bytes_accessed),
    )(patches, w1k, b1k, w2k, b2k, w3k)
    return out[:B]


def encoder_reference(x, w1, b1, w2, b2, w3):
    """Plain-JAX reference matching the PyTorch forward (NCL layout, pure f32)."""
    x = x.reshape(-1, 1, L_IN).astype(jnp.float32)
    dn = ("NCH", "OIH", "NCH")
    a1 = jax.lax.conv_general_dilated(x, w1, (1,), [(K1 // 2, K1 // 2)],
                                      dimension_numbers=dn) + b1[None, :, None]
    a1 = jnp.maximum(a1, 0.0)
    h1 = jnp.max(a1.reshape(-1, C1, T2, 5), axis=-1)
    a2 = jax.lax.conv_general_dilated(h1, w2, (1,), [(K2 // 2, K2 // 2)],
                                      dimension_numbers=dn) + b2[None, :, None]
    a2 = jnp.maximum(a2, 0.0)
    h2 = jnp.max(a2.reshape(-1, C2, T3, 3), axis=-1)
    flat = h2.reshape(-1, FEAT)                                      # x.view(-1, 32*8)
    return flat @ w3.T                                               # Linear, bias=False


if __name__ == "__main__":
    key = jax.random.PRNGKey(0)
    k1, k2, k3, k4, k5, kx = jax.random.split(key, 6)
    # deterministic synthetic parameters (shapes from the module's __init__)
    w1 = jax.random.normal(k1, (C1, 1, K1), jnp.float32) * 0.05
    b1 = jax.random.normal(k2, (C1,), jnp.float32) * 0.05
    w2 = jax.random.normal(k3, (C2, C1, K2), jnp.float32) * 0.05
    b2 = jax.random.normal(k4, (C2,), jnp.float32) * 0.05
    w3 = jax.random.normal(k5, (OUT, FEAT), jnp.float32) * 0.05
    x = jax.random.normal(kx, (2, L_IN), jnp.float32)     # batch=2, seq len 120

    y = jax.block_until_ready(encoder_forward(x, w1, b1, w2, b2, w3))
    y_ref = jax.block_until_ready(encoder_reference(x, w1, b1, w2, b2, w3))
    # conv1 operands are bf16 (f32 accumulation) -> slightly looser tolerance
    np.testing.assert_allclose(np.asarray(y), np.asarray(y_ref), rtol=2e-2, atol=2e-2)
    assert y.shape == (2, OUT)
    print("KERNEL_OK")
</pallas_src>

<mosaic_0001>
module attributes {stable_mosaic.version = 11 : i64} {
  func.func @encoder_kernel(%arg0: i32, %arg1: memref<960x128xbf16, #tpu.memory_space<vmem>>, %arg2: memref<128x32xbf16, #tpu.memory_space<vmem>>, %arg3: memref<1x32xf32, #tpu.memory_space<vmem>>, %arg4: memref<5x32x32xf32, #tpu.memory_space<vmem>>, %arg5: memref<1x32xf32, #tpu.memory_space<vmem>>, %arg6: memref<8x32x256xf32, #tpu.memory_space<vmem>>, %arg7: memref<8x256xf32, #tpu.memory_space<vmem>>, %arg8: memref<960x32xf32, #tpu.memory_space<vmem>>, %arg9: memref<8x32x32xf32, #tpu.memory_space<vmem>>, %arg10: memref<192x32xf32, #tpu.memory_space<vmem>>, %arg11: memref<64x32xf32, #tpu.memory_space<vmem>>) attributes {dimension_semantics = [#tpu.dimension_semantics<parallel>], iteration_bounds = array<i64: 1>, scalar_prefetch = 0 : i64, scratch_operands = 4 : i64, tpu.core_type = #tpu.core_type<tc>, window_params = [{transform_indices = @transform_0, window_bounds = array<i64: 960, 128>}, {pipeline_mode = #tpu.pipeline_mode<synchronous>, transform_indices = @transform_1, window_bounds = array<i64: 128, 32>}, {pipeline_mode = #tpu.pipeline_mode<synchronous>, transform_indices = @transform_2, window_bounds = array<i64: 1, 32>}, {pipeline_mode = #tpu.pipeline_mode<synchronous>, transform_indices = @transform_3, window_bounds = array<i64: 5, 32, 32>}, {pipeline_mode = #tpu.pipeline_mode<synchronous>, transform_indices = @transform_4, window_bounds = array<i64: 1, 32>}, {pipeline_mode = #tpu.pipeline_mode<synchronous>, transform_indices = @transform_5, window_bounds = array<i64: 8, 32, 256>}, {transform_indices = @transform_6, window_bounds = array<i64: 8, 256>}]} {
    %cst = arith.constant 0.000000e+00 : f32
    %0 = vector.broadcast %cst : f32 to vector<8x2x32xf32>
    %c0 = arith.constant 0 : index
    %c0_0 = arith.constant 0 : index
    %c0_1 = arith.constant 0 : index
    %1 = vector.load %arg9[%c0, %c0_0, %c0_1] : memref<8x32x32xf32, #tpu.memory_space<vmem>>, vector<8x2x32xf32>
    tpu.vector_store %arg9[%c0, %c0_0, %c0_1], %0 {strides = array<i32>} : memref<8x32x32xf32, #tpu.memory_space<vmem>>, vector<8x2x32xf32>,
    %cst_2 = arith.constant 0.000000e+00 : f32
    %2 = vector.broadcast %cst_2 : f32 to vector<8x6x32xf32>
    %c0_3 = arith.constant 0 : index
    %c26 = arith.constant 26 : index
    %c0_4 = arith.constant 0 : index
    %3 = vector.load %arg9[%c0_3, %c26, %c0_4] : memref<8x32x32xf32, #tpu.memory_space<vmem>>, vector<8x6x32xf32>
    tpu.vector_store %arg9[%c0_3, %c26, %c0_4], %2 {strides = array<i32>} : memref<8x32x32xf32, #tpu.memory_space<vmem>>, vector<8x6x32xf32>,
    %c0_i32 = arith.constant 0 : i32
    %c960_i32 = arith.constant 960 : i32
    %4 = arith.muli %c0_i32, %c960_i32 : i32
    %5 = tpu.assume_multiple %4, 960 : i32
    %6 = arith.index_cast %5 : i32 to index
    %c0_5 = arith.constant 0 : index
    %7 = vector.load %arg1[%6, %c0_5] : memref<960x128xbf16, #tpu.memory_space<vmem>>, vector<960x128xbf16>
    %c0_6 = arith.constant 0 : index
    %c0_7 = arith.constant 0 : index
    %8 = vector.load %arg2[%c0_6, %c0_7] : memref<128x32xbf16, #tpu.memory_space<vmem>>, vector<128x32xbf16>
    %cst_8 = arith.constant dense<0.000000e+00> : vector<960x32xf32>
    %9 = tpu.matmul %7, %8, %cst_8 {dimension_numbers = #tpu.dot_dimension_numbers<[1], [0], [0], [1], [0, 0, 1, 1], [], []>} : vector<960x128xbf16>, vector<128x32xbf16>, vector<960x32xf32> -> vector<960x32xf32>
    %c0_9 = arith.constant 0 : index
    %c0_10 = arith.constant 0 : index
    %10 = vector.load %arg3[%c0_9, %c0_10] : memref<1x32xf32, #tpu.memory_space<vmem>>, vector<1x32xf32>
    %11 = vector.broadcast %10 : vector<1x32xf32> to vector<960x32xf32>
    %12 = arith.addf %9, %11 : vector<960x32xf32>
    %cst_11 = arith.constant 0.000000e+00 : f32
    %13 = vector.broadcast %cst_11 : f32 to vector<960x32xf32>
    %14 = arith.maximumf %12, %13 : vector<960x32xf32>
    %c0_12 = arith.constant 0 : index
    %c0_13 = arith.constant 0 : index
    %15 = vector.load %arg8[%c0_12, %c0_13] : memref<960x32xf32, #tpu.memory_space<vmem>>, vector<960x32xf32>
    tpu.vector_store %arg8[%c0_12, %c0_13], %14 {strides = array<i32>} : memref<960x32xf32, #tpu.memory_space<vmem>>, vector<960x32xf32>,
    %c0_14 = arith.constant 0 : index
    %c0_15 = arith.constant 0 : index
    %16 = tpu.strided_load %arg8[%c0_14, %c0_15] {strides = array<i32: 5, 1>} : memref<960x32xf32, #tpu.memory_space<vmem>>, vector<192x32xf32>
    %c1 = arith.constant 1 : index
    %c0_16 = arith.constant 0 : index
    %17 = tpu.strided_load %arg8[%c1, %c0_16] {strides = array<i32: 5, 1>} : memref<960x32xf32, #tpu.memory_space<vmem>>, vector<192x32xf32>
    %18 = arith.maximumf %16, %17 : vector<192x32xf32>
    %c2 = arith.constant 2 : index
    %c0_17 = arith.constant 0 : index
    %19 = tpu.strided_load %arg8[%c2, %c0_17] {strides = array<i32: 5, 1>} : memref<960x32xf32, #tpu.memory_space<vmem>>, vector<192x32xf32>
    %20 = arith.maximumf %18, %19 : vector<192x32xf32>
    %c3 = arith.constant 3 : index
    %c0_18 = arith.constant 0 : index
    %21 = tpu.strided_load %arg8[%c3, %c0_18] {strides = array<i32: 5, 1>} : memref<960x32xf32, #tpu.memory_space<vmem>>, vector<192x32xf32>
    %22 = arith.maximumf %20, %21 : vector<192x32xf32>
    %c4 = arith.constant 4 : index
    %c0_19 = arith.constant 0 : index
    %23 = tpu.strided_load %arg8[%c4, %c0_19] {strides = array<i32: 5, 1>} : memref<960x32xf32, #tpu.memory_space<vmem>>, vector<192x32xf32>
    %24 = arith.maximumf %22, %23 : vector<192x32xf32>
    %25 = vector.shape_cast %24 : vector<192x32xf32> to vector<8x24x32xf32>
    %c0_20 = arith.constant 0 : index
    %c2_21 = arith.constant 2 : index
    %c0_22 = arith.constant 0 : index
    %26 = vector.load %arg9[%c0_20, %c2_21, %c0_22] : memref<8x32x32xf32, #tpu.memory_space<vmem>>, vector<8x24x32xf32>
    tpu.vector_store %arg9[%c0_20, %c2_21, %c0_22], %25 {strides = array<i32>} : memref<8x32x32xf32, #tpu.memory_space<vmem>>, vector<8x24x32xf32>,
    %cst_23 = arith.constant 0.000000e+00 : f32
    %27 = vector.broadcast %cst_23 : f32 to vector<192x32xf32>
    %c0_24 = arith.constant 0 : index
    %c0_25 = arith.constant 0 : index
    %c0_26 = arith.constant 0 : index
    %28 = vector.load %arg9[%c0_24, %c0_25, %c0_26] : memref<8x32x32xf32, #tpu.memory_space<vmem>>, vector<8x24x32xf32>
    %29 = vector.shape_cast %28 : vector<8x24x32xf32> to vector<192x32xf32>
    %c0_27 = arith.constant 0 : index
    %c0_28 = arith.constant 0 : index
    %c0_29 = arith.constant 0 : index
    %30 = vector.load %arg4[%c0_27, %c0_28, %c0_29] : memref<5x32x32xf32, #tpu.memory_space<vmem>>, vector<1x32x32xf32>
    %31 = vector.shape_cast %30 : vector<1x32x32xf32> to vector<32x32xf32>
    %cst_30 = arith.constant dense<0.000000e+00> : vector<192x32xf32>
    %32 = tpu.matmul %29, %31, %cst_30 {dimension_numbers = #tpu.dot_dimension_numbers<[1], [0], [0], [1], [0, 0, 1, 1], [], []>} : vector<192x32xf32>, vector<32x32xf32>, vector<192x32xf32> -> vector<192x32xf32>
    %33 = arith.addf %27, %32 : vector<192x32xf32>
    %c0_31 = arith.constant 0 : index
    %c1_32 = arith.constant 1 : index
    %c0_33 = arith.constant 0 : index
    %34 = vector.load %arg9[%c0_31, %c1_32, %c0_33] : memref<8x32x32xf32, #tpu.memory_space<vmem>>, vector<8x24x32xf32>
    %35 = vector.shape_cast %34 : vector<8x24x32xf32> to vector<192x32xf32>
    %c1_34 = arith.constant 1 : index
    %c0_35 = arith.constant 0 : index
    %c0_36 = arith.constant 0 : index
    %36 = vector.load %arg4[%c1_34, %c0_35, %c0_36] : memref<5x32x32xf32, #tpu.memory_space<vmem>>, vector<1x32x32xf32>
    %37 = vector.shape_cast %36 : vector<1x32x32xf32> to vector<32x32xf32>
    %cst_37 = arith.constant dense<0.000000e+00> : vector<192x32xf32>
    %38 = tpu.matmul %35, %37, %cst_37 {dimension_numbers = #tpu.dot_dimension_numbers<[1], [0], [0], [1], [0, 0, 1, 1], [], []>} : vector<192x32xf32>, vector<32x32xf32>, vector<192x32xf32> -> vector<192x32xf32>
    %39 = arith.addf %33, %38 : vector<192x32xf32>
    %c0_38 = arith.constant 0 : index
    %c2_39 = arith.constant 2 : index
    %c0_40 = arith.constant 0 : index
    %40 = vector.load %arg9[%c0_38, %c2_39, %c0_40] : memref<8x32x32xf32, #tpu.memory_space<vmem>>, vector<8x24x32xf32>
    %41 = vector.shape_cast %40 : vector<8x24x32xf32> to vector<192x32xf32>
    %c2_41 = arith.constant 2 : index
    %c0_42 = arith.constant 0 : index
    %c0_43 = arith.constant 0 : index
    %42 = vector.load %arg4[%c2_41, %c0_42, %c0_43] : memref<5x32x32xf32, #tpu.memory_space<vmem>>, vector<1x32x32xf32>
    %43 = vector.shape_cast %42 : vector<1x32x32xf32> to vector<32x32xf32>
    %cst_44 = arith.constant dense<0.000000e+00> : vector<192x32xf32>
    %44 = tpu.matmul %41, %43, %cst_44 {dimension_numbers = #tpu.dot_dimension_numbers<[1], [0], [0], [1], [0, 0, 1, 1], [], []>} : vector<192x32xf32>, vector<32x32xf32>, vector<192x32xf32> -> vector<192x32xf32>
    %45 = arith.addf %39, %44 : vector<192x32xf32>
    %c0_45 = arith.constant 0 : index
    %c3_46 = arith.constant 3 : index
    %c0_47 = arith.constant 0 : index
    %46 = vector.load %arg9[%c0_45, %c3_46, %c0_47] : memref<8x32x32xf32, #tpu.memory_space<vmem>>, vector<8x24x32xf32>
    %47 = vector.shape_cast %46 : vector<8x24x32xf32> to vector<192x32xf32>
    %c3_48 = arith.constant 3 : index
    %c0_49 = arith.constant 0 : index
    %c0_50 = arith.constant 0 : index
    %48 = vector.load %arg4[%c3_48, %c0_49, %c0_50] : memref<5x32x32xf32, #tpu.memory_space<vmem>>, vector<1x32x32xf32>
    %49 = vector.shape_cast %48 : vector<1x32x32xf32> to vector<32x32xf32>
    %cst_51 = arith.constant dense<0.000000e+00> : vector<192x32xf32>
    %50 = tpu.matmul %47, %49, %cst_51 {dimension_numbers = #tpu.dot_dimension_numbers<[1], [0], [0], [1], [0, 0, 1, 1], [], []>} : vector<192x32xf32>, vector<32x32xf32>, vector<192x32xf32> -> vector<192x32xf32>
    %51 = arith.addf %45, %50 : vector<192x32xf32>
    %c0_52 = arith.constant 0 : index
    %c4_53 = arith.constant 4 : index
    %c0_54 = arith.constant 0 : index
    %52 = vector.load %arg9[%c0_52, %c4_53, %c0_54] : memref<8x32x32xf32, #tpu.memory_space<vmem>>, vector<8x24x32xf32>
    %53 = vector.shape_cast %52 : vector<8x24x32xf32> to vector<192x32xf32>
    %c4_55 = arith.constant 4 : index
    %c0_56 = arith.constant 0 : index
    %c0_57 = arith.constant 0 : index
    %54 = vector.load %arg4[%c4_55, %c0_56, %c0_57] : memref<5x32x32xf32, #tpu.memory_space<vmem>>, vector<1x32x32xf32>
    %55 = vector.shape_cast %54 : vector<1x32x32xf32> to vector<32x32xf32>
    %cst_58 = arith.constant dense<0.000000e+00> : vector<192x32xf32>
    %56 = tpu.matmul %53, %55, %cst_58 {dimension_numbers = #tpu.dot_dimension_numbers<[1], [0], [0], [1], [0, 0, 1, 1], [], []>} : vector<192x32xf32>, vector<32x32xf32>, vector<192x32xf32> -> vector<192x32xf32>
    %57 = arith.addf %51, %56 : vector<192x32xf32>
    %c0_59 = arith.constant 0 : index
    %c0_60 = arith.constant 0 : index
    %58 = vector.load %arg5[%c0_59, %c0_60] : memref<1x32xf32, #tpu.memory_space<vmem>>, vector<1x32xf32>
    %59 = vector.broadcast %58 : vector<1x32xf32> to vector<192x32xf32>
    %60 = arith.addf %57, %59 : vector<192x32xf32>
    %cst_61 = arith.constant 0.000000e+00 : f32
    %61 = vector.broadcast %cst_61 : f32 to vector<192x32xf32>
    %62 = arith.maximumf %60, %61 : vector<192x32xf32>
    %c0_62 = arith.constant 0 : index
    %c0_63 = arith.constant 0 : index
    %63 = vector.load %arg10[%c0_62, %c0_63] : memref<192x32xf32, #tpu.memory_space<vmem>>, vector<192x32xf32>
    tpu.vector_store %arg10[%c0_62, %c0_63], %62 {strides = array<i32>} : memref<192x32xf32, #tpu.memory_space<vmem>>, vector<192x32xf32>,
    %c0_64 = arith.constant 0 : index
    %c0_65 = arith.constant 0 : index
    %64 = tpu.strided_load %arg10[%c0_64, %c0_65] {strides = array<i32: 3, 1>} : memref<192x32xf32, #tpu.memory_space<vmem>>, vector<64x32xf32>
    %c1_66 = arith.constant 1 : index
    %c0_67 = arith.constant 0 : index
    %65 = tpu.strided_load %arg10[%c1_66, %c0_67] {strides = array<i32: 3, 1>} : memref<192x32xf32, #tpu.memory_space<vmem>>, vector<64x32xf32>
    %66 = arith.maximumf %64, %65 : vector<64x32xf32>
    %c2_68 = arith.constant 2 : index
    %c0_69 = arith.constant 0 : index
    %67 = tpu.strided_load %arg10[%c2_68, %c0_69] {strides = array<i32: 3, 1>} : memref<192x32xf32, #tpu.memory_space<vmem>>, vector<64x32xf32>
    %68 = arith.maximumf %66, %67 : vector<64x32xf32>
    %c64_i32 = arith.constant 64 : i32
    %69 = arith.muli %c0_i32, %c64_i32 : i32
    %70 = tpu.assume_multiple %69, 64 : i32
    %71 = arith.index_cast %70 : i32 to index
    %c0_70 = arith.constant 0 : index
    %72 = vector.load %arg11[%71, %c0_70] : memref<64x32xf32, #tpu.memory_space<vmem>>, vector<64x32xf32>
    tpu.vector_store %arg11[%71, %c0_70], %68 {strides = array<i32>} : memref<64x32xf32, #tpu.memory_space<vmem>>, vector<64x32xf32>,
    %c1_i32 = arith.constant 1 : i32
    %cst_71 = arith.constant 0.000000e+00 : f32
    %73 = vector.broadcast %cst_71 : f32 to vector<8x256xf32>
    %c0_72 = arith.constant 0 : index
    %c0_73 = arith.constant 0 : index
    %74 = tpu.strided_load %arg11[%c0_72, %c0_73] {strides = array<i32: 8, 1>} : memref<64x32xf32, #tpu.memory_space<vmem>>, vector<8x32xf32>
    %c0_74 = arith.constant 0 : index
    %c0_75 = arith.constant 0 : index
    %c0_76 = arith.constant 0 : index
    %75 = vector.load %arg6[%c0_74, %c0_75, %c0_76] : memref<8x32x256xf32, #tpu.memory_space<vmem>>, vector<1x32x256xf32>
    %76 = vector.shape_cast %75 : vector<1x32x256xf32> to vector<32x256xf32>
    %cst_77 = arith.constant dense<0.000000e+00> : vector<8x256xf32>
    %77 = tpu.matmul %74, %76, %cst_77 {dimension_numbers = #tpu.dot_dimension_numbers<[1], [0], [0], [1], [0, 0, 1, 1], [], []>} : vector<8x32xf32>, vector<32x256xf32>, vector<8x256xf32> -> vector<8x256xf32>
    %78 = arith.addf %73, %77 : vector<8x256xf32>
    %c1_78 = arith.constant 1 : index
    %c0_79 = arith.constant 0 : index
    %79 = tpu.strided_load %arg11[%c1_78, %c0_79] {strides = array<i32: 8, 1>} : memref<64x32xf32, #tpu.memory_space<vmem>>, vector<8x32xf32>
    %c1_80 = arith.constant 1 : index
    %c0_81 = arith.constant 0 : index
    %c0_82 = arith.constant 0 : index
    %80 = vector.load %arg6[%c1_80, %c0_81, %c0_82] : memref<8x32x256xf32, #tpu.memory_space<vmem>>, vector<1x32x256xf32>
    %81 = vector.shape_cast %80 : vector<1x32x256xf32> to vector<32x256xf32>
    %cst_83 = arith.constant dense<0.000000e+00> : vector<8x256xf32>
    %82 = tpu.matmul %79, %81, %cst_83 {dimension_numbers = #tpu.dot_dimension_numbers<[1], [0], [0], [1], [0, 0, 1, 1], [], []>} : vector<8x32xf32>, vector<32x256xf32>, vector<8x256xf32> -> vector<8x256xf32>
    %83 = arith.addf %78, %82 : vector<8x256xf32>
    %c2_84 = arith.constant 2 : index
    %c0_85 = arith.constant 0 : index
    %84 = tpu.strided_load %arg11[%c2_84, %c0_85] {strides = array<i32: 8, 1>} : memref<64x32xf32, #tpu.memory_space<vmem>>, vector<8x32xf32>
    %c2_86 = arith.constant 2 : index
    %c0_87 = arith.constant 0 : index
    %c0_88 = arith.constant 0 : index
    %85 = vector.load %arg6[%c2_86, %c0_87, %c0_88] : memref<8x32x256xf32, #tpu.memory_space<vmem>>, vector<1x32x256xf32>
    %86 = vector.shape_cast %85 : vector<1x32x256xf32> to vector<32x256xf32>
    %cst_89 = arith.constant dense<0.000000e+00> : vector<8x256xf32>
    %87 = tpu.matmul %84, %86, %cst_89 {dimension_numbers = #tpu.dot_dimension_numbers<[1], [0], [0], [1], [0, 0, 1, 1], [], []>} : vector<8x32xf32>, vector<32x256xf32>, vector<8x256xf32> -> vector<8x256xf32>
    %88 = arith.addf %83, %87 : vector<8x256xf32>
    %c3_90 = arith.constant 3 : index
    %c0_91 = arith.constant 0 : index
    %89 = tpu.strided_load %arg11[%c3_90, %c0_91] {strides = array<i32: 8, 1>} : memref<64x32xf32, #tpu.memory_space<vmem>>, vector<8x32xf32>
    %c3_92 = arith.constant 3 : index
    %c0_93 = arith.constant 0 : index
    %c0_94 = arith.constant 0 : index
    %90 = vector.load %arg6[%c3_92, %c0_93, %c0_94] : memref<8x32x256xf32, #tpu.memory_space<vmem>>, vector<1x32x256xf32>
    %91 = vector.shape_cast %90 : vector<1x32x256xf32> to vector<32x256xf32>
    %cst_95 = arith.constant dense<0.000000e+00> : vector<8x256xf32>
    %92 = tpu.matmul %89, %91, %cst_95 {dimension_numbers = #tpu.dot_dimension_numbers<[1], [0], [0], [1], [0, 0, 1, 1], [], []>} : vector<8x32xf32>, vector<32x256xf32>, vector<8x256xf32> -> vector<8x256xf32>
    %93 = arith.addf %88, %92 : vector<8x256xf32>
    %c4_96 = arith.constant 4 : index
    %c0_97 = arith.constant 0 : index
    %94 = tpu.strided_load %arg11[%c4_96, %c0_97] {strides = array<i32: 8, 1>} : memref<64x32xf32, #tpu.memory_space<vmem>>, vector<8x32xf32>
    %c4_98 = arith.constant 4 : index
    %c0_99 = arith.constant 0 : index
    %c0_100 = arith.constant 0 : index
    %95 = vector.load %arg6[%c4_98, %c0_99, %c0_100] : memref<8x32x256xf32, #tpu.memory_space<vmem>>, vector<1x32x256xf32>
    %96 = vector.shape_cast %95 : vector<1x32x256xf32> to vector<32x256xf32>
    %cst_101 = arith.constant dense<0.000000e+00> : vector<8x256xf32>
    %97 = tpu.matmul %94, %96, %cst_101 {dimension_numbers = #tpu.dot_dimension_numbers<[1], [0], [0], [1], [0, 0, 1, 1], [], []>} : vector<8x32xf32>, vector<32x256xf32>, vector<8x256xf32> -> vector<8x256xf32>
    %98 = arith.addf %93, %97 : vector<8x256xf32>
    %c5 = arith.constant 5 : index
    %c0_102 = arith.constant 0 : index
    %99 = tpu.strided_load %arg11[%c5, %c0_102] {strides = array<i32: 8, 1>} : memref<64x32xf32, #tpu.memory_space<vmem>>, vector<8x32xf32>
    %c5_103 = arith.constant 5 : index
    %c0_104 = arith.constant 0 : index
    %c0_105 = arith.constant 0 : index
    %100 = vector.load %arg6[%c5_103, %c0_104, %c0_105] : memref<8x32x256xf32, #tpu.memory_space<vmem>>, vector<1x32x256xf32>
    %101 = vector.shape_cast %100 : vector<1x32x256xf32> to vector<32x256xf32>
    %cst_106 = arith.constant dense<0.000000e+00> : vector<8x256xf32>
    %102 = tpu.matmul %99, %101, %cst_106 {dimension_numbers = #tpu.dot_dimension_numbers<[1], [0], [0], [1], [0, 0, 1, 1], [], []>} : vector<8x32xf32>, vector<32x256xf32>, vector<8x256xf32> -> vector<8x256xf32>
    %103 = arith.addf %98, %102 : vector<8x256xf32>
    %c6 = arith.constant 6 : index
    %c0_107 = arith.constant 0 : index
    %104 = tpu.strided_load %arg11[%c6, %c0_107] {strides = array<i32: 8, 1>} : memref<64x32xf32, #tpu.memory_space<vmem>>, vector<8x32xf32>
    %c6_108 = arith.constant 6 : index
    %c0_109 = arith.constant 0 : index
    %c0_110 = arith.constant 0 : index
    %105 = vector.load %arg6[%c6_108, %c0_109, %c0_110] : memref<8x32x256xf32, #tpu.memory_space<vmem>>, vector<1x32x256xf32>
    %106 = vector.shape_cast %105 : vector<1x32x256xf32> to vector<32x256xf32>
    %cst_111 = arith.constant dense<0.000000e+00> : vector<8x256xf32>
    %107 = tpu.matmul %104, %106, %cst_111 {dimension_numbers = #tpu.dot_dimension_numbers<[1], [0], [0], [1], [0, 0, 1, 1], [], []>} : vector<8x32xf32>, vector<32x256xf32>, vector<8x256xf32> -> vector<8x256xf32>
    %108 = arith.addf %103, %107 : vector<8x256xf32>
    %c7 = arith.constant 7 : index
    %c0_112 = arith.constant 0 : index
    %109 = tpu.strided_load %arg11[%c7, %c0_112] {strides = array<i32: 8, 1>} : memref<64x32xf32, #tpu.memory_space<vmem>>, vector<8x32xf32>
    %c7_113 = arith.constant 7 : index
    %c0_114 = arith.constant 0 : index
    %c0_115 = arith.constant 0 : index
    %110 = vector.load %arg6[%c7_113, %c0_114, %c0_115] : memref<8x32x256xf32, #tpu.memory_space<vmem>>, vector<1x32x256xf32>
    %111 = vector.shape_cast %110 : vector<1x32x256xf32> to vector<32x256xf32>
    %cst_116 = arith.constant dense<0.000000e+00> : vector<8x256xf32>
    %112 = tpu.matmul %109, %111, %cst_116 {dimension_numbers = #tpu.dot_dimension_numbers<[1], [0], [0], [1], [0, 0, 1, 1], [], []>} : vector<8x32xf32>, vector<32x256xf32>, vector<8x256xf32> -> vector<8x256xf32>
    %113 = arith.addf %108, %112 : vector<8x256xf32>
    %c0_117 = arith.constant 0 : index
    %c0_118 = arith.constant 0 : index
    %114 = vector.load %arg7[%c0_117, %c0_118] : memref<8x256xf32, #tpu.memory_space<vmem>>, vector<8x256xf32>
    tpu.vector_store %arg7[%c0_117, %c0_118], %113 {strides = array<i32>} : memref<8x256xf32, #tpu.memory_space<vmem>>, vector<8x256xf32>,
    return
  }
  func.func @transform_0(%arg0: i32) -> (i32, i32) {
    %c0_i32 = arith.constant 0 : i32
    %c0_i32_0 = arith.constant 0 : i32
    return %arg0, %c0_i32 : i32, i32
  }
  func.func @transform_1(%arg0: i32) -> (i32, i32) {
    %c0_i32 = arith.constant 0 : i32
    %c0_i32_0 = arith.constant 0 : i32
    %c0_i32_1 = arith.constant 0 : i32
    return %c0_i32, %c0_i32_0 : i32, i32
  }
  func.func @transform_2(%arg0: i32) -> (i32, i32) {
    %c0_i32 = arith.constant 0 : i32
    %c0_i32_0 = arith.constant 0 : i32
    %c0_i32_1 = arith.constant 0 : i32
    return %c0_i32, %c0_i32_0 : i32, i32
  }
  func.func @transform_3(%arg0: i32) -> (i32, i32, i32) {
    %c0_i32 = arith.constant 0 : i32
    %c0_i32_0 = arith.constant 0 : i32
    %c0_i32_1 = arith.constant 0 : i32
    %c0_i32_2 = arith.constant 0 : i32
    return %c0_i32, %c0_i32_0, %c0_i32_1 : i32, i32, i32
  }
  func.func @transform_4(%arg0: i32) -> (i32, i32) {
    %c0_i32 = arith.constant 0 : i32
    %c0_i32_0 = arith.constant 0 : i32
    %c0_i32_1 = arith.constant 0 : i32
    return %c0_i32, %c0_i32_0 : i32, i32
  }
  func.func @transform_5(%arg0: i32) -> (i32, i32, i32) {
    %c0_i32 = arith.constant 0 : i32
    %c0_i32_0 = arith.constant 0 : i32
    %c0_i32_1 = arith.constant 0 : i32
    %c0_i32_2 = arith.constant 0 : i32
    return %c0_i32, %c0_i32_0, %c0_i32_1 : i32, i32, i32
  }
  func.func @transform_6(%arg0: i32) -> (i32, i32) {
    %c0_i32 = arith.constant 0 : i32
    %c0_i32_0 = arith.constant 0 : i32
    return %arg0, %c0_i32 : i32, i32
  }
}

</mosaic_0001>

<llo_original>
// kernel: tpu_custom_call.1
$region0: #{tpu_custom_call.1}
  #allocation0 [shape = 'u32[]', space=smem, size = 0x4, offset = 0x4, fixed_abs, tag = 'smem constant byte address 0x4 - core index']
  #allocation1 [shape = 'u32[144,128]{1,0:T(1,128)}', space=vmem, size = 0x12000, scoped, tag = 'internal scratch']
  #allocation2 [shape = 'f32[960,32]{1,0:T(8,128)}', space=vmem, size = 0x78000, scoped, tag = 'scratch operand']
  #allocation3 [shape = 'f32[8,32,32]{2,1,0:T(8,128)}', space=vmem, size = 0x20000, scoped, tag = 'scratch operand']
  #allocation4 [shape = 'f32[192,32]{1,0:T(8,128)}', space=vmem, size = 0x18000, scoped, tag = 'scratch operand']
  #allocation5 [shape = 'f32[64,32]{1,0:T(8,128)}', space=vmem, size = 0x8000, scoped, tag = 'scratch operand']
  %s0 = inlined_call_operand.hbm [shape: bf16[960,128], index: 0, kind: input, shape index: {}]
  %s1 = inlined_call_operand.vmem [shape: bf16[128,32], index: 1, kind: input, shape index: {}]
  %s2 = inlined_call_operand.vmem [shape: f32[1,32], index: 2, kind: input, shape index: {}]
  %s3 = inlined_call_operand.hbm [shape: f32[5,32,32], index: 3, kind: input, shape index: {}]
  %s4 = inlined_call_operand.vmem [shape: f32[1,32], index: 4, kind: input, shape index: {}]
  %s5 = inlined_call_operand.hbm [shape: f32[8,32,256], index: 5, kind: input, shape index: {}]
  %s6 = inlined_call_operand.hbm [shape: f32[8,256], index: 6, kind: output, shape index: {}]
  %s7 = sld [smem:[#allocation0]]
  $region46: #{tpu_custom_call.1} parent=0
    _
  %s9 = ssub.s32 1, %s7
  %s10 = scalar_select 0, %s9, %s7
  $region1: #{tpu_custom_call.1} parent=0
    #allocation6 [shape = 'u8[245760]{0}', space=vmem, size = 0x3c000, scoped, tag = 'input window, operand 0, single buffered']
    #allocation7 [shape = 's32[1]{0}', space=sflag, size = 0x4, scoped, tag = 'scoped memory for tpu_custom_call.1']
    #allocation8 [shape = 's32[1]{0}', space=sflag, size = 0x4, scoped, tag = 'scoped memory for tpu_custom_call.1']
    #allocation9 [shape = 'u8[81920]{0}', space=vmem, size = 0x14000, scoped, tag = 'input window, operand 3, single buffered']
    #allocation10 [shape = 's32[1]{0}', space=sflag, size = 0x4, scoped, tag = 'scoped memory for tpu_custom_call.1']
    #allocation11 [shape = 'u8[262144]{0}', space=vmem, size = 0x40000, scoped, tag = 'input window, operand 5, single buffered']
    #allocation12 [shape = 'u8[8192]{0}', space=vmem, size = 0x2000, scoped, tag = 'output window, operand 0, single buffered']
    %11 = vsyncpa [#allocation7], 0
    %12 = vsyncpa [#allocation10], 0
    %13 = vsyncpa [#allocation8], 0
    // Predicated region
    $region2: #{tpu_custom_call.1} parent=1 // pred_check
      _
    $region3: #{tpu_custom_call.1} parent=1 // pred_check_branch
      %15 = sbr.rel (0) target = $region5
    $region4: #{tpu_custom_call.1} parent=1 // pred_region
      %s17 = ssub.s32 7680, 7680
      %18 = vsyncadd [#allocation7], %s17
      %s19 = sshll.u32 [#allocation6], 4
      %s20 = int_to_ptr.vmem [resolvable:$true] %s19
      %25 = dma.hbm_to_vmem [thread:$0]  %s0, 7680, %s20, [#allocation7], 64, 64, 4
    $region5: #{tpu_custom_call.1} parent=1 // pred_fallthru
      _
    // Predicated region
    $region6: #{tpu_custom_call.1} parent=1 // pred_check
      _
    $region7: #{tpu_custom_call.1} parent=1 // pred_check_branch
      %27 = sbr.rel (0) target = $region9
    $region8: #{tpu_custom_call.1} parent=1 // pred_region
      _
    $region9: #{tpu_custom_call.1} parent=1 // pred_fallthru
      _
    // Predicated region
    $region10: #{tpu_custom_call.1} parent=1 // pred_check
      _
    $region11: #{tpu_custom_call.1} parent=1 // pred_check_branch
      %29 = sbr.rel (0) target = $region13
    $region12: #{tpu_custom_call.1} parent=1 // pred_region
      _
    $region13: #{tpu_custom_call.1} parent=1 // pred_fallthru
      _
    // Predicated region
    $region14: #{tpu_custom_call.1} parent=1 // pred_check
      _
    $region15: #{tpu_custom_call.1} parent=1 // pred_check_branch
      %31 = sbr.rel (0) target = $region17
    $region16: #{tpu_custom_call.1} parent=1 // pred_region
      %s33 = ssub.s32 2560, 2560
      %34 = vsyncadd [#allocation10], %s33
      %s35 = sshll.u32 [#allocation9], 4
      %s36 = int_to_ptr.vmem [resolvable:$true] %s35
      %41 = dma.hbm_to_vmem [thread:$0]  %s3, 2560, %s36, [#allocation10], 128, 128, 8
    $region17: #{tpu_custom_call.1} parent=1 // pred_fallthru
      _
    // Predicated region
    $region18: #{tpu_custom_call.1} parent=1 // pred_check
      _
    $region19: #{tpu_custom_call.1} parent=1 // pred_check_branch
      %43 = sbr.rel (0) target = $region21
    $region20: #{tpu_custom_call.1} parent=1 // pred_region
      _
    $region21: #{tpu_custom_call.1} parent=1 // pred_fallthru
      _
    // Predicated region
    $region22: #{tpu_custom_call.1} parent=1 // pred_check
      _
    $region23: #{tpu_custom_call.1} parent=1 // pred_check_branch
      %45 = sbr.rel (0) target = $region25
    $region24: #{tpu_custom_call.1} parent=1 // pred_region
      %s47 = ssub.s32 8192, 8192
      %48 = vsyncadd [#allocation10], %s47
      %s49 = sshll.u32 [#allocation11], 4
      %s50 = int_to_ptr.vmem [resolvable:$true] %s49
      %55 = dma.hbm_to_vmem [thread:$0]  %s5, 8192, %s50, [#allocation10], 256, 256, 16
    $region25: #{tpu_custom_call.1} parent=1 // pred_fallthru
      _
    // Predicated region
    $region26: #{tpu_custom_call.1} parent=1 // pred_check
      _
    $region27: #{tpu_custom_call.1} parent=1 // pred_check_branch
      %57 = sbr.rel (0) target = $region29
    $region28: #{tpu_custom_call.1} parent=1 // pred_region
      %58 = dma.done [#allocation7], 7680
    $region29: #{tpu_custom_call.1} parent=1 // pred_fallthru
      _
    // Predicated region
    $region30: #{tpu_custom_call.1} parent=1 // pred_check
      _
    $region31: #{tpu_custom_call.1} parent=1 // pred_check_branch
      %60 = sbr.rel (0) target = $region33
    $region32: #{tpu_custom_call.1} parent=1 // pred_region
      %61 = dma.done [#allocation10], 2560
    $region33: #{tpu_custom_call.1} parent=1 // pred_fallthru
      _
    // Predicated region
    $region34: #{tpu_custom_call.1} parent=1 // pred_check
      _
    $region35: #{tpu_custom_call.1} parent=1 // pred_check_branch
      %63 = sbr.rel (0) target = $region37
    $region36: #{tpu_custom_call.1} parent=1 // pred_region
      %64 = dma.done [#allocation10], 8192
    $region37: #{tpu_custom_call.1} parent=1 // pred_fallthru
      _
    %vm66 = vcmask 254976
    %67 = vst.msk [vmem:[#allocation3] sm:$0x3] %vm66, 0.0
    %68 = vst.msk [vmem:[#allocation3 + $0x20] sm:$0x3] %vm66, 0.0
    %69 = vst.msk [vmem:[#allocation3 + $0x40] sm:$0x3] %vm66, 0.0
    %70 = vst.msk [vmem:[#allocation3 + $0x60] sm:$0x3] %vm66, 0.0
    %71 = vst.msk [vmem:[#allocation3 + $0x80] sm:$0x3] %vm66, 0.0
    %72 = vst.msk [vmem:[#allocation3 + $0xa0] sm:$0x3] %vm66, 0.0
    %73 = vst.msk [vmem:[#allocation3 + $0xc0] sm:$0x3] %vm66, 0.0
    %74 = vst.msk [vmem:[#allocation3 + $0xe0] sm:$0x3] %vm66, 0.0
    %vm75 = vcmask 259072
    %76 = vst.msk [vmem:[#allocation3 + $0x1a] sm:$0x3f] %vm75, 0.0
    %77 = vst.msk [vmem:[#allocation3 + $0x3a] sm:$0x3f] %vm75, 0.0
    %78 = vst.msk [vmem:[#allocation3 + $0x5a] sm:$0x3f] %vm75, 0.0
    %79 = vst.msk [vmem:[#allocation3 + $0x7a] sm:$0x3f] %vm75, 0.0
    %80 = vst.msk [vmem:[#allocation3 + $0x9a] sm:$0x3f] %vm75, 0.0
    %81 = vst.msk [vmem:[#allocation3 + $0xba] sm:$0x3f] %vm75, 0.0
    %82 = vst.msk [vmem:[#allocation3 + $0xda] sm:$0x3f] %vm75, 0.0
    %83 = vst.msk [vmem:[#allocation3 + $0xfa] sm:$0x3f] %vm75, 0.0
    %v84 = vld [vmem:[#allocation6] sm:$0xf]
    %v85 = vld [vmem:[#allocation6 + $0x4] sm:$0xf]
    %v86 = vld [vmem:[#allocation6 + $0x8] sm:$0xf]
    %v87 = vld [vmem:[#allocation6 + $0xc] sm:$0xf]
    %v88 = vld [vmem:[#allocation6 + $0x10] sm:$0xf]
    %v89 = vld [vmem:[#allocation6 + $0x14] sm:$0xf]
    %v90 = vld [vmem:[#allocation6 + $0x18] sm:$0xf]
    %v91 = vld [vmem:[#allocation6 + $0x1c] sm:$0xf]
    %v92 = vld [vmem:[#allocation6 + $0x20] sm:$0xf]
    %v93 = vld [vmem:[#allocation6 + $0x24] sm:$0xf]
    %v94 = vld [vmem:[#allocation6 + $0x28] sm:$0xf]
    %v95 = vld [vmem:[#allocation6 + $0x2c] sm:$0xf]
    %v96 = vld [vmem:[#allocation6 + $0x30] sm:$0xf]
    %v97 = vld [vmem:[#allocation6 + $0x34] sm:$0xf]
    %v98 = vld [vmem:[#allocation6 + $0x38] sm:$0xf]
    %v99 = vld [vmem:[#allocation6 + $0x3c] sm:$0xf]
    %v100 = vld [vmem:[#allocation6 + $0x40] sm:$0xf]
    %v101 = vld [vmem:[#allocation6 + $0x44] sm:$0xf]
    %v102 = vld [vmem:[#allocation6 + $0x48] sm:$0xf]
    %v103 = vld [vmem:[#allocation6 + $0x4c] sm:$0xf]
    %v104 = vld [vmem:[#allocation6 + $0x50] sm:$0xf]
    %v105 = vld [vmem:[#allocation6 + $0x54] sm:$0xf]
    %v106 = vld [vmem:[#allocation6 + $0x58] sm:$0xf]
    %v107 = vld [vmem:[#allocation6 + $0x5c] sm:$0xf]
    %v108 = vld [vmem:[#allocation6 + $0x60] sm:$0xf]
    %v109 = vld [vmem:[#allocation6 + $0x64] sm:$0xf]
    %v110 = vld [vmem:[#allocation6 + $0x68] sm:$0xf]
    %v111 = vld [vmem:[#allocation6 + $0x6c] sm:$0xf]
    %v112 = vld [vmem:[#allocation6 + $0x70] sm:$0xf]
    %v113 = vld [vmem:[#allocation6 + $0x74] sm:$0xf]
    %v114 = vld [vmem:[#allocation6 + $0x78] sm:$0xf]
    %v115 = vld [vmem:[#allocation6 + $0x7c] sm:$0xf]
    %v116 = vld [vmem:[#allocation6 + $0x80] sm:$0xf]
    %v117 = vld [vmem:[#allocation6 + $0x84] sm:$0xf]
    %v118 = vld [vmem:[#allocation6 + $0x88] sm:$0xf]
    %v119 = vld [vmem:[#allocation6 + $0x8c] sm:$0xf]
    %v120 = vld [vmem:[#allocation6 + $0x90] sm:$0xf]
    %v121 = vld [vmem:[#allocation6 + $0x94] sm:$0xf]
    %v122 = vld [vmem:[#allocation6 + $0x98] sm:$0xf]
    %v123 = vld [vmem:[#allocation6 + $0x9c] sm:$0xf]
    %v124 = vld [vmem:[#allocation6 + $0xa0] sm:$0xf]
    %v125 = vld [vmem:[#allocation6 + $0xa4] sm:$0xf]
    %v126 = vld [vmem:[#allocation6 + $0xa8] sm:$0xf]
    %v127 = vld [vmem:[#allocation6 + $0xac] sm:$0xf]
    %v128 = vld [vmem:[#allocation6 + $0xb0] sm:$0xf]
    %v129 = vld [vmem:[#allocation6 + $0xb4] sm:$0xf]
    %v130 = vld [vmem:[#allocation6 + $0xb8] sm:$0xf]
    %v131 = vld [vmem:[#allocation6 + $0xbc] sm:$0xf]
    %v132 = vld [vmem:[#allocation6 + $0xc0] sm:$0xf]
    %v133 = vld [vmem:[#allocation6 + $0xc4] sm:$0xf]
    %v134 = vld [vmem:[#allocation6 + $0xc8] sm:$0xf]
    %v135 = vld [vmem:[#allocation6 + $0xcc] sm:$0xf]
    %v136 = vld [vmem:[#allocation6 + $0xd0] sm:$0xf]
    %v137 = vld [vmem:[#allocation6 + $0xd4] sm:$0xf]
    %v138 = vld [vmem:[#allocation6 + $0xd8] sm:$0xf]
    %v139 = vld [vmem:[#allocation6 + $0xdc] sm:$0xf]
    %v140 = vld [vmem:[#allocation6 + $0xe0] sm:$0xf]
    %v141 = vld [vmem:[#allocation6 + $0xe4] sm:$0xf]
    %v142 = vld [vmem:[#allocation6 + $0xe8] sm:$0xf]
    %v143 = vld [vmem:[#allocation6 + $0xec] sm:$0xf]
    %v144 = vld [vmem:[#allocation6 + $0xf0] sm:$0xf]
    %v145 = vld [vmem:[#allocation6 + $0xf4] sm:$0xf]
    %v146 = vld [vmem:[#allocation6 + $0xf8] sm:$0xf]
    %v147 = vld [vmem:[#allocation6 + $0xfc] sm:$0xf]
    %v148 = vld [vmem:[#allocation6 + $0x100] sm:$0xf]
    %v149 = vld [vmem:[#allocation6 + $0x104] sm:$0xf]
    %v150 = vld [vmem:[#allocation6 + $0x108] sm:$0xf]
    %v151 = vld [vmem:[#allocation6 + $0x10c] sm:$0xf]
    %v152 = vld [vmem:[#allocation6 + $0x110] sm:$0xf]
    %v153 = vld [vmem:[#allocation6 + $0x114] sm:$0xf]
    %v154 = vld [vmem:[#allocation6 + $0x118] sm:$0xf]
    %v155 = vld [vmem:[#allocation6 + $0x11c] sm:$0xf]
    %v156 = vld [vmem:[#allocation6 + $0x120] sm:$0xf]
    %v157 = vld [vmem:[#allocation6 + $0x124] sm:$0xf]
    %v158 = vld [vmem:[#allocation6 + $0x128] sm:$0xf]
    %v159 = vld [vmem:[#allocation6 + $0x12c] sm:$0xf]
    %v160 = vld [vmem:[#allocation6 + $0x130] sm:$0xf]
    %v161 = vld [vmem:[#allocation6 + $0x134] sm:$0xf]
    %v162 = vld [vmem:[#allocation6 + $0x138] sm:$0xf]
    %v163 = vld [vmem:[#allocation6 + $0x13c] sm:$0xf]
    %v164 = vld [vmem:[#allocation6 + $0x140] sm:$0xf]
    %v165 = vld [vmem:[#allocation6 + $0x144] sm:$0xf]
    %v166 = vld [vmem:[#allocation6 + $0x148] sm:$0xf]
    %v167 = vld [vmem:[#allocation6 + $0x14c] sm:$0xf]
    %v168 = vld [vmem:[#allocation6 + $0x150] sm:$0xf]
    %v169 = vld [vmem:[#allocation6 + $0x154] sm:$0xf]
    %v170 = vld [vmem:[#allocation6 + $0x158] sm:$0xf]
    %v171 = vld [vmem:[#allocation6 + $0x15c] sm:$0xf]
    %v172 = vld [vmem:[#allocation6 + $0x160] sm:$0xf]
    %v173 = vld [vmem:[#allocation6 + $0x164] sm:$0xf]
    %v174 = vld [vmem:[#allocation6 + $0x168] sm:$0xf]
    %v175 = vld [vmem:[#allocation6 + $0x16c] sm:$0xf]
    %v176 = vld [vmem:[#allocation6 + $0x170] sm:$0xf]
    %v177 = vld [vmem:[#allocation6 + $0x174] sm:$0xf]
    %v178 = vld [vmem:[#allocation6 + $0x178] sm:$0xf]
    %v179 = vld [vmem:[#allocation6 + $0x17c] sm:$0xf]
    %v180 = vld [vmem:[#allocation6 + $0x180] sm:$0xf]
    %v181 = vld [vmem:[#allocation6 + $0x184] sm:$0xf]
    %v182 = vld [vmem:[#allocation6 + $0x188] sm:$0xf]
    %v183 = vld [vmem:[#allocation6 + $0x18c] sm:$0xf]
    %v184 = vld [vmem:[#allocation6 + $0x190] sm:$0xf]
    %v185 = vld [vmem:[#allocation6 + $0x194] sm:$0xf]
    %v186 = vld [vmem:[#allocation6 + $0x198] sm:$0xf]
    %v187 = vld [vmem:[#allocation6 + $0x19c] sm:$0xf]
    %v188 = vld [vmem:[#allocation6 + $0x1a0] sm:$0xf]
    %v189 = vld [vmem:[#allocation6 + $0x1a4] sm:$0xf]
    %v190 = vld [vmem:[#allocation6 + $0x1a8] sm:$0xf]
    %v191 = vld [vmem:[#allocation6 + $0x1ac] sm:$0xf]
    %v192 = vld [vmem:[#allocation6 + $0x1b0] sm:$0xf]
    %v193 = vld [vmem:[#allocation6 + $0x1b4] sm:$0xf]
    %v194 = vld [vmem:[#allocation6 + $0x1b8] sm:$0xf]
    %v195 = vld [vmem:[#allocation6 + $0x1bc] sm:$0xf]
    %v196 = vld [vmem:[#allocation6 + $0x1c0] sm:$0xf]
    %v197 = vld [vmem:[#allocation6 + $0x1c4] sm:$0xf]
    %v198 = vld [vmem:[#allocation6 + $0x1c8] sm:$0xf]
    %v199 = vld [vmem:[#allocation6 + $0x1cc] sm:$0xf]
    %v200 = vld [vmem:[#allocation6 + $0x1d0] sm:$0xf]
    %v201 = vld [vmem:[#allocation6 + $0x1d4] sm:$0xf]
    %v202 = vld [vmem:[#allocation6 + $0x1d8] sm:$0xf]
    %v203 = vld [vmem:[#allocation6 + $0x1dc] sm:$0xf]
    %v204 = vld [vmem:[%s1] sm:$0xf]
    %v205 = vld [vmem:[%s1 + $0x4] sm:$0xf]
    %v206 = vld [vmem:[%s1 + $0x8] sm:$0xf]
    %v207 = vld [vmem:[%s1 + $0xc] sm:$0xf]
    %v208 = vld [vmem:[%s1 + $0x10] sm:$0xf]
    %v209 = vld [vmem:[%s1 + $0x14] sm:$0xf]
    %v210 = vld [vmem:[%s1 + $0x18] sm:$0xf]
    %v211 = vld [vmem:[%s1 + $0x1c] sm:$0xf]
    %v212 = vld [vmem:[%s1 + $0x20] sm:$0xf]
    %v213 = vld [vmem:[%s1 + $0x24] sm:$0xf]
    %v214 = vld [vmem:[%s1 + $0x28] sm:$0xf]
    %v215 = vld [vmem:[%s1 + $0x2c] sm:$0xf]
    %v216 = vld [vmem:[%s1 + $0x30] sm:$0xf]
    %v217 = vld [vmem:[%s1 + $0x34] sm:$0xf]
    %v218 = vld [vmem:[%s1 + $0x38] sm:$0xf]
    %v219 = vld [vmem:[%s1 + $0x3c] sm:$0xf]
    %v220 = vld [vmem:[%s2] sm:$0x1]
    %v222 = vlaneseq
    %v223 = vshrl.u32 %v222, 7
    %v224 = vsub.s32 0, %v223
    %v225 = vrot.slane %v220, %v224
    %v347 = vunpack.c.l.b16 %v84
    %v348 = vunpack.c.l.b16 %v85
    %v349 = vunpack.c.l.b16 %v86
    %v350 = vunpack.c.l.b16 %v87
    %v351 = vunpack.c.l.b16 %v88
    %v352 = vunpack.c.l.b16 %v89
    %v353 = vunpack.c.l.b16 %v90
    %v354 = vunpack.c.l.b16 %v91
    %v355 = vunpack.c.l.b16 %v92
    %v356 = vunpack.c.l.b16 %v93
    %v357 = vunpack.c.l.b16 %v94
    %v358 = vunpack.c.l.b16 %v95
    %v359 = vunpack.c.l.b16 %v96
    %v360 = vunpack.c.l.b16 %v97
    %v361 = vunpack.c.l.b16 %v98
    %v362 = vunpack.c.l.b16 %v99
    %v363 = vunpack.c.l.b16 %v100
    %v364 = vunpack.c.l.b16 %v101
    %v365 = vunpack.c.l.b16 %v102
    %v366 = vunpack.c.l.b16 %v103
    %v367 = vunpack.c.l.b16 %v104
    %v368 = vunpack.c.l.b16 %v105
    %v369 = vunpack.c.l.b16 %v106
    %v370 = vunpack.c.l.b16 %v107
    %v371 = vunpack.c.l.b16 %v108
    %v372 = vunpack.c.l.b16 %v109
    %v373 = vunpack.c.l.b16 %v110
    %v374 = vunpack.c.l.b16 %v111
    %v375 = vunpack.c.l.b16 %v112
    %v376 = vunpack.c.l.b16 %v113
    %v377 = vunpack.c.l.b16 %v114
    %v378 = vunpack.c.l.b16 %v115
    %v379 = vunpack.c.l.b16 %v116
    %v380 = vunpack.c.l.b16 %v117
    %v381 = vunpack.c.l.b16 %v118
    %v382 = vunpack.c.l.b16 %v119
    %v383 = vunpack.c.l.b16 %v120
    %v384 = vunpack.c.l.b16 %v121
    %v385 = vunpack.c.l.b16 %v122
    %v386 = vunpack.c.l.b16 %v123
    %v387 = vunpack.c.l.b16 %v124
    %v388 = vunpack.c.l.b16 %v125
    %v389 = vunpack.c.l.b16 %v126
    %v390 = vunpack.c.l.b16 %v127
    %v391 = vunpack.c.l.b16 %v128
    %v392 = vunpack.c.l.b16 %v129
    %v393 = vunpack.c.l.b16 %v130
    %v394 = vunpack.c.l.b16 %v131
    %v395 = vunpack.c.l.b16 %v132
    %v396 = vunpack.c.l.b16 %v133
    %v397 = vunpack.c.l.b16 %v134
    %v398 = vunpack.c.l.b16 %v135
    %v399 = vunpack.c.l.b16 %v136
    %v400 = vunpack.c.l.b16 %v137
    %v401 = vunpack.c.l.b16 %v138
    %v402 = vunpack.c.l.b16 %v139
    %v403 = vunpack.c.l.b16 %v140
    %v404 = vunpack.c.l.b16 %v141
    %v405 = vunpack.c.l.b16 %v142
    %v406 = vunpack.c.l.b16 %v143
    %v407 = vunpack.c.l.b16 %v144
    %v408 = vunpack.c.l.b16 %v145
    %v409 = vunpack.c.l.b16 %v146
    %v410 = vunpack.c.l.b16 %v147
    %v411 = vunpack.c.l.b16 %v148
    %v412 = vunpack.c.l.b16 %v149
    %v413 = vunpack.c.l.b16 %v150
    %v414 = vunpack.c.l.b16 %v151
    %v415 = vunpack.c.l.b16 %v152
    %v416 = vunpack.c.l.b16 %v153
    %v417 = vunpack.c.l.b16 %v154
    %v418 = vunpack.c.l.b16 %v155
    %v419 = vunpack.c.l.b16 %v156
    %v420 = vunpack.c.l.b16 %v157
    %v421 = vunpack.c.l.b16 %v158
    %v422 = vunpack.c.l.b16 %v159
    %v423 = vunpack.c.l.b16 %v160
    %v424 = vunpack.c.l.b16 %v161
    %v425 = vunpack.c.l.b16 %v162
    %v426 = vunpack.c.l.b16 %v163
    %v427 = vunpack.c.l.b16 %v164
    %v428 = vunpack.c.l.b16 %v165
    %v429 = vunpack.c.l.b16 %v166
    %v430 = vunpack.c.l.b16 %v167
    %v431 = vunpack.c.l.b16 %v168
    %v432 = vunpack.c.l.b16 %v169
    %v433 = vunpack.c.l.b16 %v170
    %v434 = vunpack.c.l.b16 %v171
    %v435 = vunpack.c.l.b16 %v172
    %v436 = vunpack.c.l.b16 %v173
    %v437 = vunpack.c.l.b16 %v174
    %v438 = vunpack.c.l.b16 %v175
    %v439 = vunpack.c.l.b16 %v176
    %v440 = vunpack.c.l.b16 %v177
    %v441 = vunpack.c.l.b16 %v178
    %v442 = vunpack.c.l.b16 %v179
    %v443 = vunpack.c.l.b16 %v180
    %v444 = vunpack.c.l.b16 %v181
    %v445 = vunpack.c.l.b16 %v182
    %v446 = vunpack.c.l.b16 %v183
    %v447 = vunpack.c.l.b16 %v184
    %v448 = vunpack.c.l.b16 %v185
    %v449 = vunpack.c.l.b16 %v186
    %v450 = vunpack.c.l.b16 %v187
    %v451 = vunpack.c.l.b16 %v188
    %v452 = vunpack.c.l.b16 %v189
    %v453 = vunpack.c.l.b16 %v190
    %v454 = vunpack.c.l.b16 %v191
    %v455 = vunpack.c.l.b16 %v192
    %v456 = vunpack.c.l.b16 %v193
    %v457 = vunpack.c.l.b16 %v194
    %v458 = vunpack.c.l.b16 %v195
    %v459 = vunpack.c.l.b16 %v196
    %v460 = vunpack.c.l.b16 %v197
    %v461 = vunpack.c.l.b16 %v198
    %v462 = vunpack.c.l.b16 %v199
    %v463 = vunpack.c.l.b16 %v200
    %v464 = vunpack.c.l.b16 %v201
    %v465 = vunpack.c.l.b16 %v202
    %v466 = vunpack.c.l.b16 %v203
    %v467 = vpack.c.b16 %v348, %v347
    %v468 = vpack.c.b16 %v350, %v349
    %v469 = vpack.c.b16 %v352, %v351
    %v470 = vpack.c.b16 %v354, %v353
    %v471 = vpack.c.b16 %v356, %v355
    %v472 = vpack.c.b16 %v358, %v357
    %v473 = vpack.c.b16 %v360, %v359
    %v474 = vpack.c.b16 %v362, %v361
    %v475 = vpack.c.b16 %v364, %v363
    %v476 = vpack.c.b16 %v366, %v365
    %v477 = vpack.c.b16 %v368, %v367
    %v478 = vpack.c.b16 %v370, %v369
    %v479 = vpack.c.b16 %v372, %v371
    %v480 = vpack.c.b16 %v374, %v373
    %v481 = vpack.c.b16 %v376, %v375
    %v482 = vpack.c.b16 %v378, %v377
    %v483 = vpack.c.b16 %v380, %v379
    %v484 = vpack.c.b16 %v382, %v381
    %v485 = vpack.c.b16 %v384, %v383
    %v486 = vpack.c.b16 %v386, %v385
    %v487 = vpack.c.b16 %v388, %v387
    %v488 = vpack.c.b16 %v390, %v389
    %v489 = vpack.c.b16 %v392, %v391
    %v490 = vpack.c.b16 %v394, %v393
    %v491 = vpack.c.b16 %v396, %v395
    %v492 = vpack.c.b16 %v398, %v397
    %v493 = vpack.c.b16 %v400, %v399
    %v494 = vpack.c.b16 %v402, %v401
    %v495 = vpack.c.b16 %v404, %v403
    %v496 = vpack.c.b16 %v406, %v405
    %v497 = vpack.c.b16 %v408, %v407
    %v498 = vpack.c.b16 %v410, %v409
    %v499 = vpack.c.b16 %v412, %v411
    %v500 = vpack.c.b16 %v414, %v413
    %v501 = vpack.c.b16 %v416, %v415
    %v502 = vpack.c.b16 %v418, %v417
    %v503 = vpack.c.b16 %v420, %v419
    %v504 = vpack.c.b16 %v422, %v421
    %v505 = vpack.c.b16 %v424, %v423
    %v506 = vpack.c.b16 %v426, %v425
    %v507 = vpack.c.b16 %v428, %v427
    %v508 = vpack.c.b16 %v430, %v429
    %v509 = vpack.c.b16 %v432, %v431
    %v510 = vpack.c.b16 %v434, %v433
    %v511 = vpack.c.b16 %v436, %v435
    %v512 = vpack.c.b16 %v438, %v437
    %v513 = vpack.c.b16 %v440, %v439
    %v514 = vpack.c.b16 %v442, %v441
    %v515 = vpack.c.b16 %v444, %v443
    %v516 = vpack.c.b16 %v446, %v445
    %v517 = vpack.c.b16 %v448, %v447
    %v518 = vpack.c.b16 %v450, %v449
    %v519 = vpack.c.b16 %v452, %v451
    %v520 = vpack.c.b16 %v454, %v453
    %v521 = vpack.c.b16 %v456, %v455
    %v522 = vpack.c.b16 %v458, %v457
    %v523 = vpack.c.b16 %v460, %v459
    %v524 = vpack.c.b16 %v462, %v461
    %v525 = vpack.c.b16 %v464, %v463
    %v526 = vpack.c.b16 %v466, %v465
    %v603 = vunpack.c.l.b16 %v204
    %v604 = vunpack.c.l.b16 %v205
    %v605 = vunpack.c.l.b16 %v206
    %v606 = vunpack.c.l.b16 %v207
    %v607 = vunpack.c.l.b16 %v208
    %v608 = vunpack.c.l.b16 %v209
    %v609 = vunpack.c.l.b16 %v210
    %v610 = vunpack.c.l.b16 %v211
    %v611 = vunpack.c.l.b16 %v212
    %v612 = vunpack.c.l.b16 %v213
    %v613 = vunpack.c.l.b16 %v214
    %v614 = vunpack.c.l.b16 %v215
    %v615 = vunpack.c.l.b16 %v216
    %v616 = vunpack.c.l.b16 %v217
    %v617 = vunpack.c.l.b16 %v218
    %v618 = vunpack.c.l.b16 %v219
    %v619 = vpack.c.b16 %v604, %v603
    %v620 = vpack.c.b16 %v606, %v605
    %v621 = vpack.c.b16 %v608, %v607
    %v622 = vpack.c.b16 %v610, %v609
    %v623 = vpack.c.b16 %v612, %v611
    %v624 = vpack.c.b16 %v614, %v613
    %v625 = vpack.c.b16 %v616, %v615
    %v626 = vpack.c.b16 %v618, %v617
    %635 = vmatprep.subr.bf16.mxu0 0
    %636 = vmatpush1.bf16.msra.mxu0 %v626
    %637 = vmatprep.subr.bf16.mxu0 0
    %638 = vmatpush1.bf16.msra.mxu0 %v625
    %639 = vmatprep.subr.bf16.mxu0 0
    %640 = vmatpush1.bf16.msra.mxu0 %v624
    %641 = vmatprep.subr.bf16.mxu0 0
    %642 = vmatpush1.bf16.msra.mxu0 %v623
    %643 = vmatprep.subr.bf16.mxu0 0
    %644 = vmatpush1.bf16.msra.mxu0 %v622
    %645 = vmatprep.subr.bf16.mxu0 0
    %646 = vmatpush1.bf16.msra.mxu0 %v621
    %647 = vmatprep.subr.bf16.mxu0 0
    %648 = vmatpush1.bf16.msra.mxu0 %v620
    %649 = vmatprep.subr.bf16.mxu0 0
    %650 = vmatpush1.bf16.msra.mxu0 %v619
    %651 = vmatprep.subr.bf16.mxu0 0
    %652 = vmatpush2.bf16.msra.mxu0 0
    %653 = vmatprep.subr.bf16.mxu0 0
    %654 = vmatpush2.bf16.msra.mxu0 0
    %655 = vmatprep.subr.bf16.mxu0 0
    %656 = vmatpush2.bf16.msra.mxu0 0
    %657 = vmatprep.subr.bf16.mxu0 0
    %658 = vmatpush2.bf16.msra.mxu0 0
    %659 = vmatprep.subr.bf16.mxu0 0
    %660 = vmatpush2.bf16.msra.mxu0 0
    %661 = vmatprep.subr.bf16.mxu0 0
    %662 = vmatpush2.bf16.msra.mxu0 0
    %663 = vmatprep.subr.bf16.mxu0 0
    %664 = vmatpush2.bf16.msra.mxu0 0
    %665 = vmatprep.subr.bf16.mxu0 0
    %666 = vmatpush2.bf16.msra.mxu0 0
    %667 = vmatprep.mubr.bf16.mxu0 0
    %668 = vmatmul.mubr.bf16.gmra.mxu0 %v467
    %v669 = vpop.f32.mrf.mxu0
    %v670 = vadd.f32 %v225, %v669
    %v671 = vpop.f32.mrf.mxu0
    %v672 = vpop.f32.mrf.mxu0
    %v673 = vadd.f32 %v225, %v672
    %v674 = vpop.f32.mrf.mxu0
    %675 = vmatprep.mubr.bf16.mxu0 0
    %676 = vmatmul.mubr.bf16.gmra.mxu0 %v468
    %v677 = vpop.f32.mrf.mxu0
    %v678 = vadd.f32 %v225, %v677
    %v679 = vpop.f32.mrf.mxu0
    %v680 = vpop.f32.mrf.mxu0
    %v681 = vadd.f32 %v225, %v680
    %v682 = vpop.f32.mrf.mxu0
    %683 = vmatprep.mubr.bf16.mxu0 0
    %684 = vmatmul.mubr.bf16.gmra.mxu0 %v469
    %v685 = vpop.f32.mrf.mxu0
    %v686 = vadd.f32 %v225, %v685
    %v687 = vpop.f32.mrf.mxu0
    %v688 = vpop.f32.mrf.mxu0
    %v689 = vadd.f32 %v225, %v688
    %v690 = vpop.f32.mrf.mxu0
    %691 = vmatprep.mubr.bf16.mxu0 0
    %692 = vmatmul.mubr.bf16.gmra.mxu0 %v470
    %v693 = vpop.f32.mrf.mxu0
    %v694 = vadd.f32 %v225, %v693
    %v695 = vpop.f32.mrf.mxu0
    %v696 = vpop.f32.mrf.mxu0
    %v697 = vadd.f32 %v225, %v696
    %v698 = vpop.f32.mrf.mxu0
    %699 = vmatprep.mubr.bf16.mxu0 0
    %700 = vmatmul.mubr.bf16.gmra.mxu0 %v471
    %v701 = vpop.f32.mrf.mxu0
    %v702 = vadd.f32 %v225, %v701
    %v703 = vpop.f32.mrf.mxu0
    %v704 = vpop.f32.mrf.mxu0
    %v705 = vadd.f32 %v225, %v704
    %v706 = vpop.f32.mrf.mxu0
    %707 = vmatprep.mubr.bf16.mxu0 0
    %708 = vmatmul.mubr.bf16.gmra.mxu0 %v472
    %v709 = vpop.f32.mrf.mxu0
    %v710 = vadd.f32 %v225, %v709
    %v711 = vpop.f32.mrf.mxu0
    %v712 = vpop.f32.mrf.mxu0
    %v713 = vadd.f32 %v225, %v712
    %v714 = vpop.f32.mrf.mxu0
    %715 = vmatprep.mubr.bf16.mxu0 0
    %716 = vmatmul.mubr.bf16.gmra.mxu0 %v473
    %v717 = vpop.f32.mrf.mxu0
    %v718 = vadd.f32 %v225, %v717
    %v719 = vpop.f32.mrf.mxu0
    %v720 = vpop.f32.mrf.mxu0
    %v721 = vadd.f32 %v225, %v720
    %v722 = vpop.f32.mrf.mxu0
    %723 = vmatprep.mubr.bf16.mxu0 0
    %724 = vmatmul.mubr.bf16.gmra.mxu0 %v474
    %v725 = vpop.f32.mrf.mxu0
    %v726 = vadd.f32 %v225, %v725
    %v727 = vpop.f32.mrf.mxu0
    %v728 = vpop.f32.mrf.mxu0
    %v729 = vadd.f32 %v225, %v728
    %v730 = vpop.f32.mrf.mxu0
    %731 = vmatprep.mubr.bf16.mxu0 0
    %732 = vmatmul.mubr.bf16.gmra.mxu0 %v475
    %v733 = vpop.f32.mrf.mxu0
    %v734 = vadd.f32 %v225, %v733
    %v735 = vpop.f32.mrf.mxu0
    %v736 = vpop.f32.mrf.mxu0
    %v737 = vadd.f32 %v225, %v736
    %v738 = vpop.f32.mrf.mxu0
    %739 = vmatprep.mubr.bf16.mxu0 0
    %740 = vmatmul.mubr.bf16.gmra.mxu0 %v476
    %v741 = vpop.f32.mrf.mxu0
    %v742 = vadd.f32 %v225, %v741
    %v743 = vpop.f32.mrf.mxu0
    %v744 = vpop.f32.mrf.mxu0
    %v745 = vadd.f32 %v225, %v744
    %v746 = vpop.f32.mrf.mxu0
    %747 = vmatprep.mubr.bf16.mxu0 0
    %748 = vmatmul.mubr.bf16.gmra.mxu0 %v477
    %v749 = vpop.f32.mrf.mxu0
    %v750 = vadd.f32 %v225, %v749
    %v751 = vpop.f32.mrf.mxu0
    %v752 = vpop.f32.mrf.mxu0
    %v753 = vadd.f32 %v225, %v752
    %v754 = vpop.f32.mrf.mxu0
    %755 = vmatprep.mubr.bf16.mxu0 0
    %756 = vmatmul.mubr.bf16.gmra.mxu0 %v478
    %v757 = vpop.f32.mrf.mxu0
    %v758 = vadd.f32 %v225, %v757
    %v759 = vpop.f32.mrf.mxu0
    %v760 = vpop.f32.mrf.mxu0
    %v761 = vadd.f32 %v225, %v760
    %v762 = vpop.f32.mrf.mxu0
    %763 = vmatprep.mubr.bf16.mxu0 0
    %764 = vmatmul.mubr.bf16.gmra.mxu0 %v479
    %v765 = vpop.f32.mrf.mxu0
    %v766 = vadd.f32 %v225, %v765
    %v767 = vpop.f32.mrf.mxu0
    %v768 = vpop.f32.mrf.mxu0
    %v769 = vadd.f32 %v225, %v768
    %v770 = vpop.f32.mrf.mxu0
    %771 = vmatprep.mubr.bf16.mxu0 0
    %772 = vmatmul.mubr.bf16.gmra.mxu0 %v480
    %v773 = vpop.f32.mrf.mxu0
    %v774 = vadd.f32 %v225, %v773
    %v775 = vpop.f32.mrf.mxu0
    %v776 = vpop.f32.mrf.mxu0
    %v777 = vadd.f32 %v225, %v776
    %v778 = vpop.f32.mrf.mxu0
    %779 = vmatprep.mubr.bf16.mxu0 0
    %780 = vmatmul.mubr.bf16.gmra.mxu0 %v481
    %v781 = vpop.f32.mrf.mxu0
    %v782 = vadd.f32 %v225, %v781
    %v783 = vpop.f32.mrf.mxu0
    %v784 = vpop.f32.mrf.mxu0
    %v785 = vadd.f32 %v225, %v784
    %v786 = vpop.f32.mrf.mxu0
    %787 = vmatprep.mubr.bf16.mxu0 0
    %788 = vmatmul.mubr.bf16.gmra.mxu0 %v482
    %v789 = vpop.f32.mrf.mxu0
    %v790 = vadd.f32 %v225, %v789
    %v791 = vpop.f32.mrf.mxu0
    %v792 = vpop.f32.mrf.mxu0
    %v793 = vadd.f32 %v225, %v792
    %v794 = vpop.f32.mrf.mxu0
    %795 = vmatprep.mubr.bf16.mxu0 0
    %796 = vmatmul.mubr.bf16.gmra.mxu0 %v483
    %v797 = vpop.f32.mrf.mxu0
    %v798 = vadd.f32 %v225, %v797
    %v799 = vpop.f32.mrf.mxu0
    %v800 = vpop.f32.mrf.mxu0
    %v801 = vadd.f32 %v225, %v800
    %v802 = vpop.f32.mrf.mxu0
    %803 = vmatprep.mubr.bf16.mxu0 0
    %804 = vmatmul.mubr.bf16.gmra.mxu0 %v484
    %v805 = vpop.f32.mrf.mxu0
    %v806 = vadd.f32 %v225, %v805
    %v807 = vpop.f32.mrf.mxu0
    %v808 = vpop.f32.mrf.mxu0
    %v809 = vadd.f32 %v225, %v808
    %v810 = vpop.f32.mrf.mxu0
    %811 = vmatprep.mubr.bf16.mxu0 0
    %812 = vmatmul.mubr.bf16.gmra.mxu0 %v485
    %v813 = vpop.f32.mrf.mxu0
    %v814 = vadd.f32 %v225, %v813
    %v815 = vpop.f32.mrf.mxu0
    %v816 = vpop.f32.mrf.mxu0
    %v817 = vadd.f32 %v225, %v816
    %v818 = vpop.f32.mrf.mxu0
    %819 = vmatprep.mubr.bf16.mxu0 0
    %820 = vmatmul.mubr.bf16.gmra.mxu0 %v486
    %v821 = vpop.f32.mrf.mxu0
    %v822 = vadd.f32 %v225, %v821
    %v823 = vpop.f32.mrf.mxu0
    %v824 = vpop.f32.mrf.mxu0
    %v825 = vadd.f32 %v225, %v824
    %v826 = vpop.f32.mrf.mxu0
    %827 = vmatprep.mubr.bf16.mxu0 0
    %828 = vmatmul.mubr.bf16.gmra.mxu0 %v487
    %v829 = vpop.f32.mrf.mxu0
    %v830 = vadd.f32 %v225, %v829
    %v831 = vpop.f32.mrf.mxu0
    %v832 = vpop.f32.mrf.mxu0
    %v833 = vadd.f32 %v225, %v832
    %v834 = vpop.f32.mrf.mxu0
    %835 = vmatprep.mubr.bf16.mxu0 0
    %836 = vmatmul.mubr.bf16.gmra.mxu0 %v488
    %v837 = vpop.f32.mrf.mxu0
    %v838 = vadd.f32 %v225, %v837
    %v839 = vpop.f32.mrf.mxu0
    %v840 = vpop.f32.mrf.mxu0
    %v841 = vadd.f32 %v225, %v840
    %v842 = vpop.f32.mrf.mxu0
    %843 = vmatprep.mubr.bf16.mxu0 0
    %844 = vmatmul.mubr.bf16.gmra.mxu0 %v489
    %v845 = vpop.f32.mrf.mxu0
    %v846 = vadd.f32 %v225, %v845
    %v847 = vpop.f32.mrf.mxu0
    %v848 = vpop.f32.mrf.mxu0
    %v849 = vadd.f32 %v225, %v848
    %v850 = vpop.f32.mrf.mxu0
    %851 = vmatprep.mubr.bf16.mxu0 0
    %852 = vmatmul.mubr.bf16.gmra.mxu0 %v490
    %v853 = vpop.f32.mrf.mxu0
    %v854 = vadd.f32 %v225, %v853
    %v855 = vpop.f32.mrf.mxu0
    %v856 = vpop.f32.mrf.mxu0
    %v857 = vadd.f32 %v225, %v856
    %v858 = vpop.f32.mrf.mxu0
    %859 = vmatprep.mubr.bf16.mxu0 0
    %860 = vmatmul.mubr.bf16.gmra.mxu0 %v491
    %v861 = vpop.f32.mrf.mxu0
    %v862 = vadd.f32 %v225, %v861
    %v863 = vpop.f32.mrf.mxu0
    %v864 = vpop.f32.mrf.mxu0
    %v865 = vadd.f32 %v225, %v864
    %v866 = vpop.f32.mrf.mxu0
    %867 = vmatprep.mubr.bf16.mxu0 0
    %868 = vmatmul.mubr.bf16.gmra.mxu0 %v492
    %v869 = vpop.f32.mrf.mxu0
    %v870 = vadd.f32 %v225, %v869
    %v871 = vpop.f32.mrf.mxu0
    %v872 = vpop.f32.mrf.mxu0
    %v873 = vadd.f32 %v225, %v872
    %v874 = vpop.f32.mrf.mxu0
    %875 = vmatprep.mubr.bf16.mxu0 0
    %876 = vmatmul.mubr.bf16.gmra.mxu0 %v493
    %v877 = vpop.f32.mrf.mxu0
    %v878 = vadd.f32 %v225, %v877
    %v879 = vpop.f32.mrf.mxu0
    %v880 = vpop.f32.mrf.mxu0
    %v881 = vadd.f32 %v225, %v880
    %v882 = vpop.f32.mrf.mxu0
    %883 = vmatprep.mubr.bf16.mxu0 0
    %884 = vmatmul.mubr.bf16.gmra.mxu0 %v494
    %v885 = vpop.f32.mrf.mxu0
    %v886 = vadd.f32 %v225, %v885
    %v887 = vpop.f32.mrf.mxu0
    %v888 = vpop.f32.mrf.mxu0
    %v889 = vadd.f32 %v225, %v888
    %v890 = vpop.f32.mrf.mxu0
    %891 = vmatprep.mubr.bf16.mxu0 0
    %892 = vmatmul.mubr.bf16.gmra.mxu0 %v495
    %v893 = vpop.f32.mrf.mxu0
    %v894 = vadd.f32 %v225, %v893
    %v895 = vpop.f32.mrf.mxu0
    %v896 = vpop.f32.mrf.mxu0
    %v897 = vadd.f32 %v225, %v896
    %v898 = vpop.f32.mrf.mxu0
    %899 = vmatprep.mubr.bf16.mxu0 0
    %900 = vmatmul.mubr.bf16.gmra.mxu0 %v496
    %v901 = vpop.f32.mrf.mxu0
    %v902 = vadd.f32 %v225, %v901
    %v903 = vpop.f32.mrf.mxu0
    %v904 = vpop.f32.mrf.mxu0
    %v905 = vadd.f32 %v225, %v904
    %v906 = vpop.f32.mrf.mxu0
    %907 = vmatprep.mubr.bf16.mxu0 0
    %908 = vmatmul.mubr.bf16.gmra.mxu0 %v497
    %v909 = vpop.f32.mrf.mxu0
    %v910 = vadd.f32 %v225, %v909
    %v911 = vpop.f32.mrf.mxu0
    %v912 = vpop.f32.mrf.mxu0
    %v913 = vadd.f32 %v225, %v912
    %v914 = vpop.f32.mrf.mxu0
    %915 = vmatprep.mubr.bf16.mxu0 0
    %916 = vmatmul.mubr.bf16.gmra.mxu0 %v498
    %v917 = vpop.f32.mrf.mxu0
    %v918 = vadd.f32 %v225, %v917
    %v919 = vpop.f32.mrf.mxu0
    %v920 = vpop.f32.mrf.mxu0
    %v921 = vadd.f32 %v225, %v920
    %v922 = vpop.f32.mrf.mxu0
    %923 = vmatprep.mubr.bf16.mxu0 0
    %924 = vmatmul.mubr.bf16.gmra.mxu0 %v499
    %v925 = vpop.f32.mrf.mxu0
    %v926 = vadd.f32 %v225, %v925
    %v927 = vpop.f32.mrf.mxu0
    %v928 = vpop.f32.mrf.mxu0
    %v929 = vadd.f32 %v225, %v928
    %v930 = vpop.f32.mrf.mxu0
    %931 = vmatprep.mubr.bf16.mxu0 0
    %932 = vmatmul.mubr.bf16.gmra.mxu0 %v500
    %v933 = vpop.f32.mrf.mxu0
    %v934 = vadd.f32 %v225, %v933
    %v935 = vpop.f32.mrf.mxu0
    %v936 = vpop.f32.mrf.mxu0
    %v937 = vadd.f32 %v225, %v936
    %v938 = vpop.f32.mrf.mxu0
    %939 = vmatprep.mubr.bf16.mxu0 0
    %940 = vmatmul.mubr.bf16.gmra.mxu0 %v501
    %v941 = vpop.f32.mrf.mxu0
    %v942 = vadd.f32 %v225, %v941
    %v943 = vpop.f32.mrf.mxu0
    %v944 = vpop.f32.mrf.mxu0
    %v945 = vadd.f32 %v225, %v944
    %v946 = vpop.f32.mrf.mxu0
    %947 = vmatprep.mubr.bf16.mxu0 0
    %948 = vmatmul.mubr.bf16.gmra.mxu0 %v502
    %v949 = vpop.f32.mrf.mxu0
    %v950 = vadd.f32 %v225, %v949
    %v951 = vpop.f32.mrf.mxu0
    %v952 = vpop.f32.mrf.mxu0
    %v953 = vadd.f32 %v225, %v952
    %v954 = vpop.f32.mrf.mxu0
    %955 = vmatprep.mubr.bf16.mxu0 0
    %956 = vmatmul.mubr.bf16.gmra.mxu0 %v503
    %v957 = vpop.f32.mrf.mxu0
    %v958 = vadd.f32 %v225, %v957
    %v959 = vpop.f32.mrf.mxu0
    %v960 = vpop.f32.mrf.mxu0
    %v961 = vadd.f32 %v225, %v960
    %v962 = vpop.f32.mrf.mxu0
    %963 = vmatprep.mubr.bf16.mxu0 0
    %964 = vmatmul.mubr.bf16.gmra.mxu0 %v504
    %v965 = vpop.f32.mrf.mxu0
    %v966 = vadd.f32 %v225, %v965
    %v967 = vpop.f32.mrf.mxu0
    %v968 = vpop.f32.mrf.mxu0
    %v969 = vadd.f32 %v225, %v968
    %v970 = vpop.f32.mrf.mxu0
    %971 = vmatprep.mubr.bf16.mxu0 0
    %972 = vmatmul.mubr.bf16.gmra.mxu0 %v505
    %v973 = vpop.f32.mrf.mxu0
    %v974 = vadd.f32 %v225, %v973
    %v975 = vpop.f32.mrf.mxu0
    %v976 = vpop.f32.mrf.mxu0
    %v977 = vadd.f32 %v225, %v976
    %v978 = vpop.f32.mrf.mxu0
    %979 = vmatprep.mubr.bf16.mxu0 0
    %980 = vmatmul.mubr.bf16.gmra.mxu0 %v506
    %v981 = vpop.f32.mrf.mxu0
    %v982 = vadd.f32 %v225, %v981
    %v983 = vpop.f32.mrf.mxu0
    %v984 = vpop.f32.mrf.mxu0
    %v985 = vadd.f32 %v225, %v984
    %v986 = vpop.f32.mrf.mxu0
    %987 = vmatprep.mubr.bf16.mxu0 0
    %988 = vmatmul.mubr.bf16.gmra.mxu0 %v507
    %v989 = vpop.f32.mrf.mxu0
    %v990 = vadd.f32 %v225, %v989
    %v991 = vpop.f32.mrf.mxu0
    %v992 = vpop.f32.mrf.mxu0
    %v993 = vadd.f32 %v225, %v992
    %v994 = vpop.f32.mrf.mxu0
    %995 = vmatprep.mubr.bf16.mxu0 0
    %996 = vmatmul.mubr.bf16.gmra.mxu0 %v508
    %v997 = vpop.f32.mrf.mxu0
    %v998 = vadd.f32 %v225, %v997
    %v999 = vpop.f32.mrf.mxu0
    %v1000 = vpop.f32.mrf.mxu0
    %v1001 = vadd.f32 %v225, %v1000
    %v1002 = vpop.f32.mrf.mxu0
    %1003 = vmatprep.mubr.bf16.mxu0 0
    %1004 = vmatmul.mubr.bf16.gmra.mxu0 %v509
    %v1005 = vpop.f32.mrf.mxu0
    %v1006 = vadd.f32 %v225, %v1005
    %v1007 = vpop.f32.mrf.mxu0
    %v1008 = vpop.f32.mrf.mxu0
    %v1009 = vadd.f32 %v225, %v1008
    %v1010 = vpop.f32.mrf.mxu0
    %1011 = vmatprep.mubr.bf16.mxu0 0
    %1012 = vmatmul.mubr.bf16.gmra.mxu0 %v510
    %v1013 = vpop.f32.mrf.mxu0
    %v1014 = vadd.f32 %v225, %v1013
    %v1015 = vpop.f32.mrf.mxu0
    %v1016 = vpop.f32.mrf.mxu0
    %v1017 = vadd.f32 %v225, %v1016
    %v1018 = vpop.f32.mrf.mxu0
    %1019 = vmatprep.mubr.bf16.mxu0 0
    %1020 = vmatmul.mubr.bf16.gmra.mxu0 %v511
    %v1021 = vpop.f32.mrf.mxu0
    %v1022 = vadd.f32 %v225, %v1021
    %v1023 = vpop.f32.mrf.mxu0
    %v1024 = vpop.f32.mrf.mxu0
    %v1025 = vadd.f32 %v225, %v1024
    %v1026 = vpop.f32.mrf.mxu0
    %1027 = vmatprep.mubr.bf16.mxu0 0
    %1028 = vmatmul.mubr.bf16.gmra.mxu0 %v512
    %v1029 = vpop.f32.mrf.mxu0
    %v1030 = vadd.f32 %v225, %v1029
    %v1031 = vpop.f32.mrf.mxu0
    %v1032 = vpop.f32.mrf.mxu0
    %v1033 = vadd.f32 %v225, %v1032
    %v1034 = vpop.f32.mrf.mxu0
    %1035 = vmatprep.mubr.bf16.mxu0 0
    %1036 = vmatmul.mubr.bf16.gmra.mxu0 %v513
    %v1037 = vpop.f32.mrf.mxu0
    %v1038 = vadd.f32 %v225, %v1037
    %v1039 = vpop.f32.mrf.mxu0
    %v1040 = vpop.f32.mrf.mxu0
    %v1041 = vadd.f32 %v225, %v1040
    %v1042 = vpop.f32.mrf.mxu0
    %1043 = vmatprep.mubr.bf16.mxu0 0
    %1044 = vmatmul.mubr.bf16.gmra.mxu0 %v514
    %v1045 = vpop.f32.mrf.mxu0
    %v1046 = vadd.f32 %v225, %v1045
    %v1047 = vpop.f32.mrf.mxu0
    %v1048 = vpop.f32.mrf.mxu0
    %v1049 = vadd.f32 %v225, %v1048
    %v1050 = vpop.f32.mrf.mxu0
    %1051 = vmatprep.mubr.bf16.mxu0 0
    %1052 = vmatmul.mubr.bf16.gmra.mxu0 %v515
    %v1053 = vpop.f32.mrf.mxu0
    %v1054 = vadd.f32 %v225, %v1053
    %v1055 = vpop.f32.mrf.mxu0
    %v1056 = vpop.f32.mrf.mxu0
    %v1057 = vadd.f32 %v225, %v1056
    %v1058 = vpop.f32.mrf.mxu0
    %1059 = vmatprep.mubr.bf16.mxu0 0
    %1060 = vmatmul.mubr.bf16.gmra.mxu0 %v516
    %v1061 = vpop.f32.mrf.mxu0
    %v1062 = vadd.f32 %v225, %v1061
    %v1063 = vpop.f32.mrf.mxu0
    %v1064 = vpop.f32.mrf.mxu0
    %v1065 = vadd.f32 %v225, %v1064
    %v1066 = vpop.f32.mrf.mxu0
    %1067 = vmatprep.mubr.bf16.mxu0 0
    %1068 = vmatmul.mubr.bf16.gmra.mxu0 %v517
    %v1069 = vpop.f32.mrf.mxu0
    %v1070 = vadd.f32 %v225, %v1069
    %v1071 = vpop.f32.mrf.mxu0
    %v1072 = vpop.f32.mrf.mxu0
    %v1073 = vadd.f32 %v225, %v1072
    %v1074 = vpop.f32.mrf.mxu0
    %1075 = vmatprep.mubr.bf16.mxu0 0
    %1076 = vmatmul.mubr.bf16.gmra.mxu0 %v518
    %v1077 = vpop.f32.mrf.mxu0
    %v1078 = vadd.f32 %v225, %v1077
    %v1079 = vpop.f32.mrf.mxu0
    %v1080 = vpop.f32.mrf.mxu0
    %v1081 = vadd.f32 %v225, %v1080
    %v1082 = vpop.f32.mrf.mxu0
    %1083 = vmatprep.mubr.bf16.mxu0 0
    %1084 = vmatmul.mubr.bf16.gmra.mxu0 %v519
    %v1085 = vpop.f32.mrf.mxu0
    %v1086 = vadd.f32 %v225, %v1085
    %v1087 = vpop.f32.mrf.mxu0
    %v1088 = vpop.f32.mrf.mxu0
    %v1089 = vadd.f32 %v225, %v1088
    %v1090 = vpop.f32.mrf.mxu0
    %1091 = vmatprep.mubr.bf16.mxu0 0
    %1092 = vmatmul.mubr.bf16.gmra.mxu0 %v520
    %v1093 = vpop.f32.mrf.mxu0
    %v1094 = vadd.f32 %v225, %v1093
    %v1095 = vpop.f32.mrf.mxu0
    %v1096 = vpop.f32.mrf.mxu0
    %v1097 = vadd.f32 %v225, %v1096
    %v1098 = vpop.f32.mrf.mxu0
    %1099 = vmatprep.mubr.bf16.mxu0 0
    %1100 = vmatmul.mubr.bf16.gmra.mxu0 %v521
    %v1101 = vpop.f32.mrf.mxu0
    %v1102 = vadd.f32 %v225, %v1101
    %v1103 = vpop.f32.mrf.mxu0
    %v1104 = vpop.f32.mrf.mxu0
    %v1105 = vadd.f32 %v225, %v1104
    %v1106 = vpop.f32.mrf.mxu0
    %1107 = vmatprep.mubr.bf16.mxu0 0
    %1108 = vmatmul.mubr.bf16.gmra.mxu0 %v522
    %v1109 = vpop.f32.mrf.mxu0
    %v1110 = vadd.f32 %v225, %v1109
    %v1111 = vpop.f32.mrf.mxu0
    %v1112 = vpop.f32.mrf.mxu0
    %v1113 = vadd.f32 %v225, %v1112
    %v1114 = vpop.f32.mrf.mxu0
    %1115 = vmatprep.mubr.bf16.mxu0 0
    %1116 = vmatmul.mubr.bf16.gmra.mxu0 %v523
    %v1117 = vpop.f32.mrf.mxu0
    %v1118 = vadd.f32 %v225, %v1117
    %v1119 = vpop.f32.mrf.mxu0
    %v1120 = vpop.f32.mrf.mxu0
    %v1121 = vadd.f32 %v225, %v1120
    %v1122 = vpop.f32.mrf.mxu0
    %1123 = vmatprep.mubr.bf16.mxu0 0
    %1124 = vmatmul.mubr.bf16.gmra.mxu0 %v524
    %v1125 = vpop.f32.mrf.mxu0
    %v1126 = vadd.f32 %v225, %v1125
    %v1127 = vpop.f32.mrf.mxu0
    %v1128 = vpop.f32.mrf.mxu0
    %v1129 = vadd.f32 %v225, %v1128
    %v1130 = vpop.f32.mrf.mxu0
    %1131 = vmatprep.mubr.bf16.mxu0 0
    %1132 = vmatmul.mubr.bf16.gmra.mxu0 %v525
    %v1133 = vpop.f32.mrf.mxu0
    %v1134 = vadd.f32 %v225, %v1133
    %v1135 = vpop.f32.mrf.mxu0
    %v1136 = vpop.f32.mrf.mxu0
    %v1137 = vadd.f32 %v225, %v1136
    %v1138 = vpop.f32.mrf.mxu0
    %1139 = vmatprep.mubr.bf16.mxu0 0
    %1140 = vmatmul.mubr.bf16.gmra.mxu0 %v526
    %v1141 = vpop.f32.mrf.mxu0
    %v1142 = vadd.f32 %v225, %v1141
    %v1143 = vpop.f32.mrf.mxu0
    %v1144 = vpop.f32.mrf.mxu0
    %v1145 = vadd.f32 %v225, %v1144
    %v1146 = vpop.f32.mrf.mxu0
    %1147 = vdwg.mxu0
    %v1148 = vmax.f32 %v670, 0.0
    %v1149 = vmax.f32 %v673, 0.0
    %v1150 = vmax.f32 %v678, 0.0
    %v1151 = vmax.f32 %v681, 0.0
    %v1152 = vmax.f32 %v686, 0.0
    %v1153 = vmax.f32 %v689, 0.0
    %v1154 = vmax.f32 %v694, 0.0
    %v1155 = vmax.f32 %v697, 0.0
    %v1156 = vmax.f32 %v702, 0.0
    %v1157 = vmax.f32 %v705, 0.0
    %v1158 = vmax.f32 %v710, 0.0
    %v1159 = vmax.f32 %v713, 0.0
    %v1160 = vmax.f32 %v718, 0.0
    %v1161 = vmax.f32 %v721, 0.0
    %v1162 = vmax.f32 %v726, 0.0
    %v1163 = vmax.f32 %v729, 0.0
    %v1164 = vmax.f32 %v734, 0.0
    %v1165 = vmax.f32 %v737, 0.0
    %v1166 = vmax.f32 %v742, 0.0
    %v1167 = vmax.f32 %v745, 0.0
    %v1168 = vmax.f32 %v750, 0.0
    %v1169 = vmax.f32 %v753, 0.0
    %v1170 = vmax.f32 %v758, 0.0
    %v1171 = vmax.f32 %v761, 0.0
    %v1172 = vmax.f32 %v766, 0.0
    %v1173 = vmax.f32 %v769, 0.0
    %v1174 = vmax.f32 %v774, 0.0
    %v1175 = vmax.f32 %v777, 0.0
    %v1176 = vmax.f32 %v782, 0.0
    %v1177 = vmax.f32 %v785, 0.0
    %v1178 = vmax.f32 %v790, 0.0
    %v1179 = vmax.f32 %v793, 0.0
    %v1180 = vmax.f32 %v798, 0.0
    %v1181 = vmax.f32 %v801, 0.0
    %v1182 = vmax.f32 %v806, 0.0
    %v1183 = vmax.f32 %v809, 0.0
    %v1184 = vmax.f32 %v814, 0.0
    %v1185 = vmax.f32 %v817, 0.0
    %v1186 = vmax.f32 %v822, 0.0
    %v1187 = vmax.f32 %v825, 0.0
    %v1188 = vmax.f32 %v830, 0.0
    %v1189 = vmax.f32 %v833, 0.0
    %v1190 = vmax.f32 %v838, 0.0
    %v1191 = vmax.f32 %v841, 0.0
    %v1192 = vmax.f32 %v846, 0.0
    %v1193 = vmax.f32 %v849, 0.0
    %v1194 = vmax.f32 %v854, 0.0
    %v1195 = vmax.f32 %v857, 0.0
    %v1196 = vmax.f32 %v862, 0.0
    %v1197 = vmax.f32 %v865, 0.0
    %v1198 = vmax.f32 %v870, 0.0
    %v1199 = vmax.f32 %v873, 0.0
    %v1200 = vmax.f32 %v878, 0.0
    %v1201 = vmax.f32 %v881, 0.0
    %v1202 = vmax.f32 %v886, 0.0
    %v1203 = vmax.f32 %v889, 0.0
    %v1204 = vmax.f32 %v894, 0.0
    %v1205 = vmax.f32 %v897, 0.0
    %v1206 = vmax.f32 %v902, 0.0
    %v1207 = vmax.f32 %v905, 0.0
    %v1208 = vmax.f32 %v910, 0.0
    %v1209 = vmax.f32 %v913, 0.0
    %v1210 = vmax.f32 %v918, 0.0
    %v1211 = vmax.f32 %v921, 0.0
    %v1212 = vmax.f32 %v926, 0.0
    %v1213 = vmax.f32 %v929, 0.0
    %v1214 = vmax.f32 %v934, 0.0
    %v1215 = vmax.f32 %v937, 0.0
    %v1216 = vmax.f32 %v942, 0.0
    %v1217 = vmax.f32 %v945, 0.0
    %v1218 = vmax.f32 %v950, 0.0
    %v1219 = vmax.f32 %v953, 0.0
    %v1220 = vmax.f32 %v958, 0.0
    %v1221 = vmax.f32 %v961, 0.0
    %v1222 = vmax.f32 %v966, 0.0
    %v1223 = vmax.f32 %v969, 0.0
    %v1224 = vmax.f32 %v974, 0.0
    %v1225 = vmax.f32 %v977, 0.0
    %v1226 = vmax.f32 %v982, 0.0
    %v1227 = vmax.f32 %v985, 0.0
    %v1228 = vmax.f32 %v990, 0.0
    %v1229 = vmax.f32 %v993, 0.0
    %v1230 = vmax.f32 %v998, 0.0
    %v1231 = vmax.f32 %v1001, 0.0
    %v1232 = vmax.f32 %v1006, 0.0
    %v1233 = vmax.f32 %v1009, 0.0
    %v1234 = vmax.f32 %v1014, 0.0
    %v1235 = vmax.f32 %v1017, 0.0
    %v1236 = vmax.f32 %v1022, 0.0
    %v1237 = vmax.f32 %v1025, 0.0
    %v1238 = vmax.f32 %v1030, 0.0
    %v1239 = vmax.f32 %v1033, 0.0
    %v1240 = vmax.f32 %v1038, 0.0
    %v1241 = vmax.f32 %v1041, 0.0
    %v1242 = vmax.f32 %v1046, 0.0
    %v1243 = vmax.f32 %v1049, 0.0
    %v1244 = vmax.f32 %v1054, 0.0
    %v1245 = vmax.f32 %v1057, 0.0
    %v1246 = vmax.f32 %v1062, 0.0
    %v1247 = vmax.f32 %v1065, 0.0
    %v1248 = vmax.f32 %v1070, 0.0
    %v1249 = vmax.f32 %v1073, 0.0
    %v1250 = vmax.f32 %v1078, 0.0
    %v1251 = vmax.f32 %v1081, 0.0
    %v1252 = vmax.f32 %v1086, 0.0
    %v1253 = vmax.f32 %v1089, 0.0
    %v1254 = vmax.f32 %v1094, 0.0
    %v1255 = vmax.f32 %v1097, 0.0
    %v1256 = vmax.f32 %v1102, 0.0
    %v1257 = vmax.f32 %v1105, 0.0
    %v1258 = vmax.f32 %v1110, 0.0
    %v1259 = vmax.f32 %v1113, 0.0
    %v1260 = vmax.f32 %v1118, 0.0
    %v1261 = vmax.f32 %v1121, 0.0
    %v1262 = vmax.f32 %v1126, 0.0
    %v1263 = vmax.f32 %v1129, 0.0
    %v1264 = vmax.f32 %v1134, 0.0
    %v1265 = vmax.f32 %v1137, 0.0
    %v1266 = vmax.f32 %v1142, 0.0
    %v1267 = vmax.f32 %v1145, 0.0
    %vm1268 = vcmask 261120
    %1269 = vst.msk [vmem:[#allocation2] sm:$0xff] %vm1268, %v1148
    %1270 = vst.msk [vmem:[#allocation2 + $0x8] sm:$0xff] %vm1268, %v1149
    %1271 = vst.msk [vmem:[#allocation2 + $0x10] sm:$0xff] %vm1268, %v1150
    %1272 = vst.msk [vmem:[#allocation2 + $0x18] sm:$0xff] %vm1268, %v1151
    %1273 = vst.msk [vmem:[#allocation2 + $0x20] sm:$0xff] %vm1268, %v1152
    %1274 = vst.msk [vmem:[#allocation2 + $0x28] sm:$0xff] %vm1268, %v1153
    %1275 = vst.msk [vmem:[#allocation2 + $0x30] sm:$0xff] %vm1268, %v1154
    %1276 = vst.msk [vmem:[#allocation2 + $0x38] sm:$0xff] %vm1268, %v1155
    %1277 = vst.msk [vmem:[#allocation2 + $0x40] sm:$0xff] %vm1268, %v1156
    %1278 = vst.msk [vmem:[#allocation2 + $0x48] sm:$0xff] %vm1268, %v1157
    %1279 = vst.msk [vmem:[#allocation2 + $0x50] sm:$0xff] %vm1268, %v1158
    %1280 = vst.msk [vmem:[#allocation2 + $0x58] sm:$0xff] %vm1268, %v1159
    %1281 = vst.msk [vmem:[#allocation2 + $0x60] sm:$0xff] %vm1268, %v1160
    %1282 = vst.msk [vmem:[#allocation2 + $0x68] sm:$0xff] %vm1268, %v1161
    %1283 = vst.msk [vmem:[#allocation2 + $0x70] sm:$0xff] %vm1268, %v1162
    %1284 = vst.msk [vmem:[#allocation2 + $0x78] sm:$0xff] %vm1268, %v1163
    %1285 = vst.msk [vmem:[#allocation2 + $0x80] sm:$0xff] %vm1268, %v1164
    %1286 = vst.msk [vmem:[#allocation2 + $0x88] sm:$0xff] %vm1268, %v1165
    %1287 = vst.msk [vmem:[#allocation2 + $0x90] sm:$0xff] %vm1268, %v1166
    %1288 = vst.msk [vmem:[#allocation2 + $0x98] sm:$0xff] %vm1268, %v1167
    %1289 = vst.msk [vmem:[#allocation2 + $0xa0] sm:$0xff] %vm1268, %v1168
    %1290 = vst.msk [vmem:[#allocation2 + $0xa8] sm:$0xff] %vm1268, %v1169
    %1291 = vst.msk [vmem:[#allocation2 + $0xb0] sm:$0xff] %vm1268, %v1170
    %1292 = vst.msk [vmem:[#allocation2 + $0xb8] sm:$0xff] %vm1268, %v1171
    %1293 = vst.msk [vmem:[#allocation2 + $0xc0] sm:$0xff] %vm1268, %v1172
    %1294 = vst.msk [vmem:[#allocation2 + $0xc8] sm:$0xff] %vm1268, %v1173
    %1295 = vst.msk [vmem:[#allocation2 + $0xd0] sm:$0xff] %vm1268, %v1174
    %1296 = vst.msk [vmem:[#allocation2 + $0xd8] sm:$0xff] %vm1268, %v1175
    %1297 = vst.msk [vmem:[#allocation2 + $0xe0] sm:$0xff] %vm1268, %v1176
    %1298 = vst.msk [vmem:[#allocation2 + $0xe8] sm:$0xff] %vm1268, %v1177
    %1299 = vst.msk [vmem:[#allocation2 + $0xf0] sm:$0xff] %vm1268, %v1178
    %1300 = vst.msk [vmem:[#allocation2 + $0xf8] sm:$0xff] %vm1268, %v1179
    %1301 = vst.msk [vmem:[#allocation2 + $0x100] sm:$0xff] %vm1268, %v1180
    %1302 = vst.msk [vmem:[#allocation2 + $0x108] sm:$0xff] %vm1268, %v1181
    %1303 = vst.msk [vmem:[#allocation2 + $0x110] sm:$0xff] %vm1268, %v1182
    %1304 = vst.msk [vmem:[#allocation2 + $0x118] sm:$0xff] %vm1268, %v1183
    %1305 = vst.msk [vmem:[#allocation2 + $0x120] sm:$0xff] %vm1268, %v1184
    %1306 = vst.msk [vmem:[#allocation2 + $0x128] sm:$0xff] %vm1268, %v1185
    %1307 = vst.msk [vmem:[#allocation2 + $0x130] sm:$0xff] %vm1268, %v1186
    %1308 = vst.msk [vmem:[#allocation2 + $0x138] sm:$0xff] %vm1268, %v1187
    %1309 = vst.msk [vmem:[#allocation2 + $0x140] sm:$0xff] %vm1268, %v1188
    %1310 = vst.msk [vmem:[#allocation2 + $0x148] sm:$0xff] %vm1268, %v1189
    %1311 = vst.msk [vmem:[#allocation2 + $0x150] sm:$0xff] %vm1268, %v1190
    %1312 = vst.msk [vmem:[#allocation2 + $0x158] sm:$0xff] %vm1268, %v1191
    %1313 = vst.msk [vmem:[#allocation2 + $0x160] sm:$0xff] %vm1268, %v1192
    %1314 = vst.msk [vmem:[#allocation2 + $0x168] sm:$0xff] %vm1268, %v1193
    %1315 = vst.msk [vmem:[#allocation2 + $0x170] sm:$0xff] %vm1268, %v1194
    %1316 = vst.msk [vmem:[#allocation2 + $0x178] sm:$0xff] %vm1268, %v1195
    %1317 = vst.msk [vmem:[#allocation2 + $0x180] sm:$0xff] %vm1268, %v1196
    %1318 = vst.msk [vmem:[#allocation2 + $0x188] sm:$0xff] %vm1268, %v1197
    %1319 = vst.msk [vmem:[#allocation2 + $0x190] sm:$0xff] %vm1268, %v1198
    %1320 = vst.msk [vmem:[#allocation2 + $0x198] sm:$0xff] %vm1268, %v1199
    %1321 = vst.msk [vmem:[#allocation2 + $0x1a0] sm:$0xff] %vm1268, %v1200
    %1322 = vst.msk [vmem:[#allocation2 + $0x1a8] sm:$0xff] %vm1268, %v1201
    %1323 = vst.msk [vmem:[#allocation2 + $0x1b0] sm:$0xff] %vm1268, %v1202
    %1324 = vst.msk [vmem:[#allocation2 + $0x1b8] sm:$0xff] %vm1268, %v1203
    %1325 = vst.msk [vmem:[#allocation2 + $0x1c0] sm:$0xff] %vm1268, %v1204
    %1326 = vst.msk [vmem:[#allocation2 + $0x1c8] sm:$0xff] %vm1268, %v1205
    %1327 = vst.msk [vmem:[#allocation2 + $0x1d0] sm:$0xff] %vm1268, %v1206
    %1328 = vst.msk [vmem:[#allocation2 + $0x1d8] sm:$0xff] %vm1268, %v1207
    %1329 = vst.msk [vmem:[#allocation2 + $0x1e0] sm:$0xff] %vm1268, %v1208
    %1330 = vst.msk [vmem:[#allocation2 + $0x1e8] sm:$0xff] %vm1268, %v1209
    %1331 = vst.msk [vmem:[#allocation2 + $0x1f0] sm:$0xff] %vm1268, %v1210
    %1332 = vst.msk [vmem:[#allocation2 + $0x1f8] sm:$0xff] %vm1268, %v1211
    %1333 = vst.msk [vmem:[#allocation2 + $0x200] sm:$0xff] %vm1268, %v1212
    %1334 = vst.msk [vmem:[#allocation2 + $0x208] sm:$0xff] %vm1268, %v1213
    %1335 = vst.msk [vmem:[#allocation2 + $0x210] sm:$0xff] %vm1268, %v1214
    %1336 = vst.msk [vmem:[#allocation2 + $0x218] sm:$0xff] %vm1268, %v1215
    %1337 = vst.msk [vmem:[#allocation2 + $0x220] sm:$0xff] %vm1268, %v1216
    %1338 = vst.msk [vmem:[#allocation2 + $0x228] sm:$0xff] %vm1268, %v1217
    %1339 = vst.msk [vmem:[#allocation2 + $0x230] sm:$0xff] %vm1268, %v1218
    %1340 = vst.msk [vmem:[#allocation2 + $0x238] sm:$0xff] %vm1268, %v1219
    %1341 = vst.msk [vmem:[#allocation2 + $0x240] sm:$0xff] %vm1268, %v1220
    %1342 = vst.msk [vmem:[#allocation2 + $0x248] sm:$0xff] %vm1268, %v1221
    %1343 = vst.msk [vmem:[#allocation2 + $0x250] sm:$0xff] %vm1268, %v1222
    %1344 = vst.msk [vmem:[#allocation2 + $0x258] sm:$0xff] %vm1268, %v1223
    %1345 = vst.msk [vmem:[#allocation2 + $0x260] sm:$0xff] %vm1268, %v1224
    %1346 = vst.msk [vmem:[#allocation2 + $0x268] sm:$0xff] %vm1268, %v1225
    %1347 = vst.msk [vmem:[#allocation2 + $0x270] sm:$0xff] %vm1268, %v1226
    %1348 = vst.msk [vmem:[#allocation2 + $0x278] sm:$0xff] %vm1268, %v1227
    %1349 = vst.msk [vmem:[#allocation2 + $0x280] sm:$0xff] %vm1268, %v1228
    %1350 = vst.msk [vmem:[#allocation2 + $0x288] sm:$0xff] %vm1268, %v1229
    %1351 = vst.msk [vmem:[#allocation2 + $0x290] sm:$0xff] %vm1268, %v1230
    %1352 = vst.msk [vmem:[#allocation2 + $0x298] sm:$0xff] %vm1268, %v1231
    %1353 = vst.msk [vmem:[#allocation2 + $0x2a0] sm:$0xff] %vm1268, %v1232
    %1354 = vst.msk [vmem:[#allocation2 + $0x2a8] sm:$0xff] %vm1268, %v1233
    %1355 = vst.msk [vmem:[#allocation2 + $0x2b0] sm:$0xff] %vm1268, %v1234
    %1356 = vst.msk [vmem:[#allocation2 + $0x2b8] sm:$0xff] %vm1268, %v1235
    %1357 = vst.msk [vmem:[#allocation2 + $0x2c0] sm:$0xff] %vm1268, %v1236
    %1358 = vst.msk [vmem:[#allocation2 + $0x2c8] sm:$0xff] %vm1268, %v1237
    %1359 = vst.msk [vmem:[#allocation2 + $0x2d0] sm:$0xff] %vm1268, %v1238
    %1360 = vst.msk [vmem:[#allocation2 + $0x2d8] sm:$0xff] %vm1268, %v1239
    %1361 = vst.msk [vmem:[#allocation2 + $0x2e0] sm:$0xff] %vm1268, %v1240
    %1362 = vst.msk [vmem:[#allocation2 + $0x2e8] sm:$0xff] %vm1268, %v1241
    %1363 = vst.msk [vmem:[#allocation2 + $0x2f0] sm:$0xff] %vm1268, %v1242
    %1364 = vst.msk [vmem:[#allocation2 + $0x2f8] sm:$0xff] %vm1268, %v1243
    %1365 = vst.msk [vmem:[#allocation2 + $0x300] sm:$0xff] %vm1268, %v1244
    %1366 = vst.msk [vmem:[#allocation2 + $0x308] sm:$0xff] %vm1268, %v1245
    %1367 = vst.msk [vmem:[#allocation2 + $0x310] sm:$0xff] %vm1268, %v1246
    %1368 = vst.msk [vmem:[#allocation2 + $0x318] sm:$0xff] %vm1268, %v1247
    %1369 = vst.msk [vmem:[#allocation2 + $0x320] sm:$0xff] %vm1268, %v1248
    %1370 = vst.msk [vmem:[#allocation2 + $0x328] sm:$0xff] %vm1268, %v1249
    %1371 = vst.msk [vmem:[#allocation2 + $0x330] sm:$0xff] %vm1268, %v1250
    %1372 = vst.msk [vmem:[#allocation2 + $0x338] sm:$0xff] %vm1268, %v1251
    %1373 = vst.msk [vmem:[#allocation2 + $0x340] sm:$0xff] %vm1268, %v1252
    %1374 = vst.msk [vmem:[#allocation2 + $0x348] sm:$0xff] %vm1268, %v1253
    %1375 = vst.msk [vmem:[#allocation2 + $0x350] sm:$0xff] %vm1268, %v1254
    %1376 = vst.msk [vmem:[#allocation2 + $0x358] sm:$0xff] %vm1268, %v1255
    %1377 = vst.msk [vmem:[#allocation2 + $0x360] sm:$0xff] %vm1268, %v1256
    %1378 = vst.msk [vmem:[#allocation2 + $0x368] sm:$0xff] %vm1268, %v1257
    %1379 = vst.msk [vmem:[#allocation2 + $0x370] sm:$0xff] %vm1268, %v1258
    %1380 = vst.msk [vmem:[#allocation2 + $0x378] sm:$0xff] %vm1268, %v1259
    %1381 = vst.msk [vmem:[#allocation2 + $0x380] sm:$0xff] %vm1268, %v1260
    %1382 = vst.msk [vmem:[#allocation2 + $0x388] sm:$0xff] %vm1268, %v1261
    %1383 = vst.msk [vmem:[#allocation2 + $0x390] sm:$0xff] %vm1268, %v1262
    %1384 = vst.msk [vmem:[#allocation2 + $0x398] sm:$0xff] %vm1268, %v1263
    %1385 = vst.msk [vmem:[#allocation2 + $0x3a0] sm:$0xff] %vm1268, %v1264
    %1386 = vst.msk [vmem:[#allocation2 + $0x3a8] sm:$0xff] %vm1268, %v1265
    %1387 = vst.msk [vmem:[#allocation2 + $0x3b0] sm:$0xff] %vm1268, %v1266
    %1388 = vst.msk [vmem:[#allocation2 + $0x3b8] sm:$0xff] %vm1268, %v1267
    %v1389 = vld [vmem:[#allocation2] ss:$5 sm:$0xff]
    %s1390 = scalar_lea.vmem [#allocation2], 40
    %v1391 = vld [vmem:[%s1390] ss:$5 sm:$0xff]
    %s1392 = scalar_lea.vmem [#allocation2], 80
    %v1393 = vld [vmem:[%s1392] ss:$5 sm:$0xff]
    %s1394 = scalar_lea.vmem [#allocation2], 120
    %v1395 = vld [vmem:[%s1394] ss:$5 sm:$0xff]
    %s1396 = scalar_lea.vmem [#allocation2], 160
    %v1397 = vld [vmem:[%s1396] ss:$5 sm:$0xff]
    %s1398 = scalar_lea.vmem [#allocation2], 200
    %v1399 = vld [vmem:[%s1398] ss:$5 sm:$0xff]
    %s1400 = scalar_lea.vmem [#allocation2], 240
    %v1401 = vld [vmem:[%s1400] ss:$5 sm:$0xff]
    %s1402 = scalar_lea.vmem [#allocation2], 280
    %v1403 = vld [vmem:[%s1402] ss:$5 sm:$0xff]
    %s1404 = scalar_lea.vmem [#allocation2], 320
    %v1405 = vld [vmem:[%s1404] ss:$5 sm:$0xff]
    %s1406 = scalar_lea.vmem [#allocation2], 360
    %v1407 = vld [vmem:[%s1406] ss:$5 sm:$0xff]
    %s1408 = scalar_lea.vmem [#allocation2], 400
    %v1409 = vld [vmem:[%s1408] ss:$5 sm:$0xff]
    %s1410 = scalar_lea.vmem [#allocation2], 440
    %v1411 = vld [vmem:[%s1410] ss:$5 sm:$0xff]
    %s1412 = scalar_lea.vmem [#allocation2], 480
    %v1413 = vld [vmem:[%s1412] ss:$5 sm:$0xff]
    %s1414 = scalar_lea.vmem [#allocation2], 520
    %v1415 = vld [vmem:[%s1414] ss:$5 sm:$0xff]
    %s1416 = scalar_lea.vmem [#allocation2], 560
    %v1417 = vld [vmem:[%s1416] ss:$5 sm:$0xff]
    %s1418 = scalar_lea.vmem [#allocation2], 600
    %v1419 = vld [vmem:[%s1418] ss:$5 sm:$0xff]
    %s1420 = scalar_lea.vmem [#allocation2], 640
    %v1421 = vld [vmem:[%s1420] ss:$5 sm:$0xff]
    %s1422 = scalar_lea.vmem [#allocation2], 680
    %v1423 = vld [vmem:[%s1422] ss:$5 sm:$0xff]
    %s1424 = scalar_lea.vmem [#allocation2], 720
    %v1425 = vld [vmem:[%s1424] ss:$5 sm:$0xff]
    %s1426 = scalar_lea.vmem [#allocation2], 760
    %v1427 = vld [vmem:[%s1426] ss:$5 sm:$0xff]
    %s1428 = scalar_lea.vmem [#allocation2], 800
    %v1429 = vld [vmem:[%s1428] ss:$5 sm:$0xff]
    %s1430 = scalar_lea.vmem [#allocation2], 840
    %v1431 = vld [vmem:[%s1430] ss:$5 sm:$0xff]
    %s1432 = scalar_lea.vmem [#allocation2], 880
    %v1433 = vld [vmem:[%s1432] ss:$5 sm:$0xff]
    %s1434 = scalar_lea.vmem [#allocation2], 920
    %v1435 = vld [vmem:[%s1434] ss:$5 sm:$0xff]
    %s1436 = scalar_lea.vmem [#allocation2], 1
    %v1437 = vld [vmem:[%s1436] ss:$5 sm:$0xff]
    %s1438 = scalar_lea.vmem [#allocation2], 41
    %v1439 = vld [vmem:[%s1438] ss:$5 sm:$0xff]
    %s1440 = scalar_lea.vmem [#allocation2], 81
    %v1441 = vld [vmem:[%s1440] ss:$5 sm:$0xff]
    %s1442 = scalar_lea.vmem [#allocation2], 121
    %v1443 = vld [vmem:[%s1442] ss:$5 sm:$0xff]
    %s1444 = scalar_lea.vmem [#allocation2], 161
    %v1445 = vld [vmem:[%s1444] ss:$5 sm:$0xff]
    %s1446 = scalar_lea.vmem [#allocation2], 201
    %v1447 = vld [vmem:[%s1446] ss:$5 sm:$0xff]
    %s1448 = scalar_lea.vmem [#allocation2], 241
    %v1449 = vld [vmem:[%s1448] ss:$5 sm:$0xff]
    %s1450 = scalar_lea.vmem [#allocation2], 281
    %v1451 = vld [vmem:[%s1450] ss:$5 sm:$0xff]
    %s1452 = scalar_lea.vmem [#allocation2], 321
    %v1453 = vld [vmem:[%s1452] ss:$5 sm:$0xff]
    %s1454 = scalar_lea.vmem [#allocation2], 361
    %v1455 = vld [vmem:[%s1454] ss:$5 sm:$0xff]
    %s1456 = scalar_lea.vmem [#allocation2], 401
    %v1457 = vld [vmem:[%s1456] ss:$5 sm:$0xff]
    %s1458 = scalar_lea.vmem [#allocation2], 441
    %v1459 = vld [vmem:[%s1458] ss:$5 sm:$0xff]
    %s1460 = scalar_lea.vmem [#allocation2], 481
    %v1461 = vld [vmem:[%s1460] ss:$5 sm:$0xff]
    %s1462 = scalar_lea.vmem [#allocation2], 521
    %v1463 = vld [vmem:[%s1462] ss:$5 sm:$0xff]
    %s1464 = scalar_lea.vmem [#allocation2], 561
    %v1465 = vld [vmem:[%s1464] ss:$5 sm:$0xff]
    %s1466 = scalar_lea.vmem [#allocation2], 601
    %v1467 = vld [vmem:[%s1466] ss:$5 sm:$0xff]
    %s1468 = scalar_lea.vmem [#allocation2], 641
    %v1469 = vld [vmem:[%s1468] ss:$5 sm:$0xff]
    %s1470 = scalar_lea.vmem [#allocation2], 681
    %v1471 = vld [vmem:[%s1470] ss:$5 sm:$0xff]
    %s1472 = scalar_lea.vmem [#allocation2], 721
    %v1473 = vld [vmem:[%s1472] ss:$5 sm:$0xff]
    %s1474 = scalar_lea.vmem [#allocation2], 761
    %v1475 = vld [vmem:[%s1474] ss:$5 sm:$0xff]
    %s1476 = scalar_lea.vmem [#allocation2], 801
    %v1477 = vld [vmem:[%s1476] ss:$5 sm:$0xff]
    %s1478 = scalar_lea.vmem [#allocation2], 841
    %v1479 = vld [vmem:[%s1478] ss:$5 sm:$0xff]
    %s1480 = scalar_lea.vmem [#allocation2], 881
    %v1481 = vld [vmem:[%s1480] ss:$5 sm:$0xff]
    %s1482 = scalar_lea.vmem [#allocation2], 921
    %v1483 = vld [vmem:[%s1482] ss:$5 sm:$0xff]
    %v1484 = vmax.f32 %v1389, %v1437
    %v1485 = vmax.f32 %v1391, %v1439
    %v1486 = vmax.f32 %v1393, %v1441
    %v1487 = vmax.f32 %v1395, %v1443
    %v1488 = vmax.f32 %v1397, %v1445
    %v1489 = vmax.f32 %v1399, %v1447
    %v1490 = vmax.f32 %v1401, %v1449
    %v1491 = vmax.f32 %v1403, %v1451
    %v1492 = vmax.f32 %v1405, %v1453
    %v1493 = vmax.f32 %v1407, %v1455
    %v1494 = vmax.f32 %v1409, %v1457
    %v1495 = vmax.f32 %v1411, %v1459
    %v1496 = vmax.f32 %v1413, %v1461
    %v1497 = vmax.f32 %v1415, %v1463
    %v1498 = vmax.f32 %v1417, %v1465
    %v1499 = vmax.f32 %v1419, %v1467
    %v1500 = vmax.f32 %v1421, %v1469
    %v1501 = vmax.f32 %v1423, %v1471
    %v1502 = vmax.f32 %v1425, %v1473
    %v1503 = vmax.f32 %v1427, %v1475
    %v1504 = vmax.f32 %v1429, %v1477
    %v1505 = vmax.f32 %v1431, %v1479
    %v1506 = vmax.f32 %v1433, %v1481
    %v1507 = vmax.f32 %v1435, %v1483
    %s1508 = scalar_lea.vmem [#allocation2], 2
    %v1509 = vld [vmem:[%s1508] ss:$5 sm:$0xff]
    %s1510 = scalar_lea.vmem [#allocation2], 42
    %v1511 = vld [vmem:[%s1510] ss:$5 sm:$0xff]
    %s1512 = scalar_lea.vmem [#allocation2], 82
    %v1513 = vld [vmem:[%s1512] ss:$5 sm:$0xff]
    %s1514 = scalar_lea.vmem [#allocation2], 122
    %v1515 = vld [vmem:[%s1514] ss:$5 sm:$0xff]
    %s1516 = scalar_lea.vmem [#allocation2], 162
    %v1517 = vld [vmem:[%s1516] ss:$5 sm:$0xff]
    %s1518 = scalar_lea.vmem [#allocation2], 202
    %v1519 = vld [vmem:[%s1518] ss:$5 sm:$0xff]
    %s1520 = scalar_lea.vmem [#allocation2], 242
    %v1521 = vld [vmem:[%s1520] ss:$5 sm:$0xff]
    %s1522 = scalar_lea.vmem [#allocation2], 282
    %v1523 = vld [vmem:[%s1522] ss:$5 sm:$0xff]
    %s1524 = scalar_lea.vmem [#allocation2], 322
    %v1525 = vld [vmem:[%s1524] ss:$5 sm:$0xff]
    %s1526 = scalar_lea.vmem [#allocation2], 362
    %v1527 = vld [vmem:[%s1526] ss:$5 sm:$0xff]
    %s1528 = scalar_lea.vmem [#allocation2], 402
    %v1529 = vld [vmem:[%s1528] ss:$5 sm:$0xff]
    %s1530 = scalar_lea.vmem [#allocation2], 442
    %v1531 = vld [vmem:[%s1530] ss:$5 sm:$0xff]
    %s1532 = scalar_lea.vmem [#allocation2], 482
    %v1533 = vld [vmem:[%s1532] ss:$5 sm:$0xff]
    %s1534 = scalar_lea.vmem [#allocation2], 522
    %v1535 = vld [vmem:[%s1534] ss:$5 sm:$0xff]
    %s1536 = scalar_lea.vmem [#allocation2], 562
    %v1537 = vld [vmem:[%s1536] ss:$5 sm:$0xff]
    %s1538 = scalar_lea.vmem [#allocation2], 602
    %v1539 = vld [vmem:[%s1538] ss:$5 sm:$0xff]
    %s1540 = scalar_lea.vmem [#allocation2], 642
    %v1541 = vld [vmem:[%s1540] ss:$5 sm:$0xff]
    %s1542 = scalar_lea.vmem [#allocation2], 682
    %v1543 = vld [vmem:[%s1542] ss:$5 sm:$0xff]
    %s1544 = scalar_lea.vmem [#allocation2], 722
    %v1545 = vld [vmem:[%s1544] ss:$5 sm:$0xff]
    %s1546 = scalar_lea.vmem [#allocation2], 762
    %v1547 = vld [vmem:[%s1546] ss:$5 sm:$0xff]
    %s1548 = scalar_lea.vmem [#allocation2], 802
    %v1549 = vld [vmem:[%s1548] ss:$5 sm:$0xff]
    %s1550 = scalar_lea.vmem [#allocation2], 842
    %v1551 = vld [vmem:[%s1550] ss:$5 sm:$0xff]
    %s1552 = scalar_lea.vmem [#allocation2], 882
    %v1553 = vld [vmem:[%s1552] ss:$5 sm:$0xff]
    %s1554 = scalar_lea.vmem [#allocation2], 922
    %v1555 = vld [vmem:[%s1554] ss:$5 sm:$0xff]
    %v1556 = vmax.f32 %v1484, %v1509
    %v1557 = vmax.f32 %v1485, %v1511
    %v1558 = vmax.f32 %v1486, %v1513
    %v1559 = vmax.f32 %v1487, %v1515
    %v1560 = vmax.f32 %v1488, %v1517
    %v1561 = vmax.f32 %v1489, %v1519
    %v1562 = vmax.f32 %v1490, %v1521
    %v1563 = vmax.f32 %v1491, %v1523
    %v1564 = vmax.f32 %v1492, %v1525
    %v1565 = vmax.f32 %v1493, %v1527
    %v1566 = vmax.f32 %v1494, %v1529
    %v1567 = vmax.f32 %v1495, %v1531
    %v1568 = vmax.f32 %v1496, %v1533
    %v1569 = vmax.f32 %v1497, %v1535
    %v1570 = vmax.f32 %v1498, %v1537
    %v1571 = vmax.f32 %v1499, %v1539
    %v1572 = vmax.f32 %v1500, %v1541
    %v1573 = vmax.f32 %v1501, %v1543
    %v1574 = vmax.f32 %v1502, %v1545
    %v1575 = vmax.f32 %v1503, %v1547
    %v1576 = vmax.f32 %v1504, %v1549
    %v1577 = vmax.f32 %v1505, %v1551
    %v1578 = vmax.f32 %v1506, %v1553
    %v1579 = vmax.f32 %v1507, %v1555
    %s1580 = scalar_lea.vmem [#allocation2], 3
    %v1581 = vld [vmem:[%s1580] ss:$5 sm:$0xff]
    %s1582 = scalar_lea.vmem [#allocation2], 43
    %v1583 = vld [vmem:[%s1582] ss:$5 sm:$0xff]
    %s1584 = scalar_lea.vmem [#allocation2], 83
    %v1585 = vld [vmem:[%s1584] ss:$5 sm:$0xff]
    %s1586 = scalar_lea.vmem [#allocation2], 123
    %v1587 = vld [vmem:[%s1586] ss:$5 sm:$0xff]
    %s1588 = scalar_lea.vmem [#allocation2], 163
    %v1589 = vld [vmem:[%s1588] ss:$5 sm:$0xff]
    %s1590 = scalar_lea.vmem [#allocation2], 203
    %v1591 = vld [vmem:[%s1590] ss:$5 sm:$0xff]
    %s1592 = scalar_lea.vmem [#allocation2], 243
    %v1593 = vld [vmem:[%s1592] ss:$5 sm:$0xff]
    %s1594 = scalar_lea.vmem [#allocation2], 283
    %v1595 = vld [vmem:[%s1594] ss:$5 sm:$0xff]
    %s1596 = scalar_lea.vmem [#allocation2], 323
    %v1597 = vld [vmem:[%s1596] ss:$5 sm:$0xff]
    %s1598 = scalar_lea.vmem [#allocation2], 363
    %v1599 = vld [vmem:[%s1598] ss:$5 sm:$0xff]
    %s1600 = scalar_lea.vmem [#allocation2], 403
    %v1601 = vld [vmem:[%s1600] ss:$5 sm:$0xff]
    %s1602 = scalar_lea.vmem [#allocation2], 443
    %v1603 = vld [vmem:[%s1602] ss:$5 sm:$0xff]
    %s1604 = scalar_lea.vmem [#allocation2], 483
    %v1605 = vld [vmem:[%s1604] ss:$5 sm:$0xff]
    %s1606 = scalar_lea.vmem [#allocation2], 523
    %v1607 = vld [vmem:[%s1606] ss:$5 sm:$0xff]
    %s1608 = scalar_lea.vmem [#allocation2], 563
    %v1609 = vld [vmem:[%s1608] ss:$5 sm:$0xff]
    %s1610 = scalar_lea.vmem [#allocation2], 603
    %v1611 = vld [vmem:[%s1610] ss:$5 sm:$0xff]
    %s1612 = scalar_lea.vmem [#allocation2], 643
    %v1613 = vld [vmem:[%s1612] ss:$5 sm:$0xff]
    %s1614 = scalar_lea.vmem [#allocation2], 683
    %v1615 = vld [vmem:[%s1614] ss:$5 sm:$0xff]
    %s1616 = scalar_lea.vmem [#allocation2], 723
    %v1617 = vld [vmem:[%s1616] ss:$5 sm:$0xff]
    %s1618 = scalar_lea.vmem [#allocation2], 763
    %v1619 = vld [vmem:[%s1618] ss:$5 sm:$0xff]
    %s1620 = scalar_lea.vmem [#allocation2], 803
    %v1621 = vld [vmem:[%s1620] ss:$5 sm:$0xff]
    %s1622 = scalar_lea.vmem [#allocation2], 843
    %v1623 = vld [vmem:[%s1622] ss:$5 sm:$0xff]
    %s1624 = scalar_lea.vmem [#allocation2], 883
    %v1625 = vld [vmem:[%s1624] ss:$5 sm:$0xff]
    %s1626 = scalar_lea.vmem [#allocation2], 923
    %v1627 = vld [vmem:[%s1626] ss:$5 sm:$0xff]
    %v1628 = vmax.f32 %v1556, %v1581
    %v1629 = vmax.f32 %v1557, %v1583
    %v1630 = vmax.f32 %v1558, %v1585
    %v1631 = vmax.f32 %v1559, %v1587
    %v1632 = vmax.f32 %v1560, %v1589
    %v1633 = vmax.f32 %v1561, %v1591
    %v1634 = vmax.f32 %v1562, %v1593
    %v1635 = vmax.f32 %v1563, %v1595
    %v1636 = vmax.f32 %v1564, %v1597
    %v1637 = vmax.f32 %v1565, %v1599
    %v1638 = vmax.f32 %v1566, %v1601
    %v1639 = vmax.f32 %v1567, %v1603
    %v1640 = vmax.f32 %v1568, %v1605
    %v1641 = vmax.f32 %v1569, %v1607
    %v1642 = vmax.f32 %v1570, %v1609
    %v1643 = vmax.f32 %v1571, %v1611
    %v1644 = vmax.f32 %v1572, %v1613
    %v1645 = vmax.f32 %v1573, %v1615
    %v1646 = vmax.f32 %v1574, %v1617
    %v1647 = vmax.f32 %v1575, %v1619
    %v1648 = vmax.f32 %v1576, %v1621
    %v1649 = vmax.f32 %v1577, %v1623
    %v1650 = vmax.f32 %v1578, %v1625
    %v1651 = vmax.f32 %v1579, %v1627
    %s1652 = scalar_lea.vmem [#allocation2], 4
    %v1653 = vld [vmem:[%s1652] ss:$5 sm:$0xff]
    %s1654 = scalar_lea.vmem [#allocation2], 44
    %v1655 = vld [vmem:[%s1654] ss:$5 sm:$0xff]
    %s1656 = scalar_lea.vmem [#allocation2], 84
    %v1657 = vld [vmem:[%s1656] ss:$5 sm:$0xff]
    %s1658 = scalar_lea.vmem [#allocation2], 124
    %v1659 = vld [vmem:[%s1658] ss:$5 sm:$0xff]
    %s1660 = scalar_lea.vmem [#allocation2], 164
    %v1661 = vld [vmem:[%s1660] ss:$5 sm:$0xff]
    %s1662 = scalar_lea.vmem [#allocation2], 204
    %v1663 = vld [vmem:[%s1662] ss:$5 sm:$0xff]
    %s1664 = scalar_lea.vmem [#allocation2], 244
    %v1665 = vld [vmem:[%s1664] ss:$5 sm:$0xff]
    %s1666 = scalar_lea.vmem [#allocation2], 284
    %v1667 = vld [vmem:[%s1666] ss:$5 sm:$0xff]
    %s1668 = scalar_lea.vmem [#allocation2], 324
    %v1669 = vld [vmem:[%s1668] ss:$5 sm:$0xff]
    %s1670 = scalar_lea.vmem [#allocation2], 364
    %v1671 = vld [vmem:[%s1670] ss:$5 sm:$0xff]
    %s1672 = scalar_lea.vmem [#allocation2], 404
    %v1673 = vld [vmem:[%s1672] ss:$5 sm:$0xff]
    %s1674 = scalar_lea.vmem [#allocation2], 444
    %v1675 = vld [vmem:[%s1674] ss:$5 sm:$0xff]
    %s1676 = scalar_lea.vmem [#allocation2], 484
    %v1677 = vld [vmem:[%s1676] ss:$5 sm:$0xff]
    %s1678 = scalar_lea.vmem [#allocation2], 524
    %v1679 = vld [vmem:[%s1678] ss:$5 sm:$0xff]
    %s1680 = scalar_lea.vmem [#allocation2], 564
    %v1681 = vld [vmem:[%s1680] ss:$5 sm:$0xff]
    %s1682 = scalar_lea.vmem [#allocation2], 604
    %v1683 = vld [vmem:[%s1682] ss:$5 sm:$0xff]
    %s1684 = scalar_lea.vmem [#allocation2], 644
    %v1685 = vld [vmem:[%s1684] ss:$5 sm:$0xff]
    %s1686 = scalar_lea.vmem [#allocation2], 684
    %v1687 = vld [vmem:[%s1686] ss:$5 sm:$0xff]
    %s1688 = scalar_lea.vmem [#allocation2], 724
    %v1689 = vld [vmem:[%s1688] ss:$5 sm:$0xff]
    %s1690 = scalar_lea.vmem [#allocation2], 764
    %v1691 = vld [vmem:[%s1690] ss:$5 sm:$0xff]
    %s1692 = scalar_lea.vmem [#allocation2], 804
    %v1693 = vld [vmem:[%s1692] ss:$5 sm:$0xff]
    %s1694 = scalar_lea.vmem [#allocation2], 844
    %v1695 = vld [vmem:[%s1694] ss:$5 sm:$0xff]
    %s1696 = scalar_lea.vmem [#allocation2], 884
    %v1697 = vld [vmem:[%s1696] ss:$5 sm:$0xff]
    %s1698 = scalar_lea.vmem [#allocation2], 924
    %v1699 = vld [vmem:[%s1698] ss:$5 sm:$0xff]
    %v1700 = vmax.f32 %v1628, %v1653
    %v1701 = vmax.f32 %v1629, %v1655
    %v1702 = vmax.f32 %v1630, %v1657
    %v1703 = vmax.f32 %v1631, %v1659
    %v1704 = vmax.f32 %v1632, %v1661
    %v1705 = vmax.f32 %v1633, %v1663
    %v1706 = vmax.f32 %v1634, %v1665
    %v1707 = vmax.f32 %v1635, %v1667
    %v1708 = vmax.f32 %v1636, %v1669
    %v1709 = vmax.f32 %v1637, %v1671
    %v1710 = vmax.f32 %v1638, %v1673
    %v1711 = vmax.f32 %v1639, %v1675
    %v1712 = vmax.f32 %v1640, %v1677
    %v1713 = vmax.f32 %v1641, %v1679
    %v1714 = vmax.f32 %v1642, %v1681
    %v1715 = vmax.f32 %v1643, %v1683
    %v1716 = vmax.f32 %v1644, %v1685
    %v1717 = vmax.f32 %v1645, %v1687
    %v1718 = vmax.f32 %v1646, %v1689
    %v1719 = vmax.f32 %v1647, %v1691
    %v1720 = vmax.f32 %v1648, %v1693
    %v1721 = vmax.f32 %v1649, %v1695
    %v1722 = vmax.f32 %v1650, %v1697
    %v1723 = vmax.f32 %v1651, %v1699
    %1724 = vst.msk [vmem:[#allocation3 + $0x2] sm:$0xff] %vm1268, %v1700
    %1725 = vst.msk [vmem:[#allocation3 + $0xa] sm:$0xff] %vm1268, %v1701
    %1726 = vst.msk [vmem:[#allocation3 + $0x12] sm:$0xff] %vm1268, %v1702
    %1727 = vst.msk [vmem:[#allocation3 + $0x22] sm:$0xff] %vm1268, %v1703
    %1728 = vst.msk [vmem:[#allocation3 + $0x2a] sm:$0xff] %vm1268, %v1704
    %1729 = vst.msk [vmem:[#allocation3 + $0x32] sm:$0xff] %vm1268, %v1705
    %1730 = vst.msk [vmem:[#allocation3 + $0x42] sm:$0xff] %vm1268, %v1706
    %1731 = vst.msk [vmem:[#allocation3 + $0x4a] sm:$0xff] %vm1268, %v1707
    %1732 = vst.msk [vmem:[#allocation3 + $0x52] sm:$0xff] %vm1268, %v1708
    %1733 = vst.msk [vmem:[#allocation3 + $0x62] sm:$0xff] %vm1268, %v1709
    %1734 = vst.msk [vmem:[#allocation3 + $0x6a] sm:$0xff] %vm1268, %v1710
    %1735 = vst.msk [vmem:[#allocation3 + $0x72] sm:$0xff] %vm1268, %v1711
    %1736 = vst.msk [vmem:[#allocation3 + $0x82] sm:$0xff] %vm1268, %v1712
    %1737 = vst.msk [vmem:[#allocation3 + $0x8a] sm:$0xff] %vm1268, %v1713
    %1738 = vst.msk [vmem:[#allocation3 + $0x92] sm:$0xff] %vm1268, %v1714
    %1739 = vst.msk [vmem:[#allocation3 + $0xa2] sm:$0xff] %vm1268, %v1715
    %1740 = vst.msk [vmem:[#allocation3 + $0xaa] sm:$0xff] %vm1268, %v1716
    %1741 = vst.msk [vmem:[#allocation3 + $0xb2] sm:$0xff] %vm1268, %v1717
    %1742 = vst.msk [vmem:[#allocation3 + $0xc2] sm:$0xff] %vm1268, %v1718
    %1743 = vst.msk [vmem:[#allocation3 + $0xca] sm:$0xff] %vm1268, %v1719
    %1744 = vst.msk [vmem:[#allocation3 + $0xd2] sm:$0xff] %vm1268, %v1720
    %1745 = vst.msk [vmem:[#allocation3 + $0xe2] sm:$0xff] %vm1268, %v1721
    %1746 = vst.msk [vmem:[#allocation3 + $0xea] sm:$0xff] %vm1268, %v1722
    %1747 = vst.msk [vmem:[#allocation3 + $0xf2] sm:$0xff] %vm1268, %v1723
    %v1748 = vld [vmem:[#allocation3] sm:$0xff]
    %v1749 = vld [vmem:[#allocation3 + $0x8] sm:$0xff]
    %v1750 = vld [vmem:[#allocation3 + $0x10] sm:$0xff]
    %v1751 = vld [vmem:[#allocation3 + $0x20] sm:$0xff]
    %v1752 = vld [vmem:[#allocation3 + $0x28] sm:$0xff]
    %v1753 = vld [vmem:[#allocation3 + $0x30] sm:$0xff]
    %v1754 = vld [vmem:[#allocation3 + $0x40] sm:$0xff]
    %v1755 = vld [vmem:[#allocation3 + $0x48] sm:$0xff]
    %v1756 = vld [vmem:[#allocation3 + $0x50] sm:$0xff]
    %v1757 = vld [vmem:[#allocation3 + $0x60] sm:$0xff]
    %v1758 = vld [vmem:[#allocation3 + $0x68] sm:$0xff]
    %v1759 = vld [vmem:[#allocation3 + $0x70] sm:$0xff]
    %v1760 = vld [vmem:[#allocation3 + $0x80] sm:$0xff]
    %v1761 = vld [vmem:[#allocation3 + $0x88] sm:$0xff]
    %v1762 = vld [vmem:[#allocation3 + $0x90] sm:$0xff]
    %v1763 = vld [vmem:[#allocation3 + $0xa0] sm:$0xff]
    %v1764 = vld [vmem:[#allocation3 + $0xa8] sm:$0xff]
    %v1765 = vld [vmem:[#allocation3 + $0xb0] sm:$0xff]
    %v1766 = vld [vmem:[#allocation3 + $0xc0] sm:$0xff]
    %v1767 = vld [vmem:[#allocation3 + $0xc8] sm:$0xff]
    %v1768 = vld [vmem:[#allocation3 + $0xd0] sm:$0xff]
    %v1769 = vld [vmem:[#allocation3 + $0xe0] sm:$0xff]
    %v1770 = vld [vmem:[#allocation3 + $0xe8] sm:$0xff]
    %v1771 = vld [vmem:[#allocation3 + $0xf0] sm:$0xff]
    %v1772 = vld [vmem:[#allocation9] sm:$0xff]
    %v1773 = vld [vmem:[#allocation9 + $0x8] sm:$0xff]
    %v1774 = vld [vmem:[#allocation9 + $0x10] sm:$0xff]
    %v1775 = vld [vmem:[#allocation9 + $0x18] sm:$0xff]
    %v1776 = vld [vmem:[#allocation3 + $0x1] sm:$0xff]
    %v1777 = vld [vmem:[#allocation3 + $0x9] sm:$0xff]
    %v1778 = vld [vmem:[#allocation3 + $0x11] sm:$0xff]
    %v1779 = vld [vmem:[#allocation3 + $0x21] sm:$0xff]
    %v1780 = vld [vmem:[#allocation3 + $0x29] sm:$0xff]
    %v1781 = vld [vmem:[#allocation3 + $0x31] sm:$0xff]
    %v1782 = vld [vmem:[#allocation3 + $0x41] sm:$0xff]
    %v1783 = vld [vmem:[#allocation3 + $0x49] sm:$0xff]
    %v1784 = vld [vmem:[#allocation3 + $0x51] sm:$0xff]
    %v1785 = vld [vmem:[#allocation3 + $0x61] sm:$0xff]
    %v1786 = vld [vmem:[#allocation3 + $0x69] sm:$0xff]
    %v1787 = vld [vmem:[#allocation3 + $0x71] sm:$0xff]
    %v1788 = vld [vmem:[#allocation3 + $0x81] sm:$0xff]
    %v1789 = vld [vmem:[#allocation3 + $0x89] sm:$0xff]
    %v1790 = vld [vmem:[#allocation3 + $0x91] sm:$0xff]
    %v1791 = vld [vmem:[#allocation3 + $0xa1] sm:$0xff]
    %v1792 = vld [vmem:[#allocation3 + $0xa9] sm:$0xff]
    %v1793 = vld [vmem:[#allocation3 + $0xb1] sm:$0xff]
    %v1794 = vld [vmem:[#allocation3 + $0xc1] sm:$0xff]
    %v1795 = vld [vmem:[#allocation3 + $0xc9] sm:$0xff]
    %v1796 = vld [vmem:[#allocation3 + $0xd1] sm:$0xff]
    %v1797 = vld [vmem:[#allocation3 + $0xe1] sm:$0xff]
    %v1798 = vld [vmem:[#allocation3 + $0xe9] sm:$0xff]
    %v1799 = vld [vmem:[#allocation3 + $0xf1] sm:$0xff]
    %s1800 = scalar_lea.vmem [#allocation9], 32
    %v1801 = vld [vmem:[%s1800] sm:$0xff]
    %v1802 = vld [vmem:[%s1800 + $0x8] sm:$0xff]
    %v1803 = vld [vmem:[%s1800 + $0x10] sm:$0xff]
    %v1804 = vld [vmem:[%s1800 + $0x18] sm:$0xff]
    %v1806 = vsel %vm1268, %v1776, 0
    %v1809 = vsel %vm1268, %v1777, 0
    %v1812 = vsel %vm1268, %v1778, 0
    %v1815 = vsel %vm1268, %v1779, 0
    %v1818 = vsel %vm1268, %v1780, 0
    %v1821 = vsel %vm1268, %v1781, 0
    %v1824 = vsel %vm1268, %v1782, 0
    %v1827 = vsel %vm1268, %v1783, 0
    %v1830 = vsel %vm1268, %v1784, 0
    %v1833 = vsel %vm1268, %v1785, 0
    %v1836 = vsel %vm1268, %v1786, 0
    %v1839 = vsel %vm1268, %v1787, 0
    %v1842 = vsel %vm1268, %v1788, 0
    %v1845 = vsel %vm1268, %v1789, 0
    %v1848 = vsel %vm1268, %v1790, 0
    %v1851 = vsel %vm1268, %v1791, 0
    %v1854 = vsel %vm1268, %v1792, 0
    %v1857 = vsel %vm1268, %v1793, 0
    %v1860 = vsel %vm1268, %v1794, 0
    %v1863 = vsel %vm1268, %v1795, 0
    %v1866 = vsel %vm1268, %v1796, 0
    %v1869 = vsel %vm1268, %v1797, 0
    %v1872 = vsel %vm1268, %v1798, 0
    %v1875 = vsel %vm1268, %v1799, 0
    %1877 = vmatprep.subr.mxu0 0.0
    %1878 = vmatpush1.msra.mxu0 0.0
    %1879 = vmatprep.subr.mxu0 0.0
    %1880 = vmatpush1.msra.mxu0 0.0
    %1881 = vmatprep.subr.mxu0 0.0
    %1882 = vmatpush1.msra.mxu0 0.0
    %1883 = vmatprep.subr.mxu0 0.0
    %1884 = vmatpush1.msra.mxu0 0.0
    %1885 = vmatprep.subr.mxu0 0.0
    %1886 = vmatpush1.msra.mxu0 0.0
    %1887 = vmatprep.subr.mxu0 0.0
    %1888 = vmatpush1.msra.mxu0 0.0
    %1889 = vmatprep.subr.mxu0 0.0
    %1890 = vmatpush1.msra.mxu0 0.0
    %1891 = vmatprep.subr.mxu0 0.0
    %1892 = vmatpush1.msra.mxu0 0.0
    %1893 = vmatprep.subr.mxu0 0.0
    %1894 = vmatpush1.msra.mxu0 0.0
    %1895 = vmatprep.subr.mxu0 0.0
    %1896 = vmatpush1.msra.mxu0 0.0
    %1897 = vmatprep.subr.mxu0 0.0
    %1898 = vmatpush1.msra.mxu0 0.0
    %1899 = vmatprep.subr.mxu0 0.0
    %1900 = vmatpush1.msra.mxu0 0.0
    %1901 = vmatprep.subr.mxu0 0.0
    %1902 = vmatpush1.msra.mxu0 %v1804
    %1903 = vmatprep.subr.mxu0 0.0
    %1904 = vmatpush1.msra.mxu0 %v1803
    %1905 = vmatprep.subr.mxu0 0.0
    %1906 = vmatpush1.msra.mxu0 %v1802
    %1907 = vmatprep.subr.mxu0 0.0
    %1908 = vmatpush1.msra.mxu0 %v1801
    %1909 = vmatprep.subr.mxu0 0.0
    %1910 = vmatpush2.msra.mxu0 0.0
    %1911 = vmatprep.subr.mxu0 0.0
    %1912 = vmatpush2.msra.mxu0 0.0
    %1913 = vmatprep.subr.mxu0 0.0
    %1914 = vmatpush2.msra.mxu0 0.0
    %1915 = vmatprep.subr.mxu0 0.0
    %1916 = vmatpush2.msra.mxu0 0.0
    %1917 = vmatprep.subr.mxu0 0.0
    %1918 = vmatpush2.msra.mxu0 0.0
    %1919 = vmatprep.subr.mxu0 0.0
    %1920 = vmatpush2.msra.mxu0 0.0
    %1921 = vmatprep.subr.mxu0 0.0
    %1922 = vmatpush2.msra.mxu0 0.0
    %1923 = vmatprep.subr.mxu0 0.0
    %1924 = vmatpush2.msra.mxu0 0.0
    %1925 = vmatprep.subr.mxu0 0.0
    %1926 = vmatpush2.msra.mxu0 0.0
    %1927 = vmatprep.subr.mxu0 0.0
    %1928 = vmatpush2.msra.mxu0 0.0
    %1929 = vmatprep.subr.mxu0 0.0
    %1930 = vmatpush2.msra.mxu0 0.0
    %1931 = vmatprep.subr.mxu0 0.0
    %1932 = vmatpush2.msra.mxu0 0.0
    %1933 = vmatprep.subr.mxu0 0.0
    %1934 = vmatpush2.msra.mxu0 0.0
    %1935 = vmatprep.subr.mxu0 0.0
    %1936 = vmatpush2.msra.mxu0 0.0
    %1937 = vmatprep.subr.mxu0 0.0
    %1938 = vmatpush2.msra.mxu0 0.0
    %1939 = vmatprep.subr.mxu0 0.0
    %1940 = vmatpush2.msra.mxu0 0.0
    %1941 = vmatprep.mubr.f32.mxu0 0.0
    %1942 = vmatmul.mubr.f32.gmra.mxu0 %v1806
    %v1943 = vpop.f32.mrf.mxu0
    %v1944 = vadd.f32 0.0, %v1943
    %v1945 = vpop.f32.mrf.mxu0
    %1946 = vmatprep.mubr.f32.mxu0 0.0
    %1947 = vmatmul.mubr.f32.gmra.mxu0 %v1809
    %v1948 = vpop.f32.mrf.mxu0
    %v1949 = vadd.f32 0.0, %v1948
    %v1950 = vpop.f32.mrf.mxu0
    %1951 = vmatprep.mubr.f32.mxu0 0.0
    %1952 = vmatmul.mubr.f32.gmra.mxu0 %v1812
    %v1953 = vpop.f32.mrf.mxu0
    %v1954 = vadd.f32 0.0, %v1953
    %v1955 = vpop.f32.mrf.mxu0
    %1956 = vmatprep.mubr.f32.mxu0 0.0
    %1957 = vmatmul.mubr.f32.gmra.mxu0 %v1815
    %v1958 = vpop.f32.mrf.mxu0
    %v1959 = vadd.f32 0.0, %v1958
    %v1960 = vpop.f32.mrf.mxu0
    %1961 = vmatprep.mubr.f32.mxu0 0.0
    %1962 = vmatmul.mubr.f32.gmra.mxu0 %v1818
    %v1963 = vpop.f32.mrf.mxu0
    %v1964 = vadd.f32 0.0, %v1963
    %v1965 = vpop.f32.mrf.mxu0
    %1966 = vmatprep.mubr.f32.mxu0 0.0
    %1967 = vmatmul.mubr.f32.gmra.mxu0 %v1821
    %v1968 = vpop.f32.mrf.mxu0
    %v1969 = vadd.f32 0.0, %v1968
    %v1970 = vpop.f32.mrf.mxu0
    %1971 = vmatprep.mubr.f32.mxu0 0.0
    %1972 = vmatmul.mubr.f32.gmra.mxu0 %v1824
    %v1973 = vpop.f32.mrf.mxu0
    %v1974 = vadd.f32 0.0, %v1973
    %v1975 = vpop.f32.mrf.mxu0
    %1976 = vmatprep.mubr.f32.mxu0 0.0
    %1977 = vmatmul.mubr.f32.gmra.mxu0 %v1827
    %v1978 = vpop.f32.mrf.mxu0
    %v1979 = vadd.f32 0.0, %v1978
    %v1980 = vpop.f32.mrf.mxu0
    %1981 = vmatprep.mubr.f32.mxu0 0.0
    %1982 = vmatmul.mubr.f32.gmra.mxu0 %v1830
    %v1983 = vpop.f32.mrf.mxu0
    %v1984 = vadd.f32 0.0, %v1983
    %v1985 = vpop.f32.mrf.mxu0
    %1986 = vmatprep.mubr.f32.mxu0 0.0
    %1987 = vmatmul.mubr.f32.gmra.mxu0 %v1833
    %v1988 = vpop.f32.mrf.mxu0
    %v1989 = vadd.f32 0.0, %v1988
    %v1990 = vpop.f32.mrf.mxu0
    %1991 = vmatprep.mubr.f32.mxu0 0.0
    %1992 = vmatmul.mubr.f32.gmra.mxu0 %v1836
    %v1993 = vpop.f32.mrf.mxu0
    %v1994 = vadd.f32 0.0, %v1993
    %v1995 = vpop.f32.mrf.mxu0
    %1996 = vmatprep.mubr.f32.mxu0 0.0
    %1997 = vmatmul.mubr.f32.gmra.mxu0 %v1839
    %v1998 = vpop.f32.mrf.mxu0
    %v1999 = vadd.f32 0.0, %v1998
    %v2000 = vpop.f32.mrf.mxu0
    %2001 = vmatprep.mubr.f32.mxu0 0.0
    %2002 = vmatmul.mubr.f32.gmra.mxu0 %v1842
    %v2003 = vpop.f32.mrf.mxu0
    %v2004 = vadd.f32 0.0, %v2003
    %v2005 = vpop.f32.mrf.mxu0
    %2006 = vmatprep.mubr.f32.mxu0 0.0
    %2007 = vmatmul.mubr.f32.gmra.mxu0 %v1845
    %v2008 = vpop.f32.mrf.mxu0
    %v2009 = vadd.f32 0.0, %v2008
    %v2010 = vpop.f32.mrf.mxu0
    %2011 = vmatprep.mubr.f32.mxu0 0.0
    %2012 = vmatmul.mubr.f32.gmra.mxu0 %v1848
    %v2013 = vpop.f32.mrf.mxu0
    %v2014 = vadd.f32 0.0, %v2013
    %v2015 = vpop.f32.mrf.mxu0
    %2016 = vmatprep.mubr.f32.mxu0 0.0
    %2017 = vmatmul.mubr.f32.gmra.mxu0 %v1851
    %v2018 = vpop.f32.mrf.mxu0
    %v2019 = vadd.f32 0.0, %v2018
    %v2020 = vpop.f32.mrf.mxu0
    %2021 = vmatprep.mubr.f32.mxu0 0.0
    %2022 = vmatmul.mubr.f32.gmra.mxu0 %v1854
    %v2023 = vpop.f32.mrf.mxu0
    %v2024 = vadd.f32 0.0, %v2023
    %v2025 = vpop.f32.mrf.mxu0
    %2026 = vmatprep.mubr.f32.mxu0 0.0
    %2027 = vmatmul.mubr.f32.gmra.mxu0 %v1857
    %v2028 = vpop.f32.mrf.mxu0
    %v2029 = vadd.f32 0.0, %v2028
    %v2030 = vpop.f32.mrf.mxu0
    %2031 = vmatprep.mubr.f32.mxu0 0.0
    %2032 = vmatmul.mubr.f32.gmra.mxu0 %v1860
    %v2033 = vpop.f32.mrf.mxu0
    %v2034 = vadd.f32 0.0, %v2033
    %v2035 = vpop.f32.mrf.mxu0
    %2036 = vmatprep.mubr.f32.mxu0 0.0
    %2037 = vmatmul.mubr.f32.gmra.mxu0 %v1863
    %v2038 = vpop.f32.mrf.mxu0
    %v2039 = vadd.f32 0.0, %v2038
    %v2040 = vpop.f32.mrf.mxu0
    %2041 = vmatprep.mubr.f32.mxu0 0.0
    %2042 = vmatmul.mubr.f32.gmra.mxu0 %v1866
    %v2043 = vpop.f32.mrf.mxu0
    %v2044 = vadd.f32 0.0, %v2043
    %v2045 = vpop.f32.mrf.mxu0
    %2046 = vmatprep.mubr.f32.mxu0 0.0
    %2047 = vmatmul.mubr.f32.gmra.mxu0 %v1869
    %v2048 = vpop.f32.mrf.mxu0
    %v2049 = vadd.f32 0.0, %v2048
    %v2050 = vpop.f32.mrf.mxu0
    %2051 = vmatprep.mubr.f32.mxu0 0.0
    %2052 = vmatmul.mubr.f32.gmra.mxu0 %v1872
    %v2053 = vpop.f32.mrf.mxu0
    %v2054 = vadd.f32 0.0, %v2053
    %v2055 = vpop.f32.mrf.mxu0
    %2056 = vmatprep.mubr.f32.mxu0 0.0
    %2057 = vmatmul.mubr.f32.gmra.mxu0 %v1875
    %v2058 = vpop.f32.mrf.mxu0
    %v2059 = vadd.f32 0.0, %v2058
    %v2060 = vpop.f32.mrf.mxu0
    %2061 = vdwg.mxu0
    %v2063 = vsel %vm1268, %v1748, 0
    %v2066 = vsel %vm1268, %v1749, 0
    %v2069 = vsel %vm1268, %v1750, 0
    %v2072 = vsel %vm1268, %v1751, 0
    %v2075 = vsel %vm1268, %v1752, 0
    %v2078 = vsel %vm1268, %v1753, 0
    %v2081 = vsel %vm1268, %v1754, 0
    %v2084 = vsel %vm1268, %v1755, 0
    %v2087 = vsel %vm1268, %v1756, 0
    %v2090 = vsel %vm1268, %v1757, 0
    %v2093 = vsel %vm1268, %v1758, 0
    %v2096 = vsel %vm1268, %v1759, 0
    %v2099 = vsel %vm1268, %v1760, 0
    %v2102 = vsel %vm1268, %v1761, 0
    %v2105 = vsel %vm1268, %v1762, 0
    %v2108 = vsel %vm1268, %v1763, 0
    %v2111 = vsel %vm1268, %v1764, 0
    %v2114 = vsel %vm1268, %v1765, 0
    %v2117 = vsel %vm1268, %v1766, 0
    %v2120 = vsel %vm1268, %v1767, 0
    %v2123 = vsel %vm1268, %v1768, 0
    %v2126 = vsel %vm1268, %v1769, 0
    %v2129 = vsel %vm1268, %v1770, 0
    %v2132 = vsel %vm1268, %v1771, 0
    %2134 = vmatprep.subr.mxu0 0.0
    %2135 = vmatpush1.msra.mxu0 0.0
    %2136 = vmatprep.subr.mxu0 0.0
    %2137 = vmatpush1.msra.mxu0 0.0
    %2138 = vmatprep.subr.mxu0 0.0
    %2139 = vmatpush1.msra.mxu0 0.0
    %2140 = vmatprep.subr.mxu0 0.0
    %2141 = vmatpush1.msra.mxu0 0.0
    %2142 = vmatprep.subr.mxu0 0.0
    %2143 = vmatpush1.msra.mxu0 0.0
    %2144 = vmatprep.subr.mxu0 0.0
    %2145 = vmatpush1.msra.mxu0 0.0
    %2146 = vmatprep.subr.mxu0 0.0
    %2147 = vmatpush1.msra.mxu0 0.0
    %2148 = vmatprep.subr.mxu0 0.0
    %2149 = vmatpush1.msra.mxu0 0.0
    %2150 = vmatprep.subr.mxu0 0.0
    %2151 = vmatpush1.msra.mxu0 0.0
    %2152 = vmatprep.subr.mxu0 0.0
    %2153 = vmatpush1.msra.mxu0 0.0
    %2154 = vmatprep.subr.mxu0 0.0
    %2155 = vmatpush1.msra.mxu0 0.0
    %2156 = vmatprep.subr.mxu0 0.0
    %2157 = vmatpush1.msra.mxu0 0.0
    %2158 = vmatprep.subr.mxu0 0.0
    %2159 = vmatpush1.msra.mxu0 %v1775
    %2160 = vmatprep.subr.mxu0 0.0
    %2161 = vmatpush1.msra.mxu0 %v1774
    %2162 = vmatprep.subr.mxu0 0.0
    %2163 = vmatpush1.msra.mxu0 %v1773
    %2164 = vmatprep.subr.mxu0 0.0
    %2165 = vmatpush1.msra.mxu0 %v1772
    %2166 = vmatprep.subr.mxu0 0.0
    %2167 = vmatpush2.msra.mxu0 0.0
    %2168 = vmatprep.subr.mxu0 0.0
    %2169 = vmatpush2.msra.mxu0 0.0
    %2170 = vmatprep.subr.mxu0 0.0
    %2171 = vmatpush2.msra.mxu0 0.0
    %2172 = vmatprep.subr.mxu0 0.0
    %2173 = vmatpush2.msra.mxu0 0.0
    %2174 = vmatprep.subr.mxu0 0.0
    %2175 = vmatpush2.msra.mxu0 0.0
    %2176 = vmatprep.subr.mxu0 0.0
    %2177 = vmatpush2.msra.mxu0 0.0
    %2178 = vmatprep.subr.mxu0 0.0
    %2179 = vmatpush2.msra.mxu0 0.0
    %2180 = vmatprep.subr.mxu0 0.0
    %2181 = vmatpush2.msra.mxu0 0.0
    %2182 = vmatprep.subr.mxu0 0.0
    %2183 = vmatpush2.msra.mxu0 0.0
    %2184 = vmatprep.subr.mxu0 0.0
    %2185 = vmatpush2.msra.mxu0 0.0
    %2186 = vmatprep.subr.mxu0 0.0
    %2187 = vmatpush2.msra.mxu0 0.0
    %2188 = vmatprep.subr.mxu0 0.0
    %2189 = vmatpush2.msra.mxu0 0.0
    %2190 = vmatprep.subr.mxu0 0.0
    %2191 = vmatpush2.msra.mxu0 0.0
    %2192 = vmatprep.subr.mxu0 0.0
    %2193 = vmatpush2.msra.mxu0 0.0
    %2194 = vmatprep.subr.mxu0 0.0
    %2195 = vmatpush2.msra.mxu0 0.0
    %2196 = vmatprep.subr.mxu0 0.0
    %2197 = vmatpush2.msra.mxu0 0.0
    %2198 = vmatprep.mubr.f32.mxu0 0.0
    %2199 = vmatmul.mubr.f32.gmra.mxu0 %v2063
    %v2200 = vpop.f32.mrf.mxu0
    %v2201 = vadd.f32 %v1944, %v2200
    %v2202 = vpop.f32.mrf.mxu0
    %2203 = vmatprep.mubr.f32.mxu0 0.0
    %2204 = vmatmul.mubr.f32.gmra.mxu0 %v2066
    %v2205 = vpop.f32.mrf.mxu0
    %v2206 = vadd.f32 %v1949, %v2205
    %v2207 = vpop.f32.mrf.mxu0
    %2208 = vmatprep.mubr.f32.mxu0 0.0
    %2209 = vmatmul.mubr.f32.gmra.mxu0 %v2069
    %v2210 = vpop.f32.mrf.mxu0
    %v2211 = vadd.f32 %v1954, %v2210
    %v2212 = vpop.f32.mrf.mxu0
    %2213 = vmatprep.mubr.f32.mxu0 0.0
    %2214 = vmatmul.mubr.f32.gmra.mxu0 %v2072
    %v2215 = vpop.f32.mrf.mxu0
    %v2216 = vadd.f32 %v1959, %v2215
    %v2217 = vpop.f32.mrf.mxu0
    %2218 = vmatprep.mubr.f32.mxu0 0.0
    %2219 = vmatmul.mubr.f32.gmra.mxu0 %v2075
    %v2220 = vpop.f32.mrf.mxu0
    %v2221 = vadd.f32 %v1964, %v2220
    %v2222 = vpop.f32.mrf.mxu0
    %2223 = vmatprep.mubr.f32.mxu0 0.0
    %2224 = vmatmul.mubr.f32.gmra.mxu0 %v2078
    %v2225 = vpop.f32.mrf.mxu0
    %v2226 = vadd.f32 %v1969, %v2225
    %v2227 = vpop.f32.mrf.mxu0
    %2228 = vmatprep.mubr.f32.mxu0 0.0
    %2229 = vmatmul.mubr.f32.gmra.mxu0 %v2081
    %v2230 = vpop.f32.mrf.mxu0
    %v2231 = vadd.f32 %v1974, %v2230
    %v2232 = vpop.f32.mrf.mxu0
    %2233 = vmatprep.mubr.f32.mxu0 0.0
    %2234 = vmatmul.mubr.f32.gmra.mxu0 %v2084
    %v2235 = vpop.f32.mrf.mxu0
    %v2236 = vadd.f32 %v1979, %v2235
    %v2237 = vpop.f32.mrf.mxu0
    %2238 = vmatprep.mubr.f32.mxu0 0.0
    %2239 = vmatmul.mubr.f32.gmra.mxu0 %v2087
    %v2240 = vpop.f32.mrf.mxu0
    %v2241 = vadd.f32 %v1984, %v2240
    %v2242 = vpop.f32.mrf.mxu0
    %2243 = vmatprep.mubr.f32.mxu0 0.0
    %2244 = vmatmul.mubr.f32.gmra.mxu0 %v2090
    %v2245 = vpop.f32.mrf.mxu0
    %v2246 = vadd.f32 %v1989, %v2245
    %v2247 = vpop.f32.mrf.mxu0
    %2248 = vmatprep.mubr.f32.mxu0 0.0
    %2249 = vmatmul.mubr.f32.gmra.mxu0 %v2093
    %v2250 = vpop.f32.mrf.mxu0
    %v2251 = vadd.f32 %v1994, %v2250
    %v2252 = vpop.f32.mrf.mxu0
    %2253 = vmatprep.mubr.f32.mxu0 0.0
    %2254 = vmatmul.mubr.f32.gmra.mxu0 %v2096
    %v2255 = vpop.f32.mrf.mxu0
    %v2256 = vadd.f32 %v1999, %v2255
    %v2257 = vpop.f32.mrf.mxu0
    %2258 = vmatprep.mubr.f32.mxu0 0.0
    %2259 = vmatmul.mubr.f32.gmra.mxu0 %v2099
    %v2260 = vpop.f32.mrf.mxu0
    %v2261 = vadd.f32 %v2004, %v2260
    %v2262 = vpop.f32.mrf.mxu0
    %2263 = vmatprep.mubr.f32.mxu0 0.0
    %2264 = vmatmul.mubr.f32.gmra.mxu0 %v2102
    %v2265 = vpop.f32.mrf.mxu0
    %v2266 = vadd.f32 %v2009, %v2265
    %v2267 = vpop.f32.mrf.mxu0
    %2268 = vmatprep.mubr.f32.mxu0 0.0
    %2269 = vmatmul.mubr.f32.gmra.mxu0 %v2105
    %v2270 = vpop.f32.mrf.mxu0
    %v2271 = vadd.f32 %v2014, %v2270
    %v2272 = vpop.f32.mrf.mxu0
    %2273 = vmatprep.mubr.f32.mxu0 0.0
    %2274 = vmatmul.mubr.f32.gmra.mxu0 %v2108
    %v2275 = vpop.f32.mrf.mxu0
    %v2276 = vadd.f32 %v2019, %v2275
    %v2277 = vpop.f32.mrf.mxu0
    %2278 = vmatprep.mubr.f32.mxu0 0.0
    %2279 = vmatmul.mubr.f32.gmra.mxu0 %v2111
    %v2280 = vpop.f32.mrf.mxu0
    %v2281 = vadd.f32 %v2024, %v2280
    %v2282 = vpop.f32.mrf.mxu0
    %2283 = vmatprep.mubr.f32.mxu0 0.0
    %2284 = vmatmul.mubr.f32.gmra.mxu0 %v2114
    %v2285 = vpop.f32.mrf.mxu0
    %v2286 = vadd.f32 %v2029, %v2285
    %v2287 = vpop.f32.mrf.mxu0
    %2288 = vmatprep.mubr.f32.mxu0 0.0
    %2289 = vmatmul.mubr.f32.gmra.mxu0 %v2117
    %v2290 = vpop.f32.mrf.mxu0
    %v2291 = vadd.f32 %v2034, %v2290
    %v2292 = vpop.f32.mrf.mxu0
    %2293 = vmatprep.mubr.f32.mxu0 0.0
    %2294 = vmatmul.mubr.f32.gmra.mxu0 %v2120
    %v2295 = vpop.f32.mrf.mxu0
    %v2296 = vadd.f32 %v2039, %v2295
    %v2297 = vpop.f32.mrf.mxu0
    %2298 = vmatprep.mubr.f32.mxu0 0.0
    %2299 = vmatmul.mubr.f32.gmra.mxu0 %v2123
    %v2300 = vpop.f32.mrf.mxu0
    %v2301 = vadd.f32 %v2044, %v2300
    %v2302 = vpop.f32.mrf.mxu0
    %2303 = vmatprep.mubr.f32.mxu0 0.0
    %2304 = vmatmul.mubr.f32.gmra.mxu0 %v2126
    %v2305 = vpop.f32.mrf.mxu0
    %v2306 = vadd.f32 %v2049, %v2305
    %v2307 = vpop.f32.mrf.mxu0
    %2308 = vmatprep.mubr.f32.mxu0 0.0
    %2309 = vmatmul.mubr.f32.gmra.mxu0 %v2129
    %v2310 = vpop.f32.mrf.mxu0
    %v2311 = vadd.f32 %v2054, %v2310
    %v2312 = vpop.f32.mrf.mxu0
    %2313 = vmatprep.mubr.f32.mxu0 0.0
    %2314 = vmatmul.mubr.f32.gmra.mxu0 %v2132
    %v2315 = vpop.f32.mrf.mxu0
    %v2316 = vadd.f32 %v2059, %v2315
    %v2317 = vpop.f32.mrf.mxu0
    %2318 = vdwg.mxu0
    %v2319 = vld [vmem:[#allocation3 + $0x2] sm:$0xff]
    %v2320 = vld [vmem:[#allocation3 + $0xa] sm:$0xff]
    %v2321 = vld [vmem:[#allocation3 + $0x12] sm:$0xff]
    %v2322 = vld [vmem:[#allocation3 + $0x22] sm:$0xff]
    %v2323 = vld [vmem:[#allocation3 + $0x2a] sm:$0xff]
    %v2324 = vld [vmem:[#allocation3 + $0x32] sm:$0xff]
    %v2325 = vld [vmem:[#allocation3 + $0x42] sm:$0xff]
    %v2326 = vld [vmem:[#allocation3 + $0x4a] sm:$0xff]
    %v2327 = vld [vmem:[#allocation3 + $0x52] sm:$0xff]
    %v2328 = vld [vmem:[#allocation3 + $0x62] sm:$0xff]
    %v2329 = vld [vmem:[#allocation3 + $0x6a] sm:$0xff]
    %v2330 = vld [vmem:[#allocation3 + $0x72] sm:$0xff]
    %v2331 = vld [vmem:[#allocation3 + $0x82] sm:$0xff]
    %v2332 = vld [vmem:[#allocation3 + $0x8a] sm:$0xff]
    %v2333 = vld [vmem:[#allocation3 + $0x92] sm:$0xff]
    %v2334 = vld [vmem:[#allocation3 + $0xa2] sm:$0xff]
    %v2335 = vld [vmem:[#allocation3 + $0xaa] sm:$0xff]
    %v2336 = vld [vmem:[#allocation3 + $0xb2] sm:$0xff]
    %v2337 = vld [vmem:[#allocation3 + $0xc2] sm:$0xff]
    %v2338 = vld [vmem:[#allocation3 + $0xca] sm:$0xff]
    %v2339 = vld [vmem:[#allocation3 + $0xd2] sm:$0xff]
    %v2340 = vld [vmem:[#allocation3 + $0xe2] sm:$0xff]
    %v2341 = vld [vmem:[#allocation3 + $0xea] sm:$0xff]
    %v2342 = vld [vmem:[#allocation3 + $0xf2] sm:$0xff]
    %s2343 = scalar_lea.vmem [#allocation9], 64
    %v2344 = vld [vmem:[%s2343] sm:$0xff]
    %v2345 = vld [vmem:[%s2343 + $0x8] sm:$0xff]
    %v2346 = vld [vmem:[%s2343 + $0x10] sm:$0xff]
    %v2347 = vld [vmem:[%s2343 + $0x18] sm:$0xff]
    %v2349 = vsel %vm1268, %v2319, 0
    %v2352 = vsel %vm1268, %v2320, 0
    %v2355 = vsel %vm1268, %v2321, 0
    %v2358 = vsel %vm1268, %v2322, 0
    %v2361 = vsel %vm1268, %v2323, 0
    %v2364 = vsel %vm1268, %v2324, 0
    %v2367 = vsel %vm1268, %v2325, 0
    %v2370 = vsel %vm1268, %v2326, 0
    %v2373 = vsel %vm1268, %v2327, 0
    %v2376 = vsel %vm1268, %v2328, 0
    %v2379 = vsel %vm1268, %v2329, 0
    %v2382 = vsel %vm1268, %v2330, 0
    %v2385 = vsel %vm1268, %v2331, 0
    %v2388 = vsel %vm1268, %v2332, 0
    %v2391 = vsel %vm1268, %v2333, 0
    %v2394 = vsel %vm1268, %v2334, 0
    %v2397 = vsel %vm1268, %v2335, 0
    %v2400 = vsel %vm1268, %v2336, 0
    %v2403 = vsel %vm1268, %v2337, 0
    %v2406 = vsel %vm1268, %v2338, 0
    %v2409 = vsel %vm1268, %v2339, 0
    %v2412 = vsel %vm1268, %v2340, 0
    %v2415 = vsel %vm1268, %v2341, 0
    %v2418 = vsel %vm1268, %v2342, 0
    %2420 = vmatprep.subr.mxu0 0.0
    %2421 = vmatpush1.msra.mxu0 0.0
    %2422 = vmatprep.subr.mxu0 0.0
    %2423 = vmatpush1.msra.mxu0 0.0
    %2424 = vmatprep.subr.mxu0 0.0
    %2425 = vmatpush1.msra.mxu0 0.0
    %2426 = vmatprep.subr.mxu0 0.0
    %2427 = vmatpush1.msra.mxu0 0.0
    %2428 = vmatprep.subr.mxu0 0.0
    %2429 = vmatpush1.msra.mxu0 0.0
    %2430 = vmatprep.subr.mxu0 0.0
    %2431 = vmatpush1.msra.mxu0 0.0
    %2432 = vmatprep.subr.mxu0 0.0
    %2433 = vmatpush1.msra.mxu0 0.0
    %2434 = vmatprep.subr.mxu0 0.0
    %2435 = vmatpush1.msra.mxu0 0.0
    %2436 = vmatprep.subr.mxu0 0.0
    %2437 = vmatpush1.msra.mxu0 0.0
    %2438 = vmatprep.subr.mxu0 0.0
    %2439 = vmatpush1.msra.mxu0 0.0
    %2440 = vmatprep.subr.mxu0 0.0
    %2441 = vmatpush1.msra.mxu0 0.0
    %2442 = vmatprep.subr.mxu0 0.0
    %2443 = vmatpush1.msra.mxu0 0.0
    %2444 = vmatprep.subr.mxu0 0.0
    %2445 = vmatpush1.msra.mxu0 %v2347
    %2446 = vmatprep.subr.mxu0 0.0
    %2447 = vmatpush1.msra.mxu0 %v2346
    %2448 = vmatprep.subr.mxu0 0.0
    %2449 = vmatpush1.msra.mxu0 %v2345
    %2450 = vmatprep.subr.mxu0 0.0
    %2451 = vmatpush1.msra.mxu0 %v2344
    %2452 = vmatprep.subr.mxu0 0.0
    %2453 = vmatpush2.msra.mxu0 0.0
    %2454 = vmatprep.subr.mxu0 0.0
    %2455 = vmatpush2.msra.mxu0 0.0
    %2456 = vmatprep.subr.mxu0 0.0
    %2457 = vmatpush2.msra.mxu0 0.0
    %2458 = vmatprep.subr.mxu0 0.0
    %2459 = vmatpush2.msra.mxu0 0.0
    %2460 = vmatprep.subr.mxu0 0.0
    %2461 = vmatpush2.msra.mxu0 0.0
    %2462 = vmatprep.subr.mxu0 0.0
    %2463 = vmatpush2.msra.mxu0 0.0
    %2464 = vmatprep.subr.mxu0 0.0
    %2465 = vmatpush2.msra.mxu0 0.0
    %2466 = vmatprep.subr.mxu0 0.0
    %2467 = vmatpush2.msra.mxu0 0.0
    %2468 = vmatprep.subr.mxu0 0.0
    %2469 = vmatpush2.msra.mxu0 0.0
    %2470 = vmatprep.subr.mxu0 0.0
    %2471 = vmatpush2.msra.mxu0 0.0
    %2472 = vmatprep.subr.mxu0 0.0
    %2473 = vmatpush2.msra.mxu0 0.0
    %2474 = vmatprep.subr.mxu0 0.0
    %2475 = vmatpush2.msra.mxu0 0.0
    %2476 = vmatprep.subr.mxu0 0.0
    %2477 = vmatpush2.msra.mxu0 0.0
    %2478 = vmatprep.subr.mxu0 0.0
    %2479 = vmatpush2.msra.mxu0 0.0
    %2480 = vmatprep.subr.mxu0 0.0
    %2481 = vmatpush2.msra.mxu0 0.0
    %2482 = vmatprep.subr.mxu0 0.0
    %2483 = vmatpush2.msra.mxu0 0.0
    %2484 = vmatprep.mubr.f32.mxu0 0.0
    %2485 = vmatmul.mubr.f32.gmra.mxu0 %v2349
    %v2486 = vpop.f32.mrf.mxu0
    %v2487 = vadd.f32 0.0, %v2486
    %v2488 = vpop.f32.mrf.mxu0
    %2489 = vmatprep.mubr.f32.mxu0 0.0
    %2490 = vmatmul.mubr.f32.gmra.mxu0 %v2352
    %v2491 = vpop.f32.mrf.mxu0
    %v2492 = vadd.f32 0.0, %v2491
    %v2493 = vpop.f32.mrf.mxu0
    %2494 = vmatprep.mubr.f32.mxu0 0.0
    %2495 = vmatmul.mubr.f32.gmra.mxu0 %v2355
    %v2496 = vpop.f32.mrf.mxu0
    %v2497 = vadd.f32 0.0, %v2496
    %v2498 = vpop.f32.mrf.mxu0
    %2499 = vmatprep.mubr.f32.mxu0 0.0
    %2500 = vmatmul.mubr.f32.gmra.mxu0 %v2358
    %v2501 = vpop.f32.mrf.mxu0
    %v2502 = vadd.f32 0.0, %v2501
    %v2503 = vpop.f32.mrf.mxu0
    %2504 = vmatprep.mubr.f32.mxu0 0.0
    %2505 = vmatmul.mubr.f32.gmra.mxu0 %v2361
    %v2506 = vpop.f32.mrf.mxu0
    %v2507 = vadd.f32 0.0, %v2506
    %v2508 = vpop.f32.mrf.mxu0
    %2509 = vmatprep.mubr.f32.mxu0 0.0
    %2510 = vmatmul.mubr.f32.gmra.mxu0 %v2364
    %v2511 = vpop.f32.mrf.mxu0
    %v2512 = vadd.f32 0.0, %v2511
    %v2513 = vpop.f32.mrf.mxu0
    %2514 = vmatprep.mubr.f32.mxu0 0.0
    %2515 = vmatmul.mubr.f32.gmra.mxu0 %v2367
    %v2516 = vpop.f32.mrf.mxu0
    %v2517 = vadd.f32 0.0, %v2516
    %v2518 = vpop.f32.mrf.mxu0
    %2519 = vmatprep.mubr.f32.mxu0 0.0
    %2520 = vmatmul.mubr.f32.gmra.mxu0 %v2370
    %v2521 = vpop.f32.mrf.mxu0
    %v2522 = vadd.f32 0.0, %v2521
    %v2523 = vpop.f32.mrf.mxu0
    %2524 = vmatprep.mubr.f32.mxu0 0.0
    %2525 = vmatmul.mubr.f32.gmra.mxu0 %v2373
    %v2526 = vpop.f32.mrf.mxu0
    %v2527 = vadd.f32 0.0, %v2526
    %v2528 = vpop.f32.mrf.mxu0
    %2529 = vmatprep.mubr.f32.mxu0 0.0
    %2530 = vmatmul.mubr.f32.gmra.mxu0 %v2376
    %v2531 = vpop.f32.mrf.mxu0
    %v2532 = vadd.f32 0.0, %v2531
    %v2533 = vpop.f32.mrf.mxu0
    %2534 = vmatprep.mubr.f32.mxu0 0.0
    %2535 = vmatmul.mubr.f32.gmra.mxu0 %v2379
    %v2536 = vpop.f32.mrf.mxu0
    %v2537 = vadd.f32 0.0, %v2536
    %v2538 = vpop.f32.mrf.mxu0
    %2539 = vmatprep.mubr.f32.mxu0 0.0
    %2540 = vmatmul.mubr.f32.gmra.mxu0 %v2382
    %v2541 = vpop.f32.mrf.mxu0
    %v2542 = vadd.f32 0.0, %v2541
    %v2543 = vpop.f32.mrf.mxu0
    %2544 = vmatprep.mubr.f32.mxu0 0.0
    %2545 = vmatmul.mubr.f32.gmra.mxu0 %v2385
    %v2546 = vpop.f32.mrf.mxu0
    %v2547 = vadd.f32 0.0, %v2546
    %v2548 = vpop.f32.mrf.mxu0
    %2549 = vmatprep.mubr.f32.mxu0 0.0
    %2550 = vmatmul.mubr.f32.gmra.mxu0 %v2388
    %v2551 = vpop.f32.mrf.mxu0
    %v2552 = vadd.f32 0.0, %v2551
    %v2553 = vpop.f32.mrf.mxu0
    %2554 = vmatprep.mubr.f32.mxu0 0.0
    %2555 = vmatmul.mubr.f32.gmra.mxu0 %v2391
    %v2556 = vpop.f32.mrf.mxu0
    %v2557 = vadd.f32 0.0, %v2556
    %v2558 = vpop.f32.mrf.mxu0
    %2559 = vmatprep.mubr.f32.mxu0 0.0
    %2560 = vmatmul.mubr.f32.gmra.mxu0 %v2394
    %v2561 = vpop.f32.mrf.mxu0
    %v2562 = vadd.f32 0.0, %v2561
    %v2563 = vpop.f32.mrf.mxu0
    %2564 = vmatprep.mubr.f32.mxu0 0.0
    %2565 = vmatmul.mubr.f32.gmra.mxu0 %v2397
    %v2566 = vpop.f32.mrf.mxu0
    %v2567 = vadd.f32 0.0, %v2566
    %v2568 = vpop.f32.mrf.mxu0
    %2569 = vmatprep.mubr.f32.mxu0 0.0
    %2570 = vmatmul.mubr.f32.gmra.mxu0 %v2400
    %v2571 = vpop.f32.mrf.mxu0
    %v2572 = vadd.f32 0.0, %v2571
    %v2573 = vpop.f32.mrf.mxu0
    %2574 = vmatprep.mubr.f32.mxu0 0.0
    %2575 = vmatmul.mubr.f32.gmra.mxu0 %v2403
    %v2576 = vpop.f32.mrf.mxu0
    %v2577 = vadd.f32 0.0, %v2576
    %v2578 = vpop.f32.mrf.mxu0
    %2579 = vmatprep.mubr.f32.mxu0 0.0
    %2580 = vmatmul.mubr.f32.gmra.mxu0 %v2406
    %v2581 = vpop.f32.mrf.mxu0
    %v2582 = vadd.f32 0.0, %v2581
    %v2583 = vpop.f32.mrf.mxu0
    %2584 = vmatprep.mubr.f32.mxu0 0.0
    %2585 = vmatmul.mubr.f32.gmra.mxu0 %v2409
    %v2586 = vpop.f32.mrf.mxu0
    %v2587 = vadd.f32 0.0, %v2586
    %v2588 = vpop.f32.mrf.mxu0
    %2589 = vmatprep.mubr.f32.mxu0 0.0
    %2590 = vmatmul.mubr.f32.gmra.mxu0 %v2412
    %v2591 = vpop.f32.mrf.mxu0
    %v2592 = vadd.f32 0.0, %v2591
    %v2593 = vpop.f32.mrf.mxu0
    %2594 = vmatprep.mubr.f32.mxu0 0.0
    %2595 = vmatmul.mubr.f32.gmra.mxu0 %v2415
    %v2596 = vpop.f32.mrf.mxu0
    %v2597 = vadd.f32 0.0, %v2596
    %v2598 = vpop.f32.mrf.mxu0
    %2599 = vmatprep.mubr.f32.mxu0 0.0
    %2600 = vmatmul.mubr.f32.gmra.mxu0 %v2418
    %v2601 = vpop.f32.mrf.mxu0
    %v2602 = vadd.f32 0.0, %v2601
    %v2603 = vpop.f32.mrf.mxu0
    %2604 = vdwg.mxu0
    %v2605 = vadd.f32 %v2201, %v2487
    %v2606 = vadd.f32 %v2206, %v2492
    %v2607 = vadd.f32 %v2211, %v2497
    %v2608 = vadd.f32 %v2216, %v2502
    %v2609 = vadd.f32 %v2221, %v2507
    %v2610 = vadd.f32 %v2226, %v2512
    %v2611 = vadd.f32 %v2231, %v2517
    %v2612 = vadd.f32 %v2236, %v2522
    %v2613 = vadd.f32 %v2241, %v2527
    %v2614 = vadd.f32 %v2246, %v2532
    %v2615 = vadd.f32 %v2251, %v2537
    %v2616 = vadd.f32 %v2256, %v2542
    %v2617 = vadd.f32 %v2261, %v2547
    %v2618 = vadd.f32 %v2266, %v2552
    %v2619 = vadd.f32 %v2271, %v2557
    %v2620 = vadd.f32 %v2276, %v2562
    %v2621 = vadd.f32 %v2281, %v2567
    %v2622 = vadd.f32 %v2286, %v2572
    %v2623 = vadd.f32 %v2291, %v2577
    %v2624 = vadd.f32 %v2296, %v2582
    %v2625 = vadd.f32 %v2301, %v2587
    %v2626 = vadd.f32 %v2306, %v2592
    %v2627 = vadd.f32 %v2311, %v2597
    %v2628 = vadd.f32 %v2316, %v2602
    %v2629 = vld [vmem:[#allocation3 + $0x3] sm:$0xff]
    %v2630 = vld [vmem:[#allocation3 + $0xb] sm:$0xff]
    %v2631 = vld [vmem:[#allocation3 + $0x13] sm:$0xff]
    %v2632 = vld [vmem:[#allocation3 + $0x23] sm:$0xff]
    %v2633 = vld [vmem:[#allocation3 + $0x2b] sm:$0xff]
    %v2634 = vld [vmem:[#allocation3 + $0x33] sm:$0xff]
    %v2635 = vld [vmem:[#allocation3 + $0x43] sm:$0xff]
    %v2636 = vld [vmem:[#allocation3 + $0x4b] sm:$0xff]
    %v2637 = vld [vmem:[#allocation3 + $0x53] sm:$0xff]
    %v2638 = vld [vmem:[#allocation3 + $0x63] sm:$0xff]
    %v2639 = vld [vmem:[#allocation3 + $0x6b] sm:$0xff]
    %v2640 = vld [vmem:[#allocation3 + $0x73] sm:$0xff]
    %v2641 = vld [vmem:[#allocation3 + $0x83] sm:$0xff]
    %v2642 = vld [vmem:[#allocation3 + $0x8b] sm:$0xff]
    %v2643 = vld [vmem:[#allocation3 + $0x93] sm:$0xff]
    %v2644 = vld [vmem:[#allocation3 + $0xa3] sm:$0xff]
    %v2645 = vld [vmem:[#allocation3 + $0xab] sm:$0xff]
    %v2646 = vld [vmem:[#allocation3 + $0xb3] sm:$0xff]
    %v2647 = vld [vmem:[#allocation3 + $0xc3] sm:$0xff]
    %v2648 = vld [vmem:[#allocation3 + $0xcb] sm:$0xff]
    %v2649 = vld [vmem:[#allocation3 + $0xd3] sm:$0xff]
    %v2650 = vld [vmem:[#allocation3 + $0xe3] sm:$0xff]
    %v2651 = vld [vmem:[#allocation3 + $0xeb] sm:$0xff]
    %v2652 = vld [vmem:[#allocation3 + $0xf3] sm:$0xff]
    %s2653 = scalar_lea.vmem [#allocation9], 96
    %v2654 = vld [vmem:[%s2653] sm:$0xff]
    %v2655 = vld [vmem:[%s2653 + $0x8] sm:$0xff]
    %v2656 = vld [vmem:[%s2653 + $0x10] sm:$0xff]
    %v2657 = vld [vmem:[%s2653 + $0x18] sm:$0xff]
    %v2659 = vsel %vm1268, %v2629, 0
    %v2662 = vsel %vm1268, %v2630, 0
    %v2665 = vsel %vm1268, %v2631, 0
    %v2668 = vsel %vm1268, %v2632, 0
    %v2671 = vsel %vm1268, %v2633, 0
    %v2674 = vsel %vm1268, %v2634, 0
    %v2677 = vsel %vm1268, %v2635, 0
    %v2680 = vsel %vm1268, %v2636, 0
    %v2683 = vsel %vm1268, %v2637, 0
    %v2686 = vsel %vm1268, %v2638, 0
    %v2689 = vsel %vm1268, %v2639, 0
    %v2692 = vsel %vm1268, %v2640, 0
    %v2695 = vsel %vm1268, %v2641, 0
    %v2698 = vsel %vm1268, %v2642, 0
    %v2701 = vsel %vm1268, %v2643, 0
    %v2704 = vsel %vm1268, %v2644, 0
    %v2707 = vsel %vm1268, %v2645, 0
    %v2710 = vsel %vm1268, %v2646, 0
    %v2713 = vsel %vm1268, %v2647, 0
    %v2716 = vsel %vm1268, %v2648, 0
    %v2719 = vsel %vm1268, %v2649, 0
    %v2722 = vsel %vm1268, %v2650, 0
    %v2725 = vsel %vm1268, %v2651, 0
    %v2728 = vsel %vm1268, %v2652, 0
    %2730 = vmatprep.subr.mxu0 0.0
    %2731 = vmatpush1.msra.mxu0 0.0
    %2732 = vmatprep.subr.mxu0 0.0
    %2733 = vmatpush1.msra.mxu0 0.0
    %2734 = vmatprep.subr.mxu0 0.0
    %2735 = vmatpush1.msra.mxu0 0.0
    %2736 = vmatprep.subr.mxu0 0.0
    %2737 = vmatpush1.msra.mxu0 0.0
    %2738 = vmatprep.subr.mxu0 0.0
    %2739 = vmatpush1.msra.mxu0 0.0
    %2740 = vmatprep.subr.mxu0 0.0
    %2741 = vmatpush1.msra.mxu0 0.0
    %2742 = vmatprep.subr.mxu0 0.0
    %2743 = vmatpush1.msra.mxu0 0.0
    %2744 = vmatprep.subr.mxu0 0.0
    %2745 = vmatpush1.msra.mxu0 0.0
    %2746 = vmatprep.subr.mxu0 0.0
    %2747 = vmatpush1.msra.mxu0 0.0
    %2748 = vmatprep.subr.mxu0 0.0
    %2749 = vmatpush1.msra.mxu0 0.0
    %2750 = vmatprep.subr.mxu0 0.0
    %2751 = vmatpush1.msra.mxu0 0.0
    %2752 = vmatprep.subr.mxu0 0.0
    %2753 = vmatpush1.msra.mxu0 0.0
    %2754 = vmatprep.subr.mxu0 0.0
    %2755 = vmatpush1.msra.mxu0 %v2657
    %2756 = vmatprep.subr.mxu0 0.0
    %2757 = vmatpush1.msra.mxu0 %v2656
    %2758 = vmatprep.subr.mxu0 0.0
    %2759 = vmatpush1.msra.mxu0 %v2655
    %2760 = vmatprep.subr.mxu0 0.0
    %2761 = vmatpush1.msra.mxu0 %v2654
    %2762 = vmatprep.subr.mxu0 0.0
    %2763 = vmatpush2.msra.mxu0 0.0
    %2764 = vmatprep.subr.mxu0 0.0
    %2765 = vmatpush2.msra.mxu0 0.0
    %2766 = vmatprep.subr.mxu0 0.0
    %2767 = vmatpush2.msra.mxu0 0.0
    %2768 = vmatprep.subr.mxu0 0.0
    %2769 = vmatpush2.msra.mxu0 0.0
    %2770 = vmatprep.subr.mxu0 0.0
    %2771 = vmatpush2.msra.mxu0 0.0
    %2772 = vmatprep.subr.mxu0 0.0
    %2773 = vmatpush2.msra.mxu0 0.0
    %2774 = vmatprep.subr.mxu0 0.0
    %2775 = vmatpush2.msra.mxu0 0.0
    %2776 = vmatprep.subr.mxu0 0.0
    %2777 = vmatpush2.msra.mxu0 0.0
    %2778 = vmatprep.subr.mxu0 0.0
    %2779 = vmatpush2.msra.mxu0 0.0
    %2780 = vmatprep.subr.mxu0 0.0
    %2781 = vmatpush2.msra.mxu0 0.0
    %2782 = vmatprep.subr.mxu0 0.0
    %2783 = vmatpush2.msra.mxu0 0.0
    %2784 = vmatprep.subr.mxu0 0.0
    %2785 = vmatpush2.msra.mxu0 0.0
    %2786 = vmatprep.subr.mxu0 0.0
    %2787 = vmatpush2.msra.mxu0 0.0
    %2788 = vmatprep.subr.mxu0 0.0
    %2789 = vmatpush2.msra.mxu0 0.0
    %2790 = vmatprep.subr.mxu0 0.0
    %2791 = vmatpush2.msra.mxu0 0.0
    %2792 = vmatprep.subr.mxu0 0.0
    %2793 = vmatpush2.msra.mxu0 0.0
    %2794 = vmatprep.mubr.f32.mxu0 0.0
    %2795 = vmatmul.mubr.f32.gmra.mxu0 %v2659
    %v2796 = vpop.f32.mrf.mxu0
    %v2797 = vadd.f32 0.0, %v2796
    %v2798 = vpop.f32.mrf.mxu0
    %2799 = vmatprep.mubr.f32.mxu0 0.0
    %2800 = vmatmul.mubr.f32.gmra.mxu0 %v2662
    %v2801 = vpop.f32.mrf.mxu0
    %v2802 = vadd.f32 0.0, %v2801
    %v2803 = vpop.f32.mrf.mxu0
    %2804 = vmatprep.mubr.f32.mxu0 0.0
    %2805 = vmatmul.mubr.f32.gmra.mxu0 %v2665
    %v2806 = vpop.f32.mrf.mxu0
    %v2807 = vadd.f32 0.0, %v2806
    %v2808 = vpop.f32.mrf.mxu0
    %2809 = vmatprep.mubr.f32.mxu0 0.0
    %2810 = vmatmul.mubr.f32.gmra.mxu0 %v2668
    %v2811 = vpop.f32.mrf.mxu0
    %v2812 = vadd.f32 0.0, %v2811
    %v2813 = vpop.f32.mrf.mxu0
    %2814 = vmatprep.mubr.f32.mxu0 0.0
    %2815 = vmatmul.mubr.f32.gmra.mxu0 %v2671
    %v2816 = vpop.f32.mrf.mxu0
    %v2817 = vadd.f32 0.0, %v2816
    %v2818 = vpop.f32.mrf.mxu0
    %2819 = vmatprep.mubr.f32.mxu0 0.0
    %2820 = vmatmul.mubr.f32.gmra.mxu0 %v2674
    %v2821 = vpop.f32.mrf.mxu0
    %v2822 = vadd.f32 0.0, %v2821
    %v2823 = vpop.f32.mrf.mxu0
    %2824 = vmatprep.mubr.f32.mxu0 0.0
    %2825 = vmatmul.mubr.f32.gmra.mxu0 %v2677
    %v2826 = vpop.f32.mrf.mxu0
    %v2827 = vadd.f32 0.0, %v2826
    %v2828 = vpop.f32.mrf.mxu0
    %2829 = vmatprep.mubr.f32.mxu0 0.0
    %2830 = vmatmul.mubr.f32.gmra.mxu0 %v2680
    %v2831 = vpop.f32.mrf.mxu0
    %v2832 = vadd.f32 0.0, %v2831
    %v2833 = vpop.f32.mrf.mxu0
    %2834 = vmatprep.mubr.f32.mxu0 0.0
    %2835 = vmatmul.mubr.f32.gmra.mxu0 %v2683
    %v2836 = vpop.f32.mrf.mxu0
    %v2837 = vadd.f32 0.0, %v2836
    %v2838 = vpop.f32.mrf.mxu0
    %2839 = vmatprep.mubr.f32.mxu0 0.0
    %2840 = vmatmul.mubr.f32.gmra.mxu0 %v2686
    %v2841 = vpop.f32.mrf.mxu0
    %v2842 = vadd.f32 0.0, %v2841
    %v2843 = vpop.f32.mrf.mxu0
    %2844 = vmatprep.mubr.f32.mxu0 0.0
    %2845 = vmatmul.mubr.f32.gmra.mxu0 %v2689
    %v2846 = vpop.f32.mrf.mxu0
    %v2847 = vadd.f32 0.0, %v2846
    %v2848 = vpop.f32.mrf.mxu0
    %2849 = vmatprep.mubr.f32.mxu0 0.0
    %2850 = vmatmul.mubr.f32.gmra.mxu0 %v2692
    %v2851 = vpop.f32.mrf.mxu0
    %v2852 = vadd.f32 0.0, %v2851
    %v2853 = vpop.f32.mrf.mxu0
    %2854 = vmatprep.mubr.f32.mxu0 0.0
    %2855 = vmatmul.mubr.f32.gmra.mxu0 %v2695
    %v2856 = vpop.f32.mrf.mxu0
    %v2857 = vadd.f32 0.0, %v2856
    %v2858 = vpop.f32.mrf.mxu0
    %2859 = vmatprep.mubr.f32.mxu0 0.0
    %2860 = vmatmul.mubr.f32.gmra.mxu0 %v2698
    %v2861 = vpop.f32.mrf.mxu0
    %v2862 = vadd.f32 0.0, %v2861
    %v2863 = vpop.f32.mrf.mxu0
    %2864 = vmatprep.mubr.f32.mxu0 0.0
    %2865 = vmatmul.mubr.f32.gmra.mxu0 %v2701
    %v2866 = vpop.f32.mrf.mxu0
    %v2867 = vadd.f32 0.0, %v2866
    %v2868 = vpop.f32.mrf.mxu0
    %2869 = vmatprep.mubr.f32.mxu0 0.0
    %2870 = vmatmul.mubr.f32.gmra.mxu0 %v2704
    %v2871 = vpop.f32.mrf.mxu0
    %v2872 = vadd.f32 0.0, %v2871
    %v2873 = vpop.f32.mrf.mxu0
    %2874 = vmatprep.mubr.f32.mxu0 0.0
    %2875 = vmatmul.mubr.f32.gmra.mxu0 %v2707
    %v2876 = vpop.f32.mrf.mxu0
    %v2877 = vadd.f32 0.0, %v2876
    %v2878 = vpop.f32.mrf.mxu0
    %2879 = vmatprep.mubr.f32.mxu0 0.0
    %2880 = vmatmul.mubr.f32.gmra.mxu0 %v2710
    %v2881 = vpop.f32.mrf.mxu0
    %v2882 = vadd.f32 0.0, %v2881
    %v2883 = vpop.f32.mrf.mxu0
    %2884 = vmatprep.mubr.f32.mxu0 0.0
    %2885 = vmatmul.mubr.f32.gmra.mxu0 %v2713
    %v2886 = vpop.f32.mrf.mxu0
    %v2887 = vadd.f32 0.0, %v2886
    %v2888 = vpop.f32.mrf.mxu0
    %2889 = vmatprep.mubr.f32.mxu0 0.0
    %2890 = vmatmul.mubr.f32.gmra.mxu0 %v2716
    %v2891 = vpop.f32.mrf.mxu0
    %v2892 = vadd.f32 0.0, %v2891
    %v2893 = vpop.f32.mrf.mxu0
    %2894 = vmatprep.mubr.f32.mxu0 0.0
    %2895 = vmatmul.mubr.f32.gmra.mxu0 %v2719
    %v2896 = vpop.f32.mrf.mxu0
    %v2897 = vadd.f32 0.0, %v2896
    %v2898 = vpop.f32.mrf.mxu0
    %2899 = vmatprep.mubr.f32.mxu0 0.0
    %2900 = vmatmul.mubr.f32.gmra.mxu0 %v2722
    %v2901 = vpop.f32.mrf.mxu0
    %v2902 = vadd.f32 0.0, %v2901
    %v2903 = vpop.f32.mrf.mxu0
    %2904 = vmatprep.mubr.f32.mxu0 0.0
    %2905 = vmatmul.mubr.f32.gmra.mxu0 %v2725
    %v2906 = vpop.f32.mrf.mxu0
    %v2907 = vadd.f32 0.0, %v2906
    %v2908 = vpop.f32.mrf.mxu0
    %2909 = vmatprep.mubr.f32.mxu0 0.0
    %2910 = vmatmul.mubr.f32.gmra.mxu0 %v2728
    %v2911 = vpop.f32.mrf.mxu0
    %v2912 = vadd.f32 0.0, %v2911
    %v2913 = vpop.f32.mrf.mxu0
    %2914 = vdwg.mxu0
    %v2915 = vadd.f32 %v2605, %v2797
    %v2916 = vadd.f32 %v2606, %v2802
    %v2917 = vadd.f32 %v2607, %v2807
    %v2918 = vadd.f32 %v2608, %v2812
    %v2919 = vadd.f32 %v2609, %v2817
    %v2920 = vadd.f32 %v2610, %v2822
    %v2921 = vadd.f32 %v2611, %v2827
    %v2922 = vadd.f32 %v2612, %v2832
    %v2923 = vadd.f32 %v2613, %v2837
    %v2924 = vadd.f32 %v2614, %v2842
    %v2925 = vadd.f32 %v2615, %v2847
    %v2926 = vadd.f32 %v2616, %v2852
    %v2927 = vadd.f32 %v2617, %v2857
    %v2928 = vadd.f32 %v2618, %v2862
    %v2929 = vadd.f32 %v2619, %v2867
    %v2930 = vadd.f32 %v2620, %v2872
    %v2931 = vadd.f32 %v2621, %v2877
    %v2932 = vadd.f32 %v2622, %v2882
    %v2933 = vadd.f32 %v2623, %v2887
    %v2934 = vadd.f32 %v2624, %v2892
    %v2935 = vadd.f32 %v2625, %v2897
    %v2936 = vadd.f32 %v2626, %v2902
    %v2937 = vadd.f32 %v2627, %v2907
    %v2938 = vadd.f32 %v2628, %v2912
    %v2939 = vld [vmem:[#allocation3 + $0x4] sm:$0xff]
    %v2940 = vld [vmem:[#allocation3 + $0xc] sm:$0xff]
    %v2941 = vld [vmem:[#allocation3 + $0x14] sm:$0xff]
    %v2942 = vld [vmem:[#allocation3 + $0x24] sm:$0xff]
    %v2943 = vld [vmem:[#allocation3 + $0x2c] sm:$0xff]
    %v2944 = vld [vmem:[#allocation3 + $0x34] sm:$0xff]
    %v2945 = vld [vmem:[#allocation3 + $0x44] sm:$0xff]
    %v2946 = vld [vmem:[#allocation3 + $0x4c] sm:$0xff]
    %v2947 = vld [vmem:[#allocation3 + $0x54] sm:$0xff]
    %v2948 = vld [vmem:[#allocation3 + $0x64] sm:$0xff]
    %v2949 = vld [vmem:[#allocation3 + $0x6c] sm:$0xff]
    %v2950 = vld [vmem:[#allocation3 + $0x74] sm:$0xff]
    %v2951 = vld [vmem:[#allocation3 + $0x84] sm:$0xff]
    %v2952 = vld [vmem:[#allocation3 + $0x8c] sm:$0xff]
    %v2953 = vld [vmem:[#allocation3 + $0x94] sm:$0xff]
    %v2954 = vld [vmem:[#allocation3 + $0xa4] sm:$0xff]
    %v2955 = vld [vmem:[#allocation3 + $0xac] sm:$0xff]
    %v2956 = vld [vmem:[#allocation3 + $0xb4] sm:$0xff]
    %v2957 = vld [vmem:[#allocation3 + $0xc4] sm:$0xff]
    %v2958 = vld [vmem:[#allocation3 + $0xcc] sm:$0xff]
    %v2959 = vld [vmem:[#allocation3 + $0xd4] sm:$0xff]
    %v2960 = vld [vmem:[#allocation3 + $0xe4] sm:$0xff]
    %v2961 = vld [vmem:[#allocation3 + $0xec] sm:$0xff]
    %v2962 = vld [vmem:[#allocation3 + $0xf4] sm:$0xff]
    %s2963 = scalar_lea.vmem [#allocation9], 128
    %v2964 = vld [vmem:[%s2963] sm:$0xff]
    %v2965 = vld [vmem:[%s2963 + $0x8] sm:$0xff]
    %v2966 = vld [vmem:[%s2963 + $0x10] sm:$0xff]
    %v2967 = vld [vmem:[%s2963 + $0x18] sm:$0xff]
    %v2969 = vsel %vm1268, %v2939, 0
    %v2972 = vsel %vm1268, %v2940, 0
    %v2975 = vsel %vm1268, %v2941, 0
    %v2978 = vsel %vm1268, %v2942, 0
    %v2981 = vsel %vm1268, %v2943, 0
    %v2984 = vsel %vm1268, %v2944, 0
    %v2987 = vsel %vm1268, %v2945, 0
    %v2990 = vsel %vm1268, %v2946, 0
    %v2993 = vsel %vm1268, %v2947, 0
    %v2996 = vsel %vm1268, %v2948, 0
    %v2999 = vsel %vm1268, %v2949, 0
    %v3002 = vsel %vm1268, %v2950, 0
    %v3005 = vsel %vm1268, %v2951, 0
    %v3008 = vsel %vm1268, %v2952, 0
    %v3011 = vsel %vm1268, %v2953, 0
    %v3014 = vsel %vm1268, %v2954, 0
    %v3017 = vsel %vm1268, %v2955, 0
    %v3020 = vsel %vm1268, %v2956, 0
    %v3023 = vsel %vm1268, %v2957, 0
    %v3026 = vsel %vm1268, %v2958, 0
    %v3029 = vsel %vm1268, %v2959, 0
    %v3032 = vsel %vm1268, %v2960, 0
    %v3035 = vsel %vm1268, %v2961, 0
    %v3038 = vsel %vm1268, %v2962, 0
    %3040 = vmatprep.subr.mxu0 0.0
    %3041 = vmatpush1.msra.mxu0 0.0
    %3042 = vmatprep.subr.mxu0 0.0
    %3043 = vmatpush1.msra.mxu0 0.0
    %3044 = vmatprep.subr.mxu0 0.0
    %3045 = vmatpush1.msra.mxu0 0.0
    %3046 = vmatprep.subr.mxu0 0.0
    %3047 = vmatpush1.msra.mxu0 0.0
    %3048 = vmatprep.subr.mxu0 0.0
    %3049 = vmatpush1.msra.mxu0 0.0
    %3050 = vmatprep.subr.mxu0 0.0
    %3051 = vmatpush1.msra.mxu0 0.0
    %3052 = vmatprep.subr.mxu0 0.0
    %3053 = vmatpush1.msra.mxu0 0.0
    %3054 = vmatprep.subr.mxu0 0.0
    %3055 = vmatpush1.msra.mxu0 0.0
    %3056 = vmatprep.subr.mxu0 0.0
    %3057 = vmatpush1.msra.mxu0 0.0
    %3058 = vmatprep.subr.mxu0 0.0
    %3059 = vmatpush1.msra.mxu0 0.0
    %3060 = vmatprep.subr.mxu0 0.0
    %3061 = vmatpush1.msra.mxu0 0.0
    %3062 = vmatprep.subr.mxu0 0.0
    %3063 = vmatpush1.msra.mxu0 0.0
    %3064 = vmatprep.subr.mxu0 0.0
    %3065 = vmatpush1.msra.mxu0 %v2967
    %3066 = vmatprep.subr.mxu0 0.0
    %3067 = vmatpush1.msra.mxu0 %v2966
    %3068 = vmatprep.subr.mxu0 0.0
    %3069 = vmatpush1.msra.mxu0 %v2965
    %3070 = vmatprep.subr.mxu0 0.0
    %3071 = vmatpush1.msra.mxu0 %v2964
    %3072 = vmatprep.subr.mxu0 0.0
    %3073 = vmatpush2.msra.mxu0 0.0
    %3074 = vmatprep.subr.mxu0 0.0
    %3075 = vmatpush2.msra.mxu0 0.0
    %3076 = vmatprep.subr.mxu0 0.0
    %3077 = vmatpush2.msra.mxu0 0.0
    %3078 = vmatprep.subr.mxu0 0.0
    %3079 = vmatpush2.msra.mxu0 0.0
    %3080 = vmatprep.subr.mxu0 0.0
    %3081 = vmatpush2.msra.mxu0 0.0
    %3082 = vmatprep.subr.mxu0 0.0
    %3083 = vmatpush2.msra.mxu0 0.0
    %3084 = vmatprep.subr.mxu0 0.0
    %3085 = vmatpush2.msra.mxu0 0.0
    %3086 = vmatprep.subr.mxu0 0.0
    %3087 = vmatpush2.msra.mxu0 0.0
    %3088 = vmatprep.subr.mxu0 0.0
    %3089 = vmatpush2.msra.mxu0 0.0
    %3090 = vmatprep.subr.mxu0 0.0
    %3091 = vmatpush2.msra.mxu0 0.0
    %3092 = vmatprep.subr.mxu0 0.0
    %3093 = vmatpush2.msra.mxu0 0.0
    %3094 = vmatprep.subr.mxu0 0.0
    %3095 = vmatpush2.msra.mxu0 0.0
    %3096 = vmatprep.subr.mxu0 0.0
    %3097 = vmatpush2.msra.mxu0 0.0
    %3098 = vmatprep.subr.mxu0 0.0
    %3099 = vmatpush2.msra.mxu0 0.0
    %3100 = vmatprep.subr.mxu0 0.0
    %3101 = vmatpush2.msra.mxu0 0.0
    %3102 = vmatprep.subr.mxu0 0.0
    %3103 = vmatpush2.msra.mxu0 0.0
    %3104 = vmatprep.mubr.f32.mxu0 0.0
    %3105 = vmatmul.mubr.f32.gmra.mxu0 %v2969
    %v3106 = vpop.f32.mrf.mxu0
    %v3107 = vadd.f32 0.0, %v3106
    %v3108 = vpop.f32.mrf.mxu0
    %3109 = vmatprep.mubr.f32.mxu0 0.0
    %3110 = vmatmul.mubr.f32.gmra.mxu0 %v2972
    %v3111 = vpop.f32.mrf.mxu0
    %v3112 = vadd.f32 0.0, %v3111
    %v3113 = vpop.f32.mrf.mxu0
    %3114 = vmatprep.mubr.f32.mxu0 0.0
    %3115 = vmatmul.mubr.f32.gmra.mxu0 %v2975
    %v3116 = vpop.f32.mrf.mxu0
    %v3117 = vadd.f32 0.0, %v3116
    %v3118 = vpop.f32.mrf.mxu0
    %3119 = vmatprep.mubr.f32.mxu0 0.0
    %3120 = vmatmul.mubr.f32.gmra.mxu0 %v2978
    %v3121 = vpop.f32.mrf.mxu0
    %v3122 = vadd.f32 0.0, %v3121
    %v3123 = vpop.f32.mrf.mxu0
    %3124 = vmatprep.mubr.f32.mxu0 0.0
    %3125 = vmatmul.mubr.f32.gmra.mxu0 %v2981
    %v3126 = vpop.f32.mrf.mxu0
    %v3127 = vadd.f32 0.0, %v3126
    %v3128 = vpop.f32.mrf.mxu0
    %3129 = vmatprep.mubr.f32.mxu0 0.0
    %3130 = vmatmul.mubr.f32.gmra.mxu0 %v2984
    %v3131 = vpop.f32.mrf.mxu0
    %v3132 = vadd.f32 0.0, %v3131
    %v3133 = vpop.f32.mrf.mxu0
    %3134 = vmatprep.mubr.f32.mxu0 0.0
    %3135 = vmatmul.mubr.f32.gmra.mxu0 %v2987
    %v3136 = vpop.f32.mrf.mxu0
    %v3137 = vadd.f32 0.0, %v3136
    %v3138 = vpop.f32.mrf.mxu0
    %3139 = vmatprep.mubr.f32.mxu0 0.0
    %3140 = vmatmul.mubr.f32.gmra.mxu0 %v2990
    %v3141 = vpop.f32.mrf.mxu0
    %v3142 = vadd.f32 0.0, %v3141
    %v3143 = vpop.f32.mrf.mxu0
    %3144 = vmatprep.mubr.f32.mxu0 0.0
    %3145 = vmatmul.mubr.f32.gmra.mxu0 %v2993
    %v3146 = vpop.f32.mrf.mxu0
    %v3147 = vadd.f32 0.0, %v3146
    %v3148 = vpop.f32.mrf.mxu0
    %3149 = vmatprep.mubr.f32.mxu0 0.0
    %3150 = vmatmul.mubr.f32.gmra.mxu0 %v2996
    %v3151 = vpop.f32.mrf.mxu0
    %v3152 = vadd.f32 0.0, %v3151
    %v3153 = vpop.f32.mrf.mxu0
    %3154 = vmatprep.mubr.f32.mxu0 0.0
    %3155 = vmatmul.mubr.f32.gmra.mxu0 %v2999
    %v3156 = vpop.f32.mrf.mxu0
    %v3157 = vadd.f32 0.0, %v3156
    %v3158 = vpop.f32.mrf.mxu0
    %3159 = vmatprep.mubr.f32.mxu0 0.0
    %3160 = vmatmul.mubr.f32.gmra.mxu0 %v3002
    %v3161 = vpop.f32.mrf.mxu0
    %v3162 = vadd.f32 0.0, %v3161
    %v3163 = vpop.f32.mrf.mxu0
    %3164 = vmatprep.mubr.f32.mxu0 0.0
    %3165 = vmatmul.mubr.f32.gmra.mxu0 %v3005
    %v3166 = vpop.f32.mrf.mxu0
    %v3167 = vadd.f32 0.0, %v3166
    %v3168 = vpop.f32.mrf.mxu0
    %3169 = vmatprep.mubr.f32.mxu0 0.0
    %3170 = vmatmul.mubr.f32.gmra.mxu0 %v3008
    %v3171 = vpop.f32.mrf.mxu0
    %v3172 = vadd.f32 0.0, %v3171
    %v3173 = vpop.f32.mrf.mxu0
    %3174 = vmatprep.mubr.f32.mxu0 0.0
    %3175 = vmatmul.mubr.f32.gmra.mxu0 %v3011
    %v3176 = vpop.f32.mrf.mxu0
    %v3177 = vadd.f32 0.0, %v3176
    %v3178 = vpop.f32.mrf.mxu0
    %3179 = vmatprep.mubr.f32.mxu0 0.0
    %3180 = vmatmul.mubr.f32.gmra.mxu0 %v3014
    %v3181 = vpop.f32.mrf.mxu0
    %v3182 = vadd.f32 0.0, %v3181
    %v3183 = vpop.f32.mrf.mxu0
    %3184 = vmatprep.mubr.f32.mxu0 0.0
    %3185 = vmatmul.mubr.f32.gmra.mxu0 %v3017
    %v3186 = vpop.f32.mrf.mxu0
    %v3187 = vadd.f32 0.0, %v3186
    %v3188 = vpop.f32.mrf.mxu0
    %3189 = vmatprep.mubr.f32.mxu0 0.0
    %3190 = vmatmul.mubr.f32.gmra.mxu0 %v3020
    %v3191 = vpop.f32.mrf.mxu0
    %v3192 = vadd.f32 0.0, %v3191
    %v3193 = vpop.f32.mrf.mxu0
    %3194 = vmatprep.mubr.f32.mxu0 0.0
    %3195 = vmatmul.mubr.f32.gmra.mxu0 %v3023
    %v3196 = vpop.f32.mrf.mxu0
    %v3197 = vadd.f32 0.0, %v3196
    %v3198 = vpop.f32.mrf.mxu0
    %3199 = vmatprep.mubr.f32.mxu0 0.0
    %3200 = vmatmul.mubr.f32.gmra.mxu0 %v3026
    %v3201 = vpop.f32.mrf.mxu0
    %v3202 = vadd.f32 0.0, %v3201
    %v3203 = vpop.f32.mrf.mxu0
    %3204 = vmatprep.mubr.f32.mxu0 0.0
    %3205 = vmatmul.mubr.f32.gmra.mxu0 %v3029
    %v3206 = vpop.f32.mrf.mxu0
    %v3207 = vadd.f32 0.0, %v3206
    %v3208 = vpop.f32.mrf.mxu0
    %3209 = vmatprep.mubr.f32.mxu0 0.0
    %3210 = vmatmul.mubr.f32.gmra.mxu0 %v3032
    %v3211 = vpop.f32.mrf.mxu0
    %v3212 = vadd.f32 0.0, %v3211
    %v3213 = vpop.f32.mrf.mxu0
    %3214 = vmatprep.mubr.f32.mxu0 0.0
    %3215 = vmatmul.mubr.f32.gmra.mxu0 %v3035
    %v3216 = vpop.f32.mrf.mxu0
    %v3217 = vadd.f32 0.0, %v3216
    %v3218 = vpop.f32.mrf.mxu0
    %3219 = vmatprep.mubr.f32.mxu0 0.0
    %3220 = vmatmul.mubr.f32.gmra.mxu0 %v3038
    %v3221 = vpop.f32.mrf.mxu0
    %v3222 = vadd.f32 0.0, %v3221
    %v3223 = vpop.f32.mrf.mxu0
    %3224 = vdwg.mxu0
    %v3225 = vadd.f32 %v2915, %v3107
    %v3226 = vadd.f32 %v2916, %v3112
    %v3227 = vadd.f32 %v2917, %v3117
    %v3228 = vadd.f32 %v2918, %v3122
    %v3229 = vadd.f32 %v2919, %v3127
    %v3230 = vadd.f32 %v2920, %v3132
    %v3231 = vadd.f32 %v2921, %v3137
    %v3232 = vadd.f32 %v2922, %v3142
    %v3233 = vadd.f32 %v2923, %v3147
    %v3234 = vadd.f32 %v2924, %v3152
    %v3235 = vadd.f32 %v2925, %v3157
    %v3236 = vadd.f32 %v2926, %v3162
    %v3237 = vadd.f32 %v2927, %v3167
    %v3238 = vadd.f32 %v2928, %v3172
    %v3239 = vadd.f32 %v2929, %v3177
    %v3240 = vadd.f32 %v2930, %v3182
    %v3241 = vadd.f32 %v2931, %v3187
    %v3242 = vadd.f32 %v2932, %v3192
    %v3243 = vadd.f32 %v2933, %v3197
    %v3244 = vadd.f32 %v2934, %v3202
    %v3245 = vadd.f32 %v2935, %v3207
    %v3246 = vadd.f32 %v2936, %v3212
    %v3247 = vadd.f32 %v2937, %v3217
    %v3248 = vadd.f32 %v2938, %v3222
    %v3249 = vld [vmem:[%s4] sm:$0x1]
    %v3251 = vlaneseq
    %v3252 = vshrl.u32 %v3251, 7
    %v3253 = vsub.s32 0, %v3252
    %v3254 = vrot.slane %v3249, %v3253
    %v3256 = vadd.f32 %v3225, %v3254
    %v3257 = vadd.f32 %v3226, %v3254
    %v3258 = vadd.f32 %v3227, %v3254
    %v3259 = vadd.f32 %v3228, %v3254
    %v3260 = vadd.f32 %v3229, %v3254
    %v3261 = vadd.f32 %v3230, %v3254
    %v3262 = vadd.f32 %v3231, %v3254
    %v3263 = vadd.f32 %v3232, %v3254
    %v3264 = vadd.f32 %v3233, %v3254
    %v3265 = vadd.f32 %v3234, %v3254
    %v3266 = vadd.f32 %v3235, %v3254
    %v3267 = vadd.f32 %v3236, %v3254
    %v3268 = vadd.f32 %v3237, %v3254
    %v3269 = vadd.f32 %v3238, %v3254
    %v3270 = vadd.f32 %v3239, %v3254
    %v3271 = vadd.f32 %v3240, %v3254
    %v3272 = vadd.f32 %v3241, %v3254
    %v3273 = vadd.f32 %v3242, %v3254
    %v3274 = vadd.f32 %v3243, %v3254
    %v3275 = vadd.f32 %v3244, %v3254
    %v3276 = vadd.f32 %v3245, %v3254
    %v3277 = vadd.f32 %v3246, %v3254
    %v3278 = vadd.f32 %v3247, %v3254
    %v3279 = vadd.f32 %v3248, %v3254
    %v3280 = vmax.f32 %v3256, 0.0
    %v3281 = vmax.f32 %v3257, 0.0
    %v3282 = vmax.f32 %v3258, 0.0
    %v3283 = vmax.f32 %v3259, 0.0
    %v3284 = vmax.f32 %v3260, 0.0
    %v3285 = vmax.f32 %v3261, 0.0
    %v3286 = vmax.f32 %v3262, 0.0
    %v3287 = vmax.f32 %v3263, 0.0
    %v3288 = vmax.f32 %v3264, 0.0
    %v3289 = vmax.f32 %v3265, 0.0
    %v3290 = vmax.f32 %v3266, 0.0
    %v3291 = vmax.f32 %v3267, 0.0
    %v3292 = vmax.f32 %v3268, 0.0
    %v3293 = vmax.f32 %v3269, 0.0
    %v3294 = vmax.f32 %v3270, 0.0
    %v3295 = vmax.f32 %v3271, 0.0
    %v3296 = vmax.f32 %v3272, 0.0
    %v3297 = vmax.f32 %v3273, 0.0
    %v3298 = vmax.f32 %v3274, 0.0
    %v3299 = vmax.f32 %v3275, 0.0
    %v3300 = vmax.f32 %v3276, 0.0
    %v3301 = vmax.f32 %v3277, 0.0
    %v3302 = vmax.f32 %v3278, 0.0
    %v3303 = vmax.f32 %v3279, 0.0
    %3304 = vst.msk [vmem:[#allocation4] sm:$0xff] %vm1268, %v3280
    %3305 = vst.msk [vmem:[#allocation4 + $0x8] sm:$0xff] %vm1268, %v3281
    %3306 = vst.msk [vmem:[#allocation4 + $0x10] sm:$0xff] %vm1268, %v3282
    %3307 = vst.msk [vmem:[#allocation4 + $0x18] sm:$0xff] %vm1268, %v3283
    %3308 = vst.msk [vmem:[#allocation4 + $0x20] sm:$0xff] %vm1268, %v3284
    %3309 = vst.msk [vmem:[#allocation4 + $0x28] sm:$0xff] %vm1268, %v3285
    %3310 = vst.msk [vmem:[#allocation4 + $0x30] sm:$0xff] %vm1268, %v3286
    %3311 = vst.msk [vmem:[#allocation4 + $0x38] sm:$0xff] %vm1268, %v3287
    %3312 = vst.msk [vmem:[#allocation4 + $0x40] sm:$0xff] %vm1268, %v3288
    %3313 = vst.msk [vmem:[#allocation4 + $0x48] sm:$0xff] %vm1268, %v3289
    %3314 = vst.msk [vmem:[#allocation4 + $0x50] sm:$0xff] %vm1268, %v3290
    %3315 = vst.msk [vmem:[#allocation4 + $0x58] sm:$0xff] %vm1268, %v3291
    %3316 = vst.msk [vmem:[#allocation4 + $0x60] sm:$0xff] %vm1268, %v3292
    %3317 = vst.msk [vmem:[#allocation4 + $0x68] sm:$0xff] %vm1268, %v3293
    %3318 = vst.msk [vmem:[#allocation4 + $0x70] sm:$0xff] %vm1268, %v3294
    %3319 = vst.msk [vmem:[#allocation4 + $0x78] sm:$0xff] %vm1268, %v3295
    %3320 = vst.msk [vmem:[#allocation4 + $0x80] sm:$0xff] %vm1268, %v3296
    %3321 = vst.msk [vmem:[#allocation4 + $0x88] sm:$0xff] %vm1268, %v3297
    %3322 = vst.msk [vmem:[#allocation4 + $0x90] sm:$0xff] %vm1268, %v3298
    %3323 = vst.msk [vmem:[#allocation4 + $0x98] sm:$0xff] %vm1268, %v3299
    %3324 = vst.msk [vmem:[#allocation4 + $0xa0] sm:$0xff] %vm1268, %v3300
    %3325 = vst.msk [vmem:[#allocation4 + $0xa8] sm:$0xff] %vm1268, %v3301
    %3326 = vst.msk [vmem:[#allocation4 + $0xb0] sm:$0xff] %vm1268, %v3302
    %3327 = vst.msk [vmem:[#allocation4 + $0xb8] sm:$0xff] %vm1268, %v3303
    %v3328 = vld [vmem:[#allocation4] ss:$3 sm:$0xff]
    %s3329 = scalar_lea.vmem [#allocation4], 24
    %v3330 = vld [vmem:[%s3329] ss:$3 sm:$0xff]
    %s3331 = scalar_lea.vmem [#allocation4], 48
    %v3332 = vld [vmem:[%s3331] ss:$3 sm:$0xff]
    %s3333 = scalar_lea.vmem [#allocation4], 72
    %v3334 = vld [vmem:[%s3333] ss:$3 sm:$0xff]
    %s3335 = scalar_lea.vmem [#allocation4], 96
    %v3336 = vld [vmem:[%s3335] ss:$3 sm:$0xff]
    %s3337 = scalar_lea.vmem [#allocation4], 120
    %v3338 = vld [vmem:[%s3337] ss:$3 sm:$0xff]
    %s3339 = scalar_lea.vmem [#allocation4], 144
    %v3340 = vld [vmem:[%s3339] ss:$3 sm:$0xff]
    %s3341 = scalar_lea.vmem [#allocation4], 168
    %v3342 = vld [vmem:[%s3341] ss:$3 sm:$0xff]
    %s3343 = scalar_lea.vmem [#allocation4], 1
    %v3344 = vld [vmem:[%s3343] ss:$3 sm:$0xff]
    %s3345 = scalar_lea.vmem [#allocation4], 25
    %v3346 = vld [vmem:[%s3345] ss:$3 sm:$0xff]
    %s3347 = scalar_lea.vmem [#allocation4], 49
    %v3348 = vld [vmem:[%s3347] ss:$3 sm:$0xff]
    %s3349 = scalar_lea.vmem [#allocation4], 73
    %v3350 = vld [vmem:[%s3349] ss:$3 sm:$0xff]
    %s3351 = scalar_lea.vmem [#allocation4], 97
    %v3352 = vld [vmem:[%s3351] ss:$3 sm:$0xff]
    %s3353 = scalar_lea.vmem [#allocation4], 121
    %v3354 = vld [vmem:[%s3353] ss:$3 sm:$0xff]
    %s3355 = scalar_lea.vmem [#allocation4], 145
    %v3356 = vld [vmem:[%s3355] ss:$3 sm:$0xff]
    %s3357 = scalar_lea.vmem [#allocation4], 169
    %v3358 = vld [vmem:[%s3357] ss:$3 sm:$0xff]
    %v3359 = vmax.f32 %v3328, %v3344
    %v3360 = vmax.f32 %v3330, %v3346
    %v3361 = vmax.f32 %v3332, %v3348
    %v3362 = vmax.f32 %v3334, %v3350
    %v3363 = vmax.f32 %v3336, %v3352
    %v3364 = vmax.f32 %v3338, %v3354
    %v3365 = vmax.f32 %v3340, %v3356
    %v3366 = vmax.f32 %v3342, %v3358
    %s3367 = scalar_lea.vmem [#allocation4], 2
    %v3368 = vld [vmem:[%s3367] ss:$3 sm:$0xff]
    %s3369 = scalar_lea.vmem [#allocation4], 26
    %v3370 = vld [vmem:[%s3369] ss:$3 sm:$0xff]
    %s3371 = scalar_lea.vmem [#allocation4], 50
    %v3372 = vld [vmem:[%s3371] ss:$3 sm:$0xff]
    %s3373 = scalar_lea.vmem [#allocation4], 74
    %v3374 = vld [vmem:[%s3373] ss:$3 sm:$0xff]
    %s3375 = scalar_lea.vmem [#allocation4], 98
    %v3376 = vld [vmem:[%s3375] ss:$3 sm:$0xff]
    %s3377 = scalar_lea.vmem [#allocation4], 122
    %v3378 = vld [vmem:[%s3377] ss:$3 sm:$0xff]
    %s3379 = scalar_lea.vmem [#allocation4], 146
    %v3380 = vld [vmem:[%s3379] ss:$3 sm:$0xff]
    %s3381 = scalar_lea.vmem [#allocation4], 170
    %v3382 = vld [vmem:[%s3381] ss:$3 sm:$0xff]
    %v3383 = vmax.f32 %v3359, %v3368
    %v3384 = vmax.f32 %v3360, %v3370
    %v3385 = vmax.f32 %v3361, %v3372
    %v3386 = vmax.f32 %v3362, %v3374
    %v3387 = vmax.f32 %v3363, %v3376
    %v3388 = vmax.f32 %v3364, %v3378
    %v3389 = vmax.f32 %v3365, %v3380
    %v3390 = vmax.f32 %v3366, %v3382
    %3391 = vst.msk [vmem:[#allocation5] sm:$0xff] %vm1268, %v3383
    %3392 = vst.msk [vmem:[#allocation5 + $0x8] sm:$0xff] %vm1268, %v3384
    %3393 = vst.msk [vmem:[#allocation5 + $0x10] sm:$0xff] %vm1268, %v3385
    %3394 = vst.msk [vmem:[#allocation5 + $0x18] sm:$0xff] %vm1268, %v3386
    %3395 = vst.msk [vmem:[#allocation5 + $0x20] sm:$0xff] %vm1268, %v3387
    %3396 = vst.msk [vmem:[#allocation5 + $0x28] sm:$0xff] %vm1268, %v3388
    %3397 = vst.msk [vmem:[#allocation5 + $0x30] sm:$0xff] %vm1268, %v3389
    %3398 = vst.msk [vmem:[#allocation5 + $0x38] sm:$0xff] %vm1268, %v3390
    %v3399 = vld [vmem:[#allocation5] ss:$8 sm:$0xf]
    %v3400 = vld [vmem:[#allocation5] ss:$8 sm:$0xf0]
    %v3401 = vor.u32 %v3399, %v3400
    %v3402 = vld [vmem:[#allocation11] sm:$0xff]
    %v3403 = vld [vmem:[#allocation11 + $0x8] sm:$0xff]
    %v3404 = vld [vmem:[#allocation11 + $0x10] sm:$0xff]
    %v3405 = vld [vmem:[#allocation11 + $0x18] sm:$0xff]
    %v3406 = vld [vmem:[#allocation11 + $0x20] sm:$0xff]
    %v3407 = vld [vmem:[#allocation11 + $0x28] sm:$0xff]
    %v3408 = vld [vmem:[#allocation11 + $0x30] sm:$0xff]
    %v3409 = vld [vmem:[#allocation11 + $0x38] sm:$0xff]
    %s3410 = scalar_lea.vmem [#allocation5], 1
    %v3411 = vld [vmem:[%s3410] ss:$8 sm:$0xf]
    %v3412 = vld [vmem:[%s3410] ss:$8 sm:$0xf0]
    %v3413 = vor.u32 %v3411, %v3412
    %s3414 = scalar_lea.vmem [#allocation11], 64
    %v3415 = vld [vmem:[%s3414] sm:$0xff]
    %v3416 = vld [vmem:[%s3414 + $0x8] sm:$0xff]
    %v3417 = vld [vmem:[%s3414 + $0x10] sm:$0xff]
    %v3418 = vld [vmem:[%s3414 + $0x18] sm:$0xff]
    %v3419 = vld [vmem:[%s3414 + $0x20] sm:$0xff]
    %v3420 = vld [vmem:[%s3414 + $0x28] sm:$0xff]
    %v3421 = vld [vmem:[%s3414 + $0x30] sm:$0xff]
    %v3422 = vld [vmem:[%s3414 + $0x38] sm:$0xff]
    %v3424 = vsel %vm1268, %v3413, 0
    %3426 = vmatprep.subr.mxu0 0.0
    %3427 = vmatpush1.msra.mxu0 0.0
    %3428 = vmatprep.subr.mxu0 0.0
    %3429 = vmatpush1.msra.mxu0 0.0
    %3430 = vmatprep.subr.mxu0 0.0
    %3431 = vmatpush1.msra.mxu0 0.0
    %3432 = vmatprep.subr.mxu0 0.0
    %3433 = vmatpush1.msra.mxu0 0.0
    %3434 = vmatprep.subr.mxu0 0.0
    %3435 = vmatpush1.msra.mxu0 0.0
    %3436 = vmatprep.subr.mxu0 0.0
    %3437 = vmatpush1.msra.mxu0 0.0
    %3438 = vmatprep.subr.mxu0 0.0
    %3439 = vmatpush1.msra.mxu0 0.0
    %3440 = vmatprep.subr.mxu0 0.0
    %3441 = vmatpush1.msra.mxu0 0.0
    %3442 = vmatprep.subr.mxu0 0.0
    %3443 = vmatpush1.msra.mxu0 0.0
    %3444 = vmatprep.subr.mxu0 0.0
    %3445 = vmatpush1.msra.mxu0 0.0
    %3446 = vmatprep.subr.mxu0 0.0
    %3447 = vmatpush1.msra.mxu0 0.0
    %3448 = vmatprep.subr.mxu0 0.0
    %3449 = vmatpush1.msra.mxu0 0.0
    %3450 = vmatprep.subr.mxu0 %v3422
    %3451 = vmatpush1.msra.mxu0 %v3421
    %3452 = vmatprep.subr.mxu0 %v3420
    %3453 = vmatpush1.msra.mxu0 %v3419
    %3454 = vmatprep.subr.mxu0 %v3418
    %3455 = vmatpush1.msra.mxu0 %v3417
    %3456 = vmatprep.subr.mxu0 %v3416
    %3457 = vmatpush1.msra.mxu0 %v3415
    %3458 = vmatprep.subr.mxu0 0.0
    %3459 = vmatpush2.msra.mxu0 0.0
    %3460 = vmatprep.subr.mxu0 0.0
    %3461 = vmatpush2.msra.mxu0 0.0
    %3462 = vmatprep.subr.mxu0 0.0
    %3463 = vmatpush2.msra.mxu0 0.0
    %3464 = vmatprep.subr.mxu0 0.0
    %3465 = vmatpush2.msra.mxu0 0.0
    %3466 = vmatprep.subr.mxu0 0.0
    %3467 = vmatpush2.msra.mxu0 0.0
    %3468 = vmatprep.subr.mxu0 0.0
    %3469 = vmatpush2.msra.mxu0 0.0
    %3470 = vmatprep.subr.mxu0 0.0
    %3471 = vmatpush2.msra.mxu0 0.0
    %3472 = vmatprep.subr.mxu0 0.0
    %3473 = vmatpush2.msra.mxu0 0.0
    %3474 = vmatprep.subr.mxu0 0.0
    %3475 = vmatpush2.msra.mxu0 0.0
    %3476 = vmatprep.subr.mxu0 0.0
    %3477 = vmatpush2.msra.mxu0 0.0
    %3478 = vmatprep.subr.mxu0 0.0
    %3479 = vmatpush2.msra.mxu0 0.0
    %3480 = vmatprep.subr.mxu0 0.0
    %3481 = vmatpush2.msra.mxu0 0.0
    %3482 = vmatprep.subr.mxu0 0.0
    %3483 = vmatpush2.msra.mxu0 0.0
    %3484 = vmatprep.subr.mxu0 0.0
    %3485 = vmatpush2.msra.mxu0 0.0
    %3486 = vmatprep.subr.mxu0 0.0
    %3487 = vmatpush2.msra.mxu0 0.0
    %3488 = vmatprep.subr.mxu0 0.0
    %3489 = vmatpush2.msra.mxu0 0.0
    %3490 = vmatprep.mubr.f32.mxu0 0.0
    %3491 = vmatmul.mubr.f32.gmra.mxu0 %v3424
    %v3492 = vpop.f32.mrf.mxu0
    %v3493 = vadd.f32 0.0, %v3492
    %v3494 = vpop.f32.mrf.mxu0
    %v3495 = vadd.f32 0.0, %v3494
    %3496 = vdwg.mxu0
    %v3498 = vsel %vm1268, %v3401, 0
    %3500 = vmatprep.subr.mxu0 0.0
    %3501 = vmatpush1.msra.mxu0 0.0
    %3502 = vmatprep.subr.mxu0 0.0
    %3503 = vmatpush1.msra.mxu0 0.0
    %3504 = vmatprep.subr.mxu0 0.0
    %3505 = vmatpush1.msra.mxu0 0.0
    %3506 = vmatprep.subr.mxu0 0.0
    %3507 = vmatpush1.msra.mxu0 0.0
    %3508 = vmatprep.subr.mxu0 0.0
    %3509 = vmatpush1.msra.mxu0 0.0
    %3510 = vmatprep.subr.mxu0 0.0
    %3511 = vmatpush1.msra.mxu0 0.0
    %3512 = vmatprep.subr.mxu0 0.0
    %3513 = vmatpush1.msra.mxu0 0.0
    %3514 = vmatprep.subr.mxu0 0.0
    %3515 = vmatpush1.msra.mxu0 0.0
    %3516 = vmatprep.subr.mxu0 0.0
    %3517 = vmatpush1.msra.mxu0 0.0
    %3518 = vmatprep.subr.mxu0 0.0
    %3519 = vmatpush1.msra.mxu0 0.0
    %3520 = vmatprep.subr.mxu0 0.0
    %3521 = vmatpush1.msra.mxu0 0.0
    %3522 = vmatprep.subr.mxu0 0.0
    %3523 = vmatpush1.msra.mxu0 0.0
    %3524 = vmatprep.subr.mxu0 %v3409
    %3525 = vmatpush1.msra.mxu0 %v3408
    %3526 = vmatprep.subr.mxu0 %v3407
    %3527 = vmatpush1.msra.mxu0 %v3406
    %3528 = vmatprep.subr.mxu0 %v3405
    %3529 = vmatpush1.msra.mxu0 %v3404
    %3530 = vmatprep.subr.mxu0 %v3403
    %3531 = vmatpush1.msra.mxu0 %v3402
    %3532 = vmatprep.subr.mxu0 0.0
    %3533 = vmatpush2.msra.mxu0 0.0
    %3534 = vmatprep.subr.mxu0 0.0
    %3535 = vmatpush2.msra.mxu0 0.0
    %3536 = vmatprep.subr.mxu0 0.0
    %3537 = vmatpush2.msra.mxu0 0.0
    %3538 = vmatprep.subr.mxu0 0.0
    %3539 = vmatpush2.msra.mxu0 0.0
    %3540 = vmatprep.subr.mxu0 0.0
    %3541 = vmatpush2.msra.mxu0 0.0
    %3542 = vmatprep.subr.mxu0 0.0
    %3543 = vmatpush2.msra.mxu0 0.0
    %3544 = vmatprep.subr.mxu0 0.0
    %3545 = vmatpush2.msra.mxu0 0.0
    %3546 = vmatprep.subr.mxu0 0.0
    %3547 = vmatpush2.msra.mxu0 0.0
    %3548 = vmatprep.subr.mxu0 0.0
    %3549 = vmatpush2.msra.mxu0 0.0
    %3550 = vmatprep.subr.mxu0 0.0
    %3551 = vmatpush2.msra.mxu0 0.0
    %3552 = vmatprep.subr.mxu0 0.0
    %3553 = vmatpush2.msra.mxu0 0.0
    %3554 = vmatprep.subr.mxu0 0.0
    %3555 = vmatpush2.msra.mxu0 0.0
    %3556 = vmatprep.subr.mxu0 0.0
    %3557 = vmatpush2.msra.mxu0 0.0
    %3558 = vmatprep.subr.mxu0 0.0
    %3559 = vmatpush2.msra.mxu0 0.0
    %3560 = vmatprep.subr.mxu0 0.0
    %3561 = vmatpush2.msra.mxu0 0.0
    %3562 = vmatprep.subr.mxu0 0.0
    %3563 = vmatpush2.msra.mxu0 0.0
    %3564 = vmatprep.mubr.f32.mxu0 0.0
    %3565 = vmatmul.mubr.f32.gmra.mxu0 %v3498
    %v3566 = vpop.f32.mrf.mxu0
    %v3567 = vadd.f32 %v3493, %v3566
    %v3568 = vpop.f32.mrf.mxu0
    %v3569 = vadd.f32 %v3495, %v3568
    %3570 = vdwg.mxu0
    %s3571 = scalar_lea.vmem [#allocation5], 2
    %v3572 = vld [vmem:[%s3571] ss:$8 sm:$0xf]
    %v3573 = vld [vmem:[%s3571] ss:$8 sm:$0xf0]
    %v3574 = vor.u32 %v3572, %v3573
    %s3575 = scalar_lea.vmem [#allocation11], 128
    %v3576 = vld [vmem:[%s3575] sm:$0xff]
    %v3577 = vld [vmem:[%s3575 + $0x8] sm:$0xff]
    %v3578 = vld [vmem:[%s3575 + $0x10] sm:$0xff]
    %v3579 = vld [vmem:[%s3575 + $0x18] sm:$0xff]
    %v3580 = vld [vmem:[%s3575 + $0x20] sm:$0xff]
    %v3581 = vld [vmem:[%s3575 + $0x28] sm:$0xff]
    %v3582 = vld [vmem:[%s3575 + $0x30] sm:$0xff]
    %v3583 = vld [vmem:[%s3575 + $0x38] sm:$0xff]
    %v3585 = vsel %vm1268, %v3574, 0
    %3587 = vmatprep.subr.mxu0 0.0
    %3588 = vmatpush1.msra.mxu0 0.0
    %3589 = vmatprep.subr.mxu0 0.0
    %3590 = vmatpush1.msra.mxu0 0.0
    %3591 = vmatprep.subr.mxu0 0.0
    %3592 = vmatpush1.msra.mxu0 0.0
    %3593 = vmatprep.subr.mxu0 0.0
    %3594 = vmatpush1.msra.mxu0 0.0
    %3595 = vmatprep.subr.mxu0 0.0
    %3596 = vmatpush1.msra.mxu0 0.0
    %3597 = vmatprep.subr.mxu0 0.0
    %3598 = vmatpush1.msra.mxu0 0.0
    %3599 = vmatprep.subr.mxu0 0.0
    %3600 = vmatpush1.msra.mxu0 0.0
    %3601 = vmatprep.subr.mxu0 0.0
    %3602 = vmatpush1.msra.mxu0 0.0
    %3603 = vmatprep.subr.mxu0 0.0
    %3604 = vmatpush1.msra.mxu0 0.0
    %3605 = vmatprep.subr.mxu0 0.0
    %3606 = vmatpush1.msra.mxu0 0.0
    %3607 = vmatprep.subr.mxu0 0.0
    %3608 = vmatpush1.msra.mxu0 0.0
    %3609 = vmatprep.subr.mxu0 0.0
    %3610 = vmatpush1.msra.mxu0 0.0
    %3611 = vmatprep.subr.mxu0 %v3583
    %3612 = vmatpush1.msra.mxu0 %v3582
    %3613 = vmatprep.subr.mxu0 %v3581
    %3614 = vmatpush1.msra.mxu0 %v3580
    %3615 = vmatprep.subr.mxu0 %v3579
    %3616 = vmatpush1.msra.mxu0 %v3578
    %3617 = vmatprep.subr.mxu0 %v3577
    %3618 = vmatpush1.msra.mxu0 %v3576
    %3619 = vmatprep.subr.mxu0 0.0
    %3620 = vmatpush2.msra.mxu0 0.0
    %3621 = vmatprep.subr.mxu0 0.0
    %3622 = vmatpush2.msra.mxu0 0.0
    %3623 = vmatprep.subr.mxu0 0.0
    %3624 = vmatpush2.msra.mxu0 0.0
    %3625 = vmatprep.subr.mxu0 0.0
    %3626 = vmatpush2.msra.mxu0 0.0
    %3627 = vmatprep.subr.mxu0 0.0
    %3628 = vmatpush2.msra.mxu0 0.0
    %3629 = vmatprep.subr.mxu0 0.0
    %3630 = vmatpush2.msra.mxu0 0.0
    %3631 = vmatprep.subr.mxu0 0.0
    %3632 = vmatpush2.msra.mxu0 0.0
    %3633 = vmatprep.subr.mxu0 0.0
    %3634 = vmatpush2.msra.mxu0 0.0
    %3635 = vmatprep.subr.mxu0 0.0
    %3636 = vmatpush2.msra.mxu0 0.0
    %3637 = vmatprep.subr.mxu0 0.0
    %3638 = vmatpush2.msra.mxu0 0.0
    %3639 = vmatprep.subr.mxu0 0.0
    %3640 = vmatpush2.msra.mxu0 0.0
    %3641 = vmatprep.subr.mxu0 0.0
    %3642 = vmatpush2.msra.mxu0 0.0
    %3643 = vmatprep.subr.mxu0 0.0
    %3644 = vmatpush2.msra.mxu0 0.0
    %3645 = vmatprep.subr.mxu0 0.0
    %3646 = vmatpush2.msra.mxu0 0.0
    %3647 = vmatprep.subr.mxu0 0.0
    %3648 = vmatpush2.msra.mxu0 0.0
    %3649 = vmatprep.subr.mxu0 0.0
    %3650 = vmatpush2.msra.mxu0 0.0
    %3651 = vmatprep.mubr.f32.mxu0 0.0
    %3652 = vmatmul.mubr.f32.gmra.mxu0 %v3585
    %v3653 = vpop.f32.mrf.mxu0
    %v3654 = vadd.f32 0.0, %v3653
    %v3655 = vpop.f32.mrf.mxu0
    %v3656 = vadd.f32 0.0, %v3655
    %3657 = vdwg.mxu0
    %v3658 = vadd.f32 %v3567, %v3654
    %v3659 = vadd.f32 %v3569, %v3656
    %s3660 = scalar_lea.vmem [#allocation5], 3
    %v3661 = vld [vmem:[%s3660] ss:$8 sm:$0xf]
    %v3662 = vld [vmem:[%s3660] ss:$8 sm:$0xf0]
    %v3663 = vor.u32 %v3661, %v3662
    %s3664 = scalar_lea.vmem [#allocation11], 192
    %v3665 = vld [vmem:[%s3664] sm:$0xff]
    %v3666 = vld [vmem:[%s3664 + $0x8] sm:$0xff]
    %v3667 = vld [vmem:[%s3664 + $0x10] sm:$0xff]
    %v3668 = vld [vmem:[%s3664 + $0x18] sm:$0xff]
    %v3669 = vld [vmem:[%s3664 + $0x20] sm:$0xff]
    %v3670 = vld [vmem:[%s3664 + $0x28] sm:$0xff]
    %v3671 = vld [vmem:[%s3664 + $0x30] sm:$0xff]
    %v3672 = vld [vmem:[%s3664 + $0x38] sm:$0xff]
    %v3674 = vsel %vm1268, %v3663, 0
    %3676 = vmatprep.subr.mxu0 0.0
    %3677 = vmatpush1.msra.mxu0 0.0
    %3678 = vmatprep.subr.mxu0 0.0
    %3679 = vmatpush1.msra.mxu0 0.0
    %3680 = vmatprep.subr.mxu0 0.0
    %3681 = vmatpush1.msra.mxu0 0.0
    %3682 = vmatprep.subr.mxu0 0.0
    %3683 = vmatpush1.msra.mxu0 0.0
    %3684 = vmatprep.subr.mxu0 0.0
    %3685 = vmatpush1.msra.mxu0 0.0
    %3686 = vmatprep.subr.mxu0 0.0
    %3687 = vmatpush1.msra.mxu0 0.0
    %3688 = vmatprep.subr.mxu0 0.0
    %3689 = vmatpush1.msra.mxu0 0.0
    %3690 = vmatprep.subr.mxu0 0.0
    %3691 = vmatpush1.msra.mxu0 0.0
    %3692 = vmatprep.subr.mxu0 0.0
    %3693 = vmatpush1.msra.mxu0 0.0
    %3694 = vmatprep.subr.mxu0 0.0
    %3695 = vmatpush1.msra.mxu0 0.0
    %3696 = vmatprep.subr.mxu0 0.0
    %3697 = vmatpush1.msra.mxu0 0.0
    %3698 = vmatprep.subr.mxu0 0.0
    %3699 = vmatpush1.msra.mxu0 0.0
    %3700 = vmatprep.subr.mxu0 %v3672
    %3701 = vmatpush1.msra.mxu0 %v3671
    %3702 = vmatprep.subr.mxu0 %v3670
    %3703 = vmatpush1.msra.mxu0 %v3669
    %3704 = vmatprep.subr.mxu0 %v3668
    %3705 = vmatpush1.msra.mxu0 %v3667
    %3706 = vmatprep.subr.mxu0 %v3666
    %3707 = vmatpush1.msra.mxu0 %v3665
    %3708 = vmatprep.subr.mxu0 0.0
    %3709 = vmatpush2.msra.mxu0 0.0
    %3710 = vmatprep.subr.mxu0 0.0
    %3711 = vmatpush2.msra.mxu0 0.0
    %3712 = vmatprep.subr.mxu0 0.0
    %3713 = vmatpush2.msra.mxu0 0.0
    %3714 = vmatprep.subr.mxu0 0.0
    %3715 = vmatpush2.msra.mxu0 0.0
    %3716 = vmatprep.subr.mxu0 0.0
    %3717 = vmatpush2.msra.mxu0 0.0
    %3718 = vmatprep.subr.mxu0 0.0
    %3719 = vmatpush2.msra.mxu0 0.0
    %3720 = vmatprep.subr.mxu0 0.0
    %3721 = vmatpush2.msra.mxu0 0.0
    %3722 = vmatprep.subr.mxu0 0.0
    %3723 = vmatpush2.msra.mxu0 0.0
    %3724 = vmatprep.subr.mxu0 0.0
    %3725 = vmatpush2.msra.mxu0 0.0
    %3726 = vmatprep.subr.mxu0 0.0
    %3727 = vmatpush2.msra.mxu0 0.0
    %3728 = vmatprep.subr.mxu0 0.0
    %3729 = vmatpush2.msra.mxu0 0.0
    %3730 = vmatprep.subr.mxu0 0.0
    %3731 = vmatpush2.msra.mxu0 0.0
    %3732 = vmatprep.subr.mxu0 0.0
    %3733 = vmatpush2.msra.mxu0 0.0
    %3734 = vmatprep.subr.mxu0 0.0
    %3735 = vmatpush2.msra.mxu0 0.0
    %3736 = vmatprep.subr.mxu0 0.0
    %3737 = vmatpush2.msra.mxu0 0.0
    %3738 = vmatprep.subr.mxu0 0.0
    %3739 = vmatpush2.msra.mxu0 0.0
    %3740 = vmatprep.mubr.f32.mxu0 0.0
    %3741 = vmatmul.mubr.f32.gmra.mxu0 %v3674
    %v3742 = vpop.f32.mrf.mxu0
    %v3743 = vadd.f32 0.0, %v3742
    %v3744 = vpop.f32.mrf.mxu0
    %v3745 = vadd.f32 0.0, %v3744
    %3746 = vdwg.mxu0
    %v3747 = vadd.f32 %v3658, %v3743
    %v3748 = vadd.f32 %v3659, %v3745
    %s3749 = scalar_lea.vmem [#allocation5], 4
    %v3750 = vld [vmem:[%s3749] ss:$8 sm:$0xf]
    %v3751 = vld [vmem:[%s3749] ss:$8 sm:$0xf0]
    %v3752 = vor.u32 %v3750, %v3751
    %s3753 = scalar_lea.vmem [#allocation11], 256
    %v3754 = vld [vmem:[%s3753] sm:$0xff]
    %v3755 = vld [vmem:[%s3753 + $0x8] sm:$0xff]
    %v3756 = vld [vmem:[%s3753 + $0x10] sm:$0xff]
    %v3757 = vld [vmem:[%s3753 + $0x18] sm:$0xff]
    %v3758 = vld [vmem:[%s3753 + $0x20] sm:$0xff]
    %v3759 = vld [vmem:[%s3753 + $0x28] sm:$0xff]
    %v3760 = vld [vmem:[%s3753 + $0x30] sm:$0xff]
    %v3761 = vld [vmem:[%s3753 + $0x38] sm:$0xff]
    %v3763 = vsel %vm1268, %v3752, 0
    %3765 = vmatprep.subr.mxu0 0.0
    %3766 = vmatpush1.msra.mxu0 0.0
    %3767 = vmatprep.subr.mxu0 0.0
    %3768 = vmatpush1.msra.mxu0 0.0
    %3769 = vmatprep.subr.mxu0 0.0
    %3770 = vmatpush1.msra.mxu0 0.0
    %3771 = vmatprep.subr.mxu0 0.0
    %3772 = vmatpush1.msra.mxu0 0.0
    %3773 = vmatprep.subr.mxu0 0.0
    %3774 = vmatpush1.msra.mxu0 0.0
    %3775 = vmatprep.subr.mxu0 0.0
    %3776 = vmatpush1.msra.mxu0 0.0
    %3777 = vmatprep.subr.mxu0 0.0
    %3778 = vmatpush1.msra.mxu0 0.0
    %3779 = vmatprep.subr.mxu0 0.0
    %3780 = vmatpush1.msra.mxu0 0.0
    %3781 = vmatprep.subr.mxu0 0.0
    %3782 = vmatpush1.msra.mxu0 0.0
    %3783 = vmatprep.subr.mxu0 0.0
    %3784 = vmatpush1.msra.mxu0 0.0
    %3785 = vmatprep.subr.mxu0 0.0
    %3786 = vmatpush1.msra.mxu0 0.0
    %3787 = vmatprep.subr.mxu0 0.0
    %3788 = vmatpush1.msra.mxu0 0.0
    %3789 = vmatprep.subr.mxu0 %v3761
    %3790 = vmatpush1.msra.mxu0 %v3760
    %3791 = vmatprep.subr.mxu0 %v3759
    %3792 = vmatpush1.msra.mxu0 %v3758
    %3793 = vmatprep.subr.mxu0 %v3757
    %3794 = vmatpush1.msra.mxu0 %v3756
    %3795 = vmatprep.subr.mxu0 %v3755
    %3796 = vmatpush1.msra.mxu0 %v3754
    %3797 = vmatprep.subr.mxu0 0.0
    %3798 = vmatpush2.msra.mxu0 0.0
    %3799 = vmatprep.subr.mxu0 0.0
    %3800 = vmatpush2.msra.mxu0 0.0
    %3801 = vmatprep.subr.mxu0 0.0
    %3802 = vmatpush2.msra.mxu0 0.0
    %3803 = vmatprep.subr.mxu0 0.0
    %3804 = vmatpush2.msra.mxu0 0.0
    %3805 = vmatprep.subr.mxu0 0.0
    %3806 = vmatpush2.msra.mxu0 0.0
    %3807 = vmatprep.subr.mxu0 0.0
    %3808 = vmatpush2.msra.mxu0 0.0
    %3809 = vmatprep.subr.mxu0 0.0
    %3810 = vmatpush2.msra.mxu0 0.0
    %3811 = vmatprep.subr.mxu0 0.0
    %3812 = vmatpush2.msra.mxu0 0.0
    %3813 = vmatprep.subr.mxu0 0.0
    %3814 = vmatpush2.msra.mxu0 0.0
    %3815 = vmatprep.subr.mxu0 0.0
    %3816 = vmatpush2.msra.mxu0 0.0
    %3817 = vmatprep.subr.mxu0 0.0
    %3818 = vmatpush2.msra.mxu0 0.0
    %3819 = vmatprep.subr.mxu0 0.0
    %3820 = vmatpush2.msra.mxu0 0.0
    %3821 = vmatprep.subr.mxu0 0.0
    %3822 = vmatpush2.msra.mxu0 0.0
    %3823 = vmatprep.subr.mxu0 0.0
    %3824 = vmatpush2.msra.mxu0 0.0
    %3825 = vmatprep.subr.mxu0 0.0
    %3826 = vmatpush2.msra.mxu0 0.0
    %3827 = vmatprep.subr.mxu0 0.0
    %3828 = vmatpush2.msra.mxu0 0.0
    %3829 = vmatprep.mubr.f32.mxu0 0.0
    %3830 = vmatmul.mubr.f32.gmra.mxu0 %v3763
    %v3831 = vpop.f32.mrf.mxu0
    %v3832 = vadd.f32 0.0, %v3831
    %v3833 = vpop.f32.mrf.mxu0
    %v3834 = vadd.f32 0.0, %v3833
    %3835 = vdwg.mxu0
    %v3836 = vadd.f32 %v3747, %v3832
    %v3837 = vadd.f32 %v3748, %v3834
    %s3838 = scalar_lea.vmem [#allocation5], 5
    %v3839 = vld [vmem:[%s3838] ss:$8 sm:$0xf]
    %v3840 = vld [vmem:[%s3838] ss:$8 sm:$0xf0]
    %v3841 = vor.u32 %v3839, %v3840
    %s3842 = scalar_lea.vmem [#allocation11], 320
    %v3843 = vld [vmem:[%s3842] sm:$0xff]
    %v3844 = vld [vmem:[%s3842 + $0x8] sm:$0xff]
    %v3845 = vld [vmem:[%s3842 + $0x10] sm:$0xff]
    %v3846 = vld [vmem:[%s3842 + $0x18] sm:$0xff]
    %v3847 = vld [vmem:[%s3842 + $0x20] sm:$0xff]
    %v3848 = vld [vmem:[%s3842 + $0x28] sm:$0xff]
    %v3849 = vld [vmem:[%s3842 + $0x30] sm:$0xff]
    %v3850 = vld [vmem:[%s3842 + $0x38] sm:$0xff]
    %v3852 = vsel %vm1268, %v3841, 0
    %3854 = vmatprep.subr.mxu0 0.0
    %3855 = vmatpush1.msra.mxu0 0.0
    %3856 = vmatprep.subr.mxu0 0.0
    %3857 = vmatpush1.msra.mxu0 0.0
    %3858 = vmatprep.subr.mxu0 0.0
    %3859 = vmatpush1.msra.mxu0 0.0
    %3860 = vmatprep.subr.mxu0 0.0
    %3861 = vmatpush1.msra.mxu0 0.0
    %3862 = vmatprep.subr.mxu0 0.0
    %3863 = vmatpush1.msra.mxu0 0.0
    %3864 = vmatprep.subr.mxu0 0.0
    %3865 = vmatpush1.msra.mxu0 0.0
    %3866 = vmatprep.subr.mxu0 0.0
    %3867 = vmatpush1.msra.mxu0 0.0
    %3868 = vmatprep.subr.mxu0 0.0
    %3869 = vmatpush1.msra.mxu0 0.0
    %3870 = vmatprep.subr.mxu0 0.0
    %3871 = vmatpush1.msra.mxu0 0.0
    %3872 = vmatprep.subr.mxu0 0.0
    %3873 = vmatpush1.msra.mxu0 0.0
    %3874 = vmatprep.subr.mxu0 0.0
    %3875 = vmatpush1.msra.mxu0 0.0
    %3876 = vmatprep.subr.mxu0 0.0
    %3877 = vmatpush1.msra.mxu0 0.0
    %3878 = vmatprep.subr.mxu0 %v3850
    %3879 = vmatpush1.msra.mxu0 %v3849
    %3880 = vmatprep.subr.mxu0 %v3848
    %3881 = vmatpush1.msra.mxu0 %v3847
    %3882 = vmatprep.subr.mxu0 %v3846
    %3883 = vmatpush1.msra.mxu0 %v3845
    %3884 = vmatprep.subr.mxu0 %v3844
    %3885 = vmatpush1.msra.mxu0 %v3843
    %3886 = vmatprep.subr.mxu0 0.0
    %3887 = vmatpush2.msra.mxu0 0.0
    %3888 = vmatprep.subr.mxu0 0.0
    %3889 = vmatpush2.msra.mxu0 0.0
    %3890 = vmatprep.subr.mxu0 0.0
    %3891 = vmatpush2.msra.mxu0 0.0
    %3892 = vmatprep.subr.mxu0 0.0
    %3893 = vmatpush2.msra.mxu0 0.0
    %3894 = vmatprep.subr.mxu0 0.0
    %3895 = vmatpush2.msra.mxu0 0.0
    %3896 = vmatprep.subr.mxu0 0.0
    %3897 = vmatpush2.msra.mxu0 0.0
    %3898 = vmatprep.subr.mxu0 0.0
    %3899 = vmatpush2.msra.mxu0 0.0
    %3900 = vmatprep.subr.mxu0 0.0
    %3901 = vmatpush2.msra.mxu0 0.0
    %3902 = vmatprep.subr.mxu0 0.0
    %3903 = vmatpush2.msra.mxu0 0.0
    %3904 = vmatprep.subr.mxu0 0.0
    %3905 = vmatpush2.msra.mxu0 0.0
    %3906 = vmatprep.subr.mxu0 0.0
    %3907 = vmatpush2.msra.mxu0 0.0
    %3908 = vmatprep.subr.mxu0 0.0
    %3909 = vmatpush2.msra.mxu0 0.0
    %3910 = vmatprep.subr.mxu0 0.0
    %3911 = vmatpush2.msra.mxu0 0.0
    %3912 = vmatprep.subr.mxu0 0.0
    %3913 = vmatpush2.msra.mxu0 0.0
    %3914 = vmatprep.subr.mxu0 0.0
    %3915 = vmatpush2.msra.mxu0 0.0
    %3916 = vmatprep.subr.mxu0 0.0
    %3917 = vmatpush2.msra.mxu0 0.0
    %3918 = vmatprep.mubr.f32.mxu0 0.0
    %3919 = vmatmul.mubr.f32.gmra.mxu0 %v3852
    %v3920 = vpop.f32.mrf.mxu0
    %v3921 = vadd.f32 0.0, %v3920
    %v3922 = vpop.f32.mrf.mxu0
    %v3923 = vadd.f32 0.0, %v3922
    %3924 = vdwg.mxu0
    %v3925 = vadd.f32 %v3836, %v3921
    %v3926 = vadd.f32 %v3837, %v3923
    %s3927 = scalar_lea.vmem [#allocation5], 6
    %v3928 = vld [vmem:[%s3927] ss:$8 sm:$0xf]
    %v3929 = vld [vmem:[%s3927] ss:$8 sm:$0xf0]
    %v3930 = vor.u32 %v3928, %v3929
    %s3931 = scalar_lea.vmem [#allocation11], 384
    %v3932 = vld [vmem:[%s3931] sm:$0xff]
    %v3933 = vld [vmem:[%s3931 + $0x8] sm:$0xff]
    %v3934 = vld [vmem:[%s3931 + $0x10] sm:$0xff]
    %v3935 = vld [vmem:[%s3931 + $0x18] sm:$0xff]
    %v3936 = vld [vmem:[%s3931 + $0x20] sm:$0xff]
    %v3937 = vld [vmem:[%s3931 + $0x28] sm:$0xff]
    %v3938 = vld [vmem:[%s3931 + $0x30] sm:$0xff]
    %v3939 = vld [vmem:[%s3931 + $0x38] sm:$0xff]
    %v3941 = vsel %vm1268, %v3930, 0
    %3943 = vmatprep.subr.mxu0 0.0
    %3944 = vmatpush1.msra.mxu0 0.0
    %3945 = vmatprep.subr.mxu0 0.0
    %3946 = vmatpush1.msra.mxu0 0.0
    %3947 = vmatprep.subr.mxu0 0.0
    %3948 = vmatpush1.msra.mxu0 0.0
    %3949 = vmatprep.subr.mxu0 0.0
    %3950 = vmatpush1.msra.mxu0 0.0
    %3951 = vmatprep.subr.mxu0 0.0
    %3952 = vmatpush1.msra.mxu0 0.0
    %3953 = vmatprep.subr.mxu0 0.0
    %3954 = vmatpush1.msra.mxu0 0.0
    %3955 = vmatprep.subr.mxu0 0.0
    %3956 = vmatpush1.msra.mxu0 0.0
    %3957 = vmatprep.subr.mxu0 0.0
    %3958 = vmatpush1.msra.mxu0 0.0
    %3959 = vmatprep.subr.mxu0 0.0
    %3960 = vmatpush1.msra.mxu0 0.0
    %3961 = vmatprep.subr.mxu0 0.0
    %3962 = vmatpush1.msra.mxu0 0.0
    %3963 = vmatprep.subr.mxu0 0.0
    %3964 = vmatpush1.msra.mxu0 0.0
    %3965 = vmatprep.subr.mxu0 0.0
    %3966 = vmatpush1.msra.mxu0 0.0
    %3967 = vmatprep.subr.mxu0 %v3939
    %3968 = vmatpush1.msra.mxu0 %v3938
    %3969 = vmatprep.subr.mxu0 %v3937
    %3970 = vmatpush1.msra.mxu0 %v3936
    %3971 = vmatprep.subr.mxu0 %v3935
    %3972 = vmatpush1.msra.mxu0 %v3934
    %3973 = vmatprep.subr.mxu0 %v3933
    %3974 = vmatpush1.msra.mxu0 %v3932
    %3975 = vmatprep.subr.mxu0 0.0
    %3976 = vmatpush2.msra.mxu0 0.0
    %3977 = vmatprep.subr.mxu0 0.0
    %3978 = vmatpush2.msra.mxu0 0.0
    %3979 = vmatprep.subr.mxu0 0.0
    %3980 = vmatpush2.msra.mxu0 0.0
    %3981 = vmatprep.subr.mxu0 0.0
    %3982 = vmatpush2.msra.mxu0 0.0
    %3983 = vmatprep.subr.mxu0 0.0
    %3984 = vmatpush2.msra.mxu0 0.0
    %3985 = vmatprep.subr.mxu0 0.0
    %3986 = vmatpush2.msra.mxu0 0.0
    %3987 = vmatprep.subr.mxu0 0.0
    %3988 = vmatpush2.msra.mxu0 0.0
    %3989 = vmatprep.subr.mxu0 0.0
    %3990 = vmatpush2.msra.mxu0 0.0
    %3991 = vmatprep.subr.mxu0 0.0
    %3992 = vmatpush2.msra.mxu0 0.0
    %3993 = vmatprep.subr.mxu0 0.0
    %3994 = vmatpush2.msra.mxu0 0.0
    %3995 = vmatprep.subr.mxu0 0.0
    %3996 = vmatpush2.msra.mxu0 0.0
    %3997 = vmatprep.subr.mxu0 0.0
    %3998 = vmatpush2.msra.mxu0 0.0
    %3999 = vmatprep.subr.mxu0 0.0
    %4000 = vmatpush2.msra.mxu0 0.0
    %4001 = vmatprep.subr.mxu0 0.0
    %4002 = vmatpush2.msra.mxu0 0.0
    %4003 = vmatprep.subr.mxu0 0.0
    %4004 = vmatpush2.msra.mxu0 0.0
    %4005 = vmatprep.subr.mxu0 0.0
    %4006 = vmatpush2.msra.mxu0 0.0
    %4007 = vmatprep.mubr.f32.mxu0 0.0
    %4008 = vmatmul.mubr.f32.gmra.mxu0 %v3941
    %v4009 = vpop.f32.mrf.mxu0
    %v4010 = vadd.f32 0.0, %v4009
    %v4011 = vpop.f32.mrf.mxu0
    %v4012 = vadd.f32 0.0, %v4011
    %4013 = vdwg.mxu0
    %v4014 = vadd.f32 %v3925, %v4010
    %v4015 = vadd.f32 %v3926, %v4012
    %s4016 = scalar_lea.vmem [#allocation5], 7
    %v4017 = vld [vmem:[%s4016] ss:$8 sm:$0xf]
    %v4018 = vld [vmem:[%s4016] ss:$8 sm:$0xf0]
    %v4019 = vor.u32 %v4017, %v4018
    %s4020 = scalar_lea.vmem [#allocation11], 448
    %v4021 = vld [vmem:[%s4020] sm:$0xff]
    %v4022 = vld [vmem:[%s4020 + $0x8] sm:$0xff]
    %v4023 = vld [vmem:[%s4020 + $0x10] sm:$0xff]
    %v4024 = vld [vmem:[%s4020 + $0x18] sm:$0xff]
    %v4025 = vld [vmem:[%s4020 + $0x20] sm:$0xff]
    %v4026 = vld [vmem:[%s4020 + $0x28] sm:$0xff]
    %v4027 = vld [vmem:[%s4020 + $0x30] sm:$0xff]
    %v4028 = vld [vmem:[%s4020 + $0x38] sm:$0xff]
    %v4030 = vsel %vm1268, %v4019, 0
    %4032 = vmatprep.subr.mxu0 0.0
    %4033 = vmatpush1.msra.mxu0 0.0
    %4034 = vmatprep.subr.mxu0 0.0
    %4035 = vmatpush1.msra.mxu0 0.0
    %4036 = vmatprep.subr.mxu0 0.0
    %4037 = vmatpush1.msra.mxu0 0.0
    %4038 = vmatprep.subr.mxu0 0.0
    %4039 = vmatpush1.msra.mxu0 0.0
    %4040 = vmatprep.subr.mxu0 0.0
    %4041 = vmatpush1.msra.mxu0 0.0
    %4042 = vmatprep.subr.mxu0 0.0
    %4043 = vmatpush1.msra.mxu0 0.0
    %4044 = vmatprep.subr.mxu0 0.0
    %4045 = vmatpush1.msra.mxu0 0.0
    %4046 = vmatprep.subr.mxu0 0.0
    %4047 = vmatpush1.msra.mxu0 0.0
    %4048 = vmatprep.subr.mxu0 0.0
    %4049 = vmatpush1.msra.mxu0 0.0
    %4050 = vmatprep.subr.mxu0 0.0
    %4051 = vmatpush1.msra.mxu0 0.0
    %4052 = vmatprep.subr.mxu0 0.0
    %4053 = vmatpush1.msra.mxu0 0.0
    %4054 = vmatprep.subr.mxu0 0.0
    %4055 = vmatpush1.msra.mxu0 0.0
    %4056 = vmatprep.subr.mxu0 %v4028
    %4057 = vmatpush1.msra.mxu0 %v4027
    %4058 = vmatprep.subr.mxu0 %v4026
    %4059 = vmatpush1.msra.mxu0 %v4025
    %4060 = vmatprep.subr.mxu0 %v4024
    %4061 = vmatpush1.msra.mxu0 %v4023
    %4062 = vmatprep.subr.mxu0 %v4022
    %4063 = vmatpush1.msra.mxu0 %v4021
    %4064 = vmatprep.subr.mxu0 0.0
    %4065 = vmatpush2.msra.mxu0 0.0
    %4066 = vmatprep.subr.mxu0 0.0
    %4067 = vmatpush2.msra.mxu0 0.0
    %4068 = vmatprep.subr.mxu0 0.0
    %4069 = vmatpush2.msra.mxu0 0.0
    %4070 = vmatprep.subr.mxu0 0.0
    %4071 = vmatpush2.msra.mxu0 0.0
    %4072 = vmatprep.subr.mxu0 0.0
    %4073 = vmatpush2.msra.mxu0 0.0
    %4074 = vmatprep.subr.mxu0 0.0
    %4075 = vmatpush2.msra.mxu0 0.0
    %4076 = vmatprep.subr.mxu0 0.0
    %4077 = vmatpush2.msra.mxu0 0.0
    %4078 = vmatprep.subr.mxu0 0.0
    %4079 = vmatpush2.msra.mxu0 0.0
    %4080 = vmatprep.subr.mxu0 0.0
    %4081 = vmatpush2.msra.mxu0 0.0
    %4082 = vmatprep.subr.mxu0 0.0
    %4083 = vmatpush2.msra.mxu0 0.0
    %4084 = vmatprep.subr.mxu0 0.0
    %4085 = vmatpush2.msra.mxu0 0.0
    %4086 = vmatprep.subr.mxu0 0.0
    %4087 = vmatpush2.msra.mxu0 0.0
    %4088 = vmatprep.subr.mxu0 0.0
    %4089 = vmatpush2.msra.mxu0 0.0
    %4090 = vmatprep.subr.mxu0 0.0
    %4091 = vmatpush2.msra.mxu0 0.0
    %4092 = vmatprep.subr.mxu0 0.0
    %4093 = vmatpush2.msra.mxu0 0.0
    %4094 = vmatprep.subr.mxu0 0.0
    %4095 = vmatpush2.msra.mxu0 0.0
    %4096 = vmatprep.mubr.f32.mxu0 0.0
    %4097 = vmatmul.mubr.f32.gmra.mxu0 %v4030
    %v4098 = vpop.f32.mrf.mxu0
    %v4099 = vadd.f32 0.0, %v4098
    %v4100 = vpop.f32.mrf.mxu0
    %v4101 = vadd.f32 0.0, %v4100
    %4102 = vdwg.mxu0
    %v4103 = vadd.f32 %v4014, %v4099
    %v4104 = vadd.f32 %v4015, %v4101
    %4105 = vst [vmem:[#allocation12] sm:$0xff] %v4103
    %4106 = vst [vmem:[#allocation12 + $0x8] sm:$0xff] %v4104
    // Predicated region
    $region38: #{tpu_custom_call.1} parent=1 // pred_check
      _
    $region39: #{tpu_custom_call.1} parent=1 // pred_check_branch
      %4108 = sbr.rel (0) target = $region41
    $region40: #{tpu_custom_call.1} parent=1 // pred_region
      %s4110 = ssub.s32 256, 256
      %4111 = vsyncadd [#allocation8], %s4110
      %s4113 = sshll.u32 [#allocation12], 4
      %s4114 = int_to_ptr.vmem [resolvable:$true] %s4113
      %4116 = dma.vmem_to_hbm [thread:$0]  %s4114, 256, %s6, [#allocation8]
    $region41: #{tpu_custom_call.1} parent=1 // pred_fallthru
      _
    // Predicated region
    $region42: #{tpu_custom_call.1} parent=1 // pred_check
      _
    $region43: #{tpu_custom_call.1} parent=1 // pred_check_branch
      %4118 = sbr.rel (0) target = $region45
    $region44: #{tpu_custom_call.1} parent=1 // pred_region
      %4119 = dma.done [#allocation8], 256
    $region45: #{tpu_custom_call.1} parent=1 // pred_fallthru
      _
    %4120 = vsyncpa [#allocation7], 1
    %4121 = vsyncpa [#allocation10], 1
    %4122 = vsyncpa [#allocation8], 1

</llo_original>
